<compile_context>
chip_gen: v7x
topology: tpu7x:2x2x1
jax: 0.10.0
libtpu: 0.0.40
codegen_flags: <defaults>
</compile_context>

<pallas_src>
import functools

import jax
import jax.numpy as jnp
import numpy as np
from jax.experimental import pallas as pl
from jax.experimental.pallas import tpu as pltpu

NEG_SLOPE = 0.2
BN_EPS = 1e-5
LANE = 128       # lane width
SUBLANE = 8      # f32 sublane packing
ROW_ALIGN = 16   # row alignment for bf16 tiles (bf16 packs 16 rows / vreg)


def _round_up(x, m):
    return (x + m - 1) // m * m


# ---------------------------------------------------------------------------
# Kernel 1: fused (prev-layer BN affine) + LeakyReLU(0.2) + bf16 cast,
# applied to the COMPACT (M_prev, C) activation (not the expanded patches).
# ---------------------------------------------------------------------------
def _affine_leaky_kernel(x_ref, scale_ref, bias_ref, o_ref):
    t = x_ref[...] * scale_ref[...] + bias_ref[...]          # f32 math (v5e)
    o_ref[...] = jnp.where(t > 0, t, NEG_SLOPE * t).astype(o_ref.dtype)


def affine_leaky_bf16(x2d, scale_c, bias_c, *, tr=512):
    M, C = x2d.shape
    tr = min(tr, _round_up(M, ROW_ALIGN))
    Mp = _round_up(M, tr)
    xp = jnp.pad(x2d, ((0, Mp - M), (0, 0))) if Mp != M else x2d
    out = pl.pallas_call(
        _affine_leaky_kernel,
        grid=(Mp // tr,),
        in_specs=[pl.BlockSpec((tr, C), lambda i: (i, 0)),
                  pl.BlockSpec((1, C), lambda i: (0, 0)),
                  pl.BlockSpec((1, C), lambda i: (0, 0))],
        out_specs=pl.BlockSpec((tr, C), lambda i: (i, 0)),
        out_shape=jax.ShapeDtypeStruct((Mp, C), jnp.bfloat16),
        compiler_params=pltpu.CompilerParams(
            dimension_semantics=("parallel",)),
    )(xp, scale_c.reshape(1, C).astype(jnp.float32),
      bias_c.reshape(1, C).astype(jnp.float32))
    return out[:M] if Mp != M else out


# ---------------------------------------------------------------------------
# Kernel 2: tiled matmul (bf16 x bf16 -> f32 acc) + optional fused sigmoid +
# optional per-tile per-output-channel sum / sum-of-squares partials (BN stats,
# emitted only for layers followed by a BatchNorm).
# ---------------------------------------------------------------------------
def _conv_mm_kernel(p_ref, w_ref, *out_refs, post_sigmoid, with_stats):
    z = jnp.dot(p_ref[...], w_ref[...], preferred_element_type=jnp.float32)
    if post_sigmoid:
        z = 1.0 / (1.0 + jnp.exp(-z))
    o_ref = out_refs[0]
    o_ref[...] = z.astype(o_ref.dtype)
    if with_stats:
        sum_ref, ssq_ref = out_refs[1], out_refs[2]
        # Per-tile partial reductions (padded zero rows contribute exactly 0,
        # so BN batch stats stay correct after M padding).
        s = jnp.sum(z, axis=0, keepdims=True)            # (1, Cp)
        ss = jnp.sum(z * z, axis=0, keepdims=True)       # (1, Cp)
        sum_ref[...] = jnp.broadcast_to(s, sum_ref.shape)   # dense (8, Cp) slab
        ssq_ref[...] = jnp.broadcast_to(ss, ssq_ref.shape)


def conv_matmul(patches, wmat, *, post_sigmoid, with_stats, tm):
    Mp, Kp = patches.shape
    Cp = wmat.shape[1]
    nt = Mp // tm
    kernel = functools.partial(_conv_mm_kernel, post_sigmoid=post_sigmoid,
                               with_stats=with_stats)
    in_specs = [pl.BlockSpec((tm, Kp), lambda i: (i, 0)),
                pl.BlockSpec((Kp, Cp), lambda i: (0, 0))]   # weight stays resident
    z_spec = pl.BlockSpec((tm, Cp), lambda i: (i, 0))
    z_shape = jax.ShapeDtypeStruct((Mp, Cp), jnp.float32)
    cparams = pltpu.CompilerParams(dimension_semantics=("parallel",),
                                   vmem_limit_bytes=32 * 1024 * 1024)

    if not with_stats:
        z = pl.pallas_call(kernel, grid=(nt,), in_specs=in_specs,
                           out_specs=z_spec, out_shape=z_shape,
                           compiler_params=cparams)(patches, wmat)
        return z, None, None

    stat_spec = pl.BlockSpec((SUBLANE, Cp), lambda i: (i, 0))
    stat_shape = jax.ShapeDtypeStruct((nt * SUBLANE, Cp), jnp.float32)
    z, s, ss = pl.pallas_call(
        kernel, grid=(nt,), in_specs=in_specs,
        out_specs=(z_spec, stat_spec, stat_spec),
        out_shape=(z_shape, stat_shape, stat_shape),
        compiler_params=cparams)(patches, wmat)
    # finish the cross-tile reduction in JAX (keeps the M axis "parallel").
    sum_c = jnp.sum(s.reshape(nt, SUBLANE, Cp)[:, 0, :], axis=0)
    ssq_c = jnp.sum(ss.reshape(nt, SUBLANE, Cp)[:, 0, :], axis=0)
    return z, sum_c, ssq_c


# ---------------------------------------------------------------------------
# Plain-JAX glue: im2col, per-layer driver, BN folding, parameter init
# ---------------------------------------------------------------------------
def im2col(x, kh, kw, stride, pad):
    # x: (N, H, W, C) -> (N*Ho*Wo, kh*kw*C), patch inner ordering (kh, kw, C)
    x = jnp.pad(x, ((0, 0), (pad, pad), (pad, pad), (0, 0)))
    N, Hp, Wp, C = x.shape
    Ho = (Hp - kh) // stride + 1
    Wo = (Wp - kw) // stride + 1
    cols = []
    for i in range(kh):
        for j in range(kw):
            cols.append(x[:, i:i + stride * (Ho - 1) + 1:stride,
                           j:j + stride * (Wo - 1) + 1:stride, :])
    p = jnp.stack(cols, axis=3)                       # (N, Ho, Wo, kh*kw, C)
    return p.reshape(N * Ho * Wo, kh * kw * C), (N, Ho, Wo)


def run_layer(x_nhwc, w_hwio, prev_scale, prev_bias, *,
              stride, pre_leaky, post_sigmoid, with_stats, tm=512):
    n, h, w, cin = x_nhwc.shape
    kh, kw, _, cout = w_hwio.shape

    # 1) prev layer's folded BN + LeakyReLU on the compact activation, bf16 out.
    if pre_leaky:
        a = affine_leaky_bf16(x_nhwc.reshape(-1, cin), prev_scale, prev_bias)
        a = a.reshape(n, h, w, cin)
    else:
        a = x_nhwc.astype(jnp.bfloat16)

    # 2) pad channels of the COMPACT activation (cheap) so K = kh*kw*cin_p is a
    #    multiple of 128 -> no pad of the 16x-larger expanded patch matrix.
    cin_p = _round_up(cin, SUBLANE)
    if cin_p != cin:
        a = jnp.pad(a, ((0, 0), (0, 0), (0, 0), (0, cin_p - cin)))
        w_hwio = jnp.pad(w_hwio, ((0, 0), (0, 0), (0, cin_p - cin), (0, 0)))

    # 3) im2col (spatial zero padding added AFTER the activation -> exact).
    patches, (n2, ho, wo) = im2col(a, kh, kw, stride, 1)
    M, K = patches.shape
    assert K % LANE == 0, (K,)

    # 4) lane/sublane alignment: Cout -> multiple of 128; M -> multiple of tm.
    Cp = _round_up(cout, LANE)
    tm = min(tm, _round_up(M, ROW_ALIGN))
    Mp = _round_up(M, tm)
    if Mp != M:
        patches = jnp.pad(patches, ((0, Mp - M), (0, 0)))
    wmat = w_hwio.reshape(K, cout)
    if Cp != cout:
        wmat = jnp.pad(wmat, ((0, 0), (0, Cp - cout)))
    wmat = wmat.astype(jnp.bfloat16)

    z, s, ss = conv_matmul(patches, wmat, post_sigmoid=post_sigmoid,
                           with_stats=with_stats, tm=tm)
    z = z[:M, :cout].reshape(n2, ho, wo, cout)
    if with_stats:
        return z, s[:cout], ss[:cout]
    return z, None, None


def bn_fold(sum_c, ssq_c, count, gamma, beta):
    # training-mode BatchNorm (biased variance), folded into scale/bias
    mean = sum_c / count
    var = ssq_c / count - mean * mean
    scale = gamma / jnp.sqrt(var + BN_EPS)
    bias = beta - mean * scale
    return scale, bias


def make_params(key, nc, nf):
    ks = jax.random.split(key, 5)

    def w(k, cin, cout):  # HWIO, deterministic synthetic init
        return jax.random.normal(k, (4, 4, cin, cout), jnp.float32) * 0.05

    return {
        "w1": w(ks[0], nc, nf),
        "w2": w(ks[1], nf, 2 * nf),
        "w3": w(ks[2], 2 * nf, 4 * nf),
        "w4": w(ks[3], 4 * nf, 8 * nf),
        "w5": w(ks[4], 8 * nf, 1),
        "g2": jnp.ones((2 * nf,), jnp.float32), "b2": jnp.zeros((2 * nf,), jnp.float32),
        "g3": jnp.ones((4 * nf,), jnp.float32), "b3": jnp.zeros((4 * nf,), jnp.float32),
        "g4": jnp.ones((8 * nf,), jnp.float32), "b4": jnp.zeros((8 * nf,), jnp.float32),
    }


# ---------------------------------------------------------------------------
# Forward pass of D (matches the PyTorch module's layer sequence)
# ---------------------------------------------------------------------------
def d_forward(params, x_nchw, *, tm=512):
    x = jnp.transpose(x_nchw, (0, 2, 3, 1)).astype(jnp.float32)   # -> NHWC
    ident = lambda c: (jnp.ones((c,), jnp.float32), jnp.zeros((c,), jnp.float32))

    # layer1: Conv(nc, nf, 4, 2, 1)                       (no BN -> no stats)
    z1, _, _ = run_layer(x, params["w1"], *ident(x.shape[-1]),
                         stride=2, pre_leaky=False, post_sigmoid=False,
                         with_stats=False, tm=tm)

    # layer2: LeakyReLU -> Conv(nf, 2nf, 4, 2, 1) -> BN
    z2, s2, ss2 = run_layer(z1, params["w2"], *ident(z1.shape[-1]),
                            stride=2, pre_leaky=True, post_sigmoid=False,
                            with_stats=True, tm=tm)
    sc2, bi2 = bn_fold(s2, ss2, z2.shape[0] * z2.shape[1] * z2.shape[2],
                       params["g2"], params["b2"])

    # layer3: LeakyReLU -> Conv(2nf, 4nf, 4, 2, 1) -> BN  (prev BN folded in)
    z3, s3, ss3 = run_layer(z2, params["w3"], sc2, bi2,
                            stride=2, pre_leaky=True, post_sigmoid=False,
                            with_stats=True, tm=tm)
    sc3, bi3 = bn_fold(s3, ss3, z3.shape[0] * z3.shape[1] * z3.shape[2],
                       params["g3"], params["b3"])

    # layer4: LeakyReLU -> Conv(4nf, 8nf, 4, 1, 1) -> BN
    z4, s4, ss4 = run_layer(z3, params["w4"], sc3, bi3,
                            stride=1, pre_leaky=True, post_sigmoid=False,
                            with_stats=True, tm=tm)
    sc4, bi4 = bn_fold(s4, ss4, z4.shape[0] * z4.shape[1] * z4.shape[2],
                       params["g4"], params["b4"])

    # layer5: LeakyReLU -> Conv(8nf, 1, 4, 1, 1) -> Sigmoid   (no BN)
    z5, _, _ = run_layer(z4, params["w5"], sc4, bi4,
                         stride=1, pre_leaky=True, post_sigmoid=True,
                         with_stats=False, tm=tm)
    return jnp.transpose(z5, (0, 3, 1, 2))            # -> NCHW


# ---------------------------------------------------------------------------
# Pure-JAX reference (same math, f32 lax conv) for correctness checking
# ---------------------------------------------------------------------------
def _ref_conv(x, w, stride):
    return jax.lax.conv_general_dilated(
        x, w, (stride, stride), ((1, 1), (1, 1)),
        dimension_numbers=("NHWC", "HWIO", "NHWC"))


def _ref_bn(z, gamma, beta):
    mean = jnp.mean(z, axis=(0, 1, 2))
    var = jnp.var(z, axis=(0, 1, 2))
    return (z - mean) / jnp.sqrt(var + BN_EPS) * gamma + beta


def _leaky(x):
    return jnp.where(x > 0, x, NEG_SLOPE * x)


def ref_forward(params, x_nchw):
    x = jnp.transpose(x_nchw, (0, 2, 3, 1))
    z1 = _ref_conv(x, params["w1"], 2)
    z2 = _ref_bn(_ref_conv(_leaky(z1), params["w2"], 2), params["g2"], params["b2"])
    z3 = _ref_bn(_ref_conv(_leaky(z2), params["w3"], 2), params["g3"], params["b3"])
    z4 = _ref_bn(_ref_conv(_leaky(z3), params["w4"], 1), params["g4"], params["b4"])
    z5 = jax.nn.sigmoid(_ref_conv(_leaky(z4), params["w5"], 1))
    return jnp.transpose(z5, (0, 3, 1, 2))


if __name__ == "__main__":
    key = jax.random.PRNGKey(0)
    kp, kx = jax.random.split(key)
    nc, nf = 3, 8
    params = make_params(kp, nc, nf)
    # Spatial 32 so the two stride-1 k=4 p=1 convs (each shrinking H/W by 1)
    # stay valid: 32 -> 16 -> 8 -> 4 -> 3 -> 2.
    x = jax.random.normal(kx, (2, nc, 32, 32), jnp.float32)

    # tm=64 at this toy size exercises the multi-tile grid and the partial
    # BN-stat reduction path; use tm=256..512 at real discriminator sizes.
    d_fwd = jax.jit(functools.partial(d_forward, tm=64))
    ref_fwd = jax.jit(ref_forward)

    out = jax.block_until_ready(d_fwd(params, x))
    ref = jax.block_until_ready(ref_fwd(params, x))

    assert out.shape == (2, 1, 2, 2), out.shape
    # Pallas path uses bf16 MXU inputs with f32 accumulation; reference is
    # all-f32, hence the relaxed (but still tight) tolerance.
    np.testing.assert_allclose(np.asarray(out), np.asarray(ref),
                               rtol=2e-2, atol=2e-2)
    print("KERNEL_OK")
</pallas_src>

<mosaic_0001>
module attributes {stable_mosaic.version = 11 : i64} {
  func.func @_conv_mm_kernel(%arg0: i32, %arg1: memref<64x128xbf16, #tpu.memory_space<vmem>>, %arg2: memref<128x128xbf16, #tpu.memory_space<vmem>>, %arg3: memref<64x128xf32, #tpu.memory_space<vmem>>) attributes {dimension_semantics = [#tpu.dimension_semantics<parallel>], iteration_bounds = array<i64: 8>, scalar_prefetch = 0 : i64, scratch_operands = 0 : i64, tpu.core_type = #tpu.core_type<tc>, window_params = [{transform_indices = @transform_0, window_bounds = array<i64: 64, 128>}, {pipeline_mode = #tpu.pipeline_mode<synchronous>, transform_indices = @transform_1, window_bounds = array<i64: 128, 128>}, {transform_indices = @transform_2, window_bounds = array<i64: 64, 128>}]} {
    %c0 = arith.constant 0 : index
    %c0_0 = arith.constant 0 : index
    %0 = vector.load %arg1[%c0, %c0_0] : memref<64x128xbf16, #tpu.memory_space<vmem>>, vector<64x128xbf16>
    %c0_1 = arith.constant 0 : index
    %c0_2 = arith.constant 0 : index
    %1 = vector.load %arg2[%c0_1, %c0_2] : memref<128x128xbf16, #tpu.memory_space<vmem>>, vector<128x128xbf16>
    %cst = arith.constant dense<0.000000e+00> : vector<64x128xf32>
    %2 = tpu.matmul %0, %1, %cst {dimension_numbers = #tpu.dot_dimension_numbers<[1], [0], [0], [1], [0, 0, 1, 1], [], []>} : vector<64x128xbf16>, vector<128x128xbf16>, vector<64x128xf32> -> vector<64x128xf32>
    %c0_3 = arith.constant 0 : index
    %c0_4 = arith.constant 0 : index
    %3 = vector.load %arg3[%c0_3, %c0_4] : memref<64x128xf32, #tpu.memory_space<vmem>>, vector<64x128xf32>
    tpu.vector_store %arg3[%c0_3, %c0_4], %2 {strides = array<i32>} : memref<64x128xf32, #tpu.memory_space<vmem>>, vector<64x128xf32>,
    return
  }
  func.func @transform_0(%arg0: i32) -> (i32, i32) {
    %c0_i32 = arith.constant 0 : i32
    %c0_i32_0 = arith.constant 0 : i32
    return %arg0, %c0_i32 : i32, i32
  }
  func.func @transform_1(%arg0: i32) -> (i32, i32) {
    %c0_i32 = arith.constant 0 : i32
    %c0_i32_0 = arith.constant 0 : i32
    %c0_i32_1 = arith.constant 0 : i32
    return %c0_i32, %c0_i32_0 : i32, i32
  }
  func.func @transform_2(%arg0: i32) -> (i32, i32) {
    %c0_i32 = arith.constant 0 : i32
    %c0_i32_0 = arith.constant 0 : i32
    return %arg0, %c0_i32 : i32, i32
  }
}

module attributes {stable_mosaic.version = 11 : i64} {
  func.func @_affine_leaky_kernel(%arg0: i32, %arg1: memref<512x8xf32, #tpu.memory_space<vmem>>, %arg2: memref<1x8xf32, #tpu.memory_space<vmem>>, %arg3: memref<1x8xf32, #tpu.memory_space<vmem>>, %arg4: memref<512x8xbf16, #tpu.memory_space<vmem>>) attributes {dimension_semantics = [#tpu.dimension_semantics<parallel>], iteration_bounds = array<i64: 1>, scalar_prefetch = 0 : i64, scratch_operands = 0 : i64, tpu.core_type = #tpu.core_type<tc>, window_params = [{transform_indices = @transform_0, window_bounds = array<i64: 512, 8>}, {pipeline_mode = #tpu.pipeline_mode<synchronous>, transform_indices = @transform_1, window_bounds = array<i64: 1, 8>}, {pipeline_mode = #tpu.pipeline_mode<synchronous>, transform_indices = @transform_2, window_bounds = array<i64: 1, 8>}, {transform_indices = @transform_3, window_bounds = array<i64: 512, 8>}]} {
    %c0 = arith.constant 0 : index
    %c0_0 = arith.constant 0 : index
    %0 = vector.load %arg1[%c0, %c0_0] : memref<512x8xf32, #tpu.memory_space<vmem>>, vector<512x8xf32>
    %c0_1 = arith.constant 0 : index
    %c0_2 = arith.constant 0 : index
    %1 = vector.load %arg2[%c0_1, %c0_2] : memref<1x8xf32, #tpu.memory_space<vmem>>, vector<1x8xf32>
    %2 = vector.broadcast %1 : vector<1x8xf32> to vector<512x8xf32>
    %3 = arith.mulf %0, %2 : vector<512x8xf32>
    %c0_3 = arith.constant 0 : index
    %c0_4 = arith.constant 0 : index
    %4 = vector.load %arg3[%c0_3, %c0_4] : memref<1x8xf32, #tpu.memory_space<vmem>>, vector<1x8xf32>
    %5 = vector.broadcast %4 : vector<1x8xf32> to vector<512x8xf32>
    %6 = arith.addf %3, %5 : vector<512x8xf32>
    %cst = arith.constant 0.000000e+00 : f32
    %7 = vector.broadcast %cst : f32 to vector<512x8xf32>
    %8 = arith.cmpf ogt, %6, %7 : vector<512x8xf32>
    %cst_5 = arith.constant 2.000000e-01 : f32
    %9 = vector.broadcast %cst_5 : f32 to vector<512x8xf32>
    %10 = arith.mulf %9, %6 : vector<512x8xf32>
    %11 = arith.select %8, %6, %10 : vector<512x8xi1>, vector<512x8xf32>
    %12 = arith.truncf %11 : vector<512x8xf32> to vector<512x8xbf16>
    %c0_6 = arith.constant 0 : index
    %c0_7 = arith.constant 0 : index
    %13 = vector.load %arg4[%c0_6, %c0_7] : memref<512x8xbf16, #tpu.memory_space<vmem>>, vector<512x8xbf16>
    tpu.vector_store %arg4[%c0_6, %c0_7], %12 {strides = array<i32>} : memref<512x8xbf16, #tpu.memory_space<vmem>>, vector<512x8xbf16>,
    return
  }
  func.func @transform_0(%arg0: i32) -> (i32, i32) {
    %c0_i32 = arith.constant 0 : i32
    %c0_i32_0 = arith.constant 0 : i32
    return %arg0, %c0_i32 : i32, i32
  }
  func.func @transform_1(%arg0: i32) -> (i32, i32) {
    %c0_i32 = arith.constant 0 : i32
    %c0_i32_0 = arith.constant 0 : i32
    %c0_i32_1 = arith.constant 0 : i32
    return %c0_i32, %c0_i32_0 : i32, i32
  }
  func.func @transform_2(%arg0: i32) -> (i32, i32) {
    %c0_i32 = arith.constant 0 : i32
    %c0_i32_0 = arith.constant 0 : i32
    %c0_i32_1 = arith.constant 0 : i32
    return %c0_i32, %c0_i32_0 : i32, i32
  }
  func.func @transform_3(%arg0: i32) -> (i32, i32) {
    %c0_i32 = arith.constant 0 : i32
    %c0_i32_0 = arith.constant 0 : i32
    return %arg0, %c0_i32 : i32, i32
  }
}

module attributes {stable_mosaic.version = 11 : i64} {
  func.func @_conv_mm_kernel(%arg0: i32, %arg1: memref<64x128xbf16, #tpu.memory_space<vmem>>, %arg2: memref<128x128xbf16, #tpu.memory_space<vmem>>, %arg3: memref<64x128xf32, #tpu.memory_space<vmem>>, %arg4: memref<8x128xf32, #tpu.memory_space<vmem>>, %arg5: memref<8x128xf32, #tpu.memory_space<vmem>>) attributes {dimension_semantics = [#tpu.dimension_semantics<parallel>], iteration_bounds = array<i64: 2>, scalar_prefetch = 0 : i64, scratch_operands = 0 : i64, tpu.core_type = #tpu.core_type<tc>, window_params = [{transform_indices = @transform_0, window_bounds = array<i64: 64, 128>}, {pipeline_mode = #tpu.pipeline_mode<synchronous>, transform_indices = @transform_1, window_bounds = array<i64: 128, 128>}, {transform_indices = @transform_2, window_bounds = array<i64: 64, 128>}, {transform_indices = @transform_3, window_bounds = array<i64: 8, 128>}, {transform_indices = @transform_4, window_bounds = array<i64: 8, 128>}]} {
    %c0 = arith.constant 0 : index
    %c0_0 = arith.constant 0 : index
    %0 = vector.load %arg1[%c0, %c0_0] : memref<64x128xbf16, #tpu.memory_space<vmem>>, vector<64x128xbf16>
    %c0_1 = arith.constant 0 : index
    %c0_2 = arith.constant 0 : index
    %1 = vector.load %arg2[%c0_1, %c0_2] : memref<128x128xbf16, #tpu.memory_space<vmem>>, vector<128x128xbf16>
    %cst = arith.constant dense<0.000000e+00> : vector<64x128xf32>
    %2 = tpu.matmul %0, %1, %cst {dimension_numbers = #tpu.dot_dimension_numbers<[1], [0], [0], [1], [0, 0, 1, 1], [], []>} : vector<64x128xbf16>, vector<128x128xbf16>, vector<64x128xf32> -> vector<64x128xf32>
    %c0_3 = arith.constant 0 : index
    %c0_4 = arith.constant 0 : index
    %3 = vector.load %arg3[%c0_3, %c0_4] : memref<64x128xf32, #tpu.memory_space<vmem>>, vector<64x128xf32>
    tpu.vector_store %arg3[%c0_3, %c0_4], %2 {strides = array<i32>} : memref<64x128xf32, #tpu.memory_space<vmem>>, vector<64x128xf32>,
    %cst_5 = arith.constant dense<0.000000e+00> : vector<128xf32>
    %4 = vector.multi_reduction <add>, %2, %cst_5 [0] : vector<64x128xf32> to vector<128xf32>
    %5 = vector.shape_cast %4 : vector<128xf32> to vector<1x128xf32>
    %6 = arith.mulf %2, %2 : vector<64x128xf32>
    %cst_6 = arith.constant dense<0.000000e+00> : vector<128xf32>
    %7 = vector.multi_reduction <add>, %6, %cst_6 [0] : vector<64x128xf32> to vector<128xf32>
    %8 = vector.shape_cast %7 : vector<128xf32> to vector<1x128xf32>
    %9 = vector.shape_cast %5 : vector<1x128xf32> to vector<1x128xf32>
    %10 = vector.broadcast %9 : vector<1x128xf32> to vector<8x128xf32>
    %c0_7 = arith.constant 0 : index
    %c0_8 = arith.constant 0 : index
    %11 = vector.load %arg4[%c0_7, %c0_8] : memref<8x128xf32, #tpu.memory_space<vmem>>, vector<8x128xf32>
    tpu.vector_store %arg4[%c0_7, %c0_8], %10 {strides = array<i32>} : memref<8x128xf32, #tpu.memory_space<vmem>>, vector<8x128xf32>,
    %12 = vector.shape_cast %8 : vector<1x128xf32> to vector<1x128xf32>
    %13 = vector.broadcast %12 : vector<1x128xf32> to vector<8x128xf32>
    %c0_9 = arith.constant 0 : index
    %c0_10 = arith.constant 0 : index
    %14 = vector.load %arg5[%c0_9, %c0_10] : memref<8x128xf32, #tpu.memory_space<vmem>>, vector<8x128xf32>
    tpu.vector_store %arg5[%c0_9, %c0_10], %13 {strides = array<i32>} : memref<8x128xf32, #tpu.memory_space<vmem>>, vector<8x128xf32>,
    return
  }
  func.func @transform_0(%arg0: i32) -> (i32, i32) {
    %c0_i32 = arith.constant 0 : i32
    %c0_i32_0 = arith.constant 0 : i32
    return %arg0, %c0_i32 : i32, i32
  }
  func.func @transform_1(%arg0: i32) -> (i32, i32) {
    %c0_i32 = arith.constant 0 : i32
    %c0_i32_0 = arith.constant 0 : i32
    %c0_i32_1 = arith.constant 0 : i32
    return %c0_i32, %c0_i32_0 : i32, i32
  }
  func.func @transform_2(%arg0: i32) -> (i32, i32) {
    %c0_i32 = arith.constant 0 : i32
    %c0_i32_0 = arith.constant 0 : i32
    return %arg0, %c0_i32 : i32, i32
  }
  func.func @transform_3(%arg0: i32) -> (i32, i32) {
    %c0_i32 = arith.constant 0 : i32
    %c0_i32_0 = arith.constant 0 : i32
    return %arg0, %c0_i32 : i32, i32
  }
  func.func @transform_4(%arg0: i32) -> (i32, i32) {
    %c0_i32 = arith.constant 0 : i32
    %c0_i32_0 = arith.constant 0 : i32
    return %arg0, %c0_i32 : i32, i32
  }
}

module attributes {stable_mosaic.version = 11 : i64} {
  func.func @_affine_leaky_kernel(%arg0: i32, %arg1: memref<128x16xf32, #tpu.memory_space<vmem>>, %arg2: memref<1x16xf32, #tpu.memory_space<vmem>>, %arg3: memref<1x16xf32, #tpu.memory_space<vmem>>, %arg4: memref<128x16xbf16, #tpu.memory_space<vmem>>) attributes {dimension_semantics = [#tpu.dimension_semantics<parallel>], iteration_bounds = array<i64: 1>, scalar_prefetch = 0 : i64, scratch_operands = 0 : i64, tpu.core_type = #tpu.core_type<tc>, window_params = [{transform_indices = @transform_0, window_bounds = array<i64: 128, 16>}, {pipeline_mode = #tpu.pipeline_mode<synchronous>, transform_indices = @transform_1, window_bounds = array<i64: 1, 16>}, {pipeline_mode = #tpu.pipeline_mode<synchronous>, transform_indices = @transform_2, window_bounds = array<i64: 1, 16>}, {transform_indices = @transform_3, window_bounds = array<i64: 128, 16>}]} {
    %c0 = arith.constant 0 : index
    %c0_0 = arith.constant 0 : index
    %0 = vector.load %arg1[%c0, %c0_0] : memref<128x16xf32, #tpu.memory_space<vmem>>, vector<128x16xf32>
    %c0_1 = arith.constant 0 : index
    %c0_2 = arith.constant 0 : index
    %1 = vector.load %arg2[%c0_1, %c0_2] : memref<1x16xf32, #tpu.memory_space<vmem>>, vector<1x16xf32>
    %2 = vector.broadcast %1 : vector<1x16xf32> to vector<128x16xf32>
    %3 = arith.mulf %0, %2 : vector<128x16xf32>
    %c0_3 = arith.constant 0 : index
    %c0_4 = arith.constant 0 : index
    %4 = vector.load %arg3[%c0_3, %c0_4] : memref<1x16xf32, #tpu.memory_space<vmem>>, vector<1x16xf32>
    %5 = vector.broadcast %4 : vector<1x16xf32> to vector<128x16xf32>
    %6 = arith.addf %3, %5 : vector<128x16xf32>
    %cst = arith.constant 0.000000e+00 : f32
    %7 = vector.broadcast %cst : f32 to vector<128x16xf32>
    %8 = arith.cmpf ogt, %6, %7 : vector<128x16xf32>
    %cst_5 = arith.constant 2.000000e-01 : f32
    %9 = vector.broadcast %cst_5 : f32 to vector<128x16xf32>
    %10 = arith.mulf %9, %6 : vector<128x16xf32>
    %11 = arith.select %8, %6, %10 : vector<128x16xi1>, vector<128x16xf32>
    %12 = arith.truncf %11 : vector<128x16xf32> to vector<128x16xbf16>
    %c0_6 = arith.constant 0 : index
    %c0_7 = arith.constant 0 : index
    %13 = vector.load %arg4[%c0_6, %c0_7] : memref<128x16xbf16, #tpu.memory_space<vmem>>, vector<128x16xbf16>
    tpu.vector_store %arg4[%c0_6, %c0_7], %12 {strides = array<i32>} : memref<128x16xbf16, #tpu.memory_space<vmem>>, vector<128x16xbf16>,
    return
  }
  func.func @transform_0(%arg0: i32) -> (i32, i32) {
    %c0_i32 = arith.constant 0 : i32
    %c0_i32_0 = arith.constant 0 : i32
    return %arg0, %c0_i32 : i32, i32
  }
  func.func @transform_1(%arg0: i32) -> (i32, i32) {
    %c0_i32 = arith.constant 0 : i32
    %c0_i32_0 = arith.constant 0 : i32
    %c0_i32_1 = arith.constant 0 : i32
    return %c0_i32, %c0_i32_0 : i32, i32
  }
  func.func @transform_2(%arg0: i32) -> (i32, i32) {
    %c0_i32 = arith.constant 0 : i32
    %c0_i32_0 = arith.constant 0 : i32
    %c0_i32_1 = arith.constant 0 : i32
    return %c0_i32, %c0_i32_0 : i32, i32
  }
  func.func @transform_3(%arg0: i32) -> (i32, i32) {
    %c0_i32 = arith.constant 0 : i32
    %c0_i32_0 = arith.constant 0 : i32
    return %arg0, %c0_i32 : i32, i32
  }
}

module attributes {stable_mosaic.version = 11 : i64} {
  func.func @_conv_mm_kernel(%arg0: i32, %arg1: memref<32x256xbf16, #tpu.memory_space<vmem>>, %arg2: memref<256x128xbf16, #tpu.memory_space<vmem>>, %arg3: memref<32x128xf32, #tpu.memory_space<vmem>>, %arg4: memref<8x128xf32, #tpu.memory_space<vmem>>, %arg5: memref<8x128xf32, #tpu.memory_space<vmem>>) attributes {dimension_semantics = [#tpu.dimension_semantics<parallel>], iteration_bounds = array<i64: 1>, scalar_prefetch = 0 : i64, scratch_operands = 0 : i64, tpu.core_type = #tpu.core_type<tc>, window_params = [{transform_indices = @transform_0, window_bounds = array<i64: 32, 256>}, {pipeline_mode = #tpu.pipeline_mode<synchronous>, transform_indices = @transform_1, window_bounds = array<i64: 256, 128>}, {transform_indices = @transform_2, window_bounds = array<i64: 32, 128>}, {transform_indices = @transform_3, window_bounds = array<i64: 8, 128>}, {transform_indices = @transform_4, window_bounds = array<i64: 8, 128>}]} {
    %c0 = arith.constant 0 : index
    %c0_0 = arith.constant 0 : index
    %0 = vector.load %arg1[%c0, %c0_0] : memref<32x256xbf16, #tpu.memory_space<vmem>>, vector<32x256xbf16>
    %c0_1 = arith.constant 0 : index
    %c0_2 = arith.constant 0 : index
    %1 = vector.load %arg2[%c0_1, %c0_2] : memref<256x128xbf16, #tpu.memory_space<vmem>>, vector<256x128xbf16>
    %cst = arith.constant dense<0.000000e+00> : vector<32x128xf32>
    %2 = tpu.matmul %0, %1, %cst {dimension_numbers = #tpu.dot_dimension_numbers<[1], [0], [0], [1], [0, 0, 1, 1], [], []>} : vector<32x256xbf16>, vector<256x128xbf16>, vector<32x128xf32> -> vector<32x128xf32>
    %c0_3 = arith.constant 0 : index
    %c0_4 = arith.constant 0 : index
    %3 = vector.load %arg3[%c0_3, %c0_4] : memref<32x128xf32, #tpu.memory_space<vmem>>, vector<32x128xf32>
    tpu.vector_store %arg3[%c0_3, %c0_4], %2 {strides = array<i32>} : memref<32x128xf32, #tpu.memory_space<vmem>>, vector<32x128xf32>,
    %cst_5 = arith.constant dense<0.000000e+00> : vector<128xf32>
    %4 = vector.multi_reduction <add>, %2, %cst_5 [0] : vector<32x128xf32> to vector<128xf32>
    %5 = vector.shape_cast %4 : vector<128xf32> to vector<1x128xf32>
    %6 = arith.mulf %2, %2 : vector<32x128xf32>
    %cst_6 = arith.constant dense<0.000000e+00> : vector<128xf32>
    %7 = vector.multi_reduction <add>, %6, %cst_6 [0] : vector<32x128xf32> to vector<128xf32>
    %8 = vector.shape_cast %7 : vector<128xf32> to vector<1x128xf32>
    %9 = vector.shape_cast %5 : vector<1x128xf32> to vector<1x128xf32>
    %10 = vector.broadcast %9 : vector<1x128xf32> to vector<8x128xf32>
    %c0_7 = arith.constant 0 : index
    %c0_8 = arith.constant 0 : index
    %11 = vector.load %arg4[%c0_7, %c0_8] : memref<8x128xf32, #tpu.memory_space<vmem>>, vector<8x128xf32>
    tpu.vector_store %arg4[%c0_7, %c0_8], %10 {strides = array<i32>} : memref<8x128xf32, #tpu.memory_space<vmem>>, vector<8x128xf32>,
    %12 = vector.shape_cast %8 : vector<1x128xf32> to vector<1x128xf32>
    %13 = vector.broadcast %12 : vector<1x128xf32> to vector<8x128xf32>
    %c0_9 = arith.constant 0 : index
    %c0_10 = arith.constant 0 : index
    %14 = vector.load %arg5[%c0_9, %c0_10] : memref<8x128xf32, #tpu.memory_space<vmem>>, vector<8x128xf32>
    tpu.vector_store %arg5[%c0_9, %c0_10], %13 {strides = array<i32>} : memref<8x128xf32, #tpu.memory_space<vmem>>, vector<8x128xf32>,
    return
  }
  func.func @transform_0(%arg0: i32) -> (i32, i32) {
    %c0_i32 = arith.constant 0 : i32
    %c0_i32_0 = arith.constant 0 : i32
    return %arg0, %c0_i32 : i32, i32
  }
  func.func @transform_1(%arg0: i32) -> (i32, i32) {
    %c0_i32 = arith.constant 0 : i32
    %c0_i32_0 = arith.constant 0 : i32
    %c0_i32_1 = arith.constant 0 : i32
    return %c0_i32, %c0_i32_0 : i32, i32
  }
  func.func @transform_2(%arg0: i32) -> (i32, i32) {
    %c0_i32 = arith.constant 0 : i32
    %c0_i32_0 = arith.constant 0 : i32
    return %arg0, %c0_i32 : i32, i32
  }
  func.func @transform_3(%arg0: i32) -> (i32, i32) {
    %c0_i32 = arith.constant 0 : i32
    %c0_i32_0 = arith.constant 0 : i32
    return %arg0, %c0_i32 : i32, i32
  }
  func.func @transform_4(%arg0: i32) -> (i32, i32) {
    %c0_i32 = arith.constant 0 : i32
    %c0_i32_0 = arith.constant 0 : i32
    return %arg0, %c0_i32 : i32, i32
  }
}

module attributes {stable_mosaic.version = 11 : i64} {
  func.func @_affine_leaky_kernel(%arg0: i32, %arg1: memref<32x32xf32, #tpu.memory_space<vmem>>, %arg2: memref<1x32xf32, #tpu.memory_space<vmem>>, %arg3: memref<1x32xf32, #tpu.memory_space<vmem>>, %arg4: memref<32x32xbf16, #tpu.memory_space<vmem>>) attributes {dimension_semantics = [#tpu.dimension_semantics<parallel>], iteration_bounds = array<i64: 1>, scalar_prefetch = 0 : i64, scratch_operands = 0 : i64, tpu.core_type = #tpu.core_type<tc>, window_params = [{transform_indices = @transform_0, window_bounds = array<i64: 32, 32>}, {pipeline_mode = #tpu.pipeline_mode<synchronous>, transform_indices = @transform_1, window_bounds = array<i64: 1, 32>}, {pipeline_mode = #tpu.pipeline_mode<synchronous>, transform_indices = @transform_2, window_bounds = array<i64: 1, 32>}, {transform_indices = @transform_3, window_bounds = array<i64: 32, 32>}]} {
    %c0 = arith.constant 0 : index
    %c0_0 = arith.constant 0 : index
    %0 = vector.load %arg1[%c0, %c0_0] : memref<32x32xf32, #tpu.memory_space<vmem>>, vector<32x32xf32>
    %c0_1 = arith.constant 0 : index
    %c0_2 = arith.constant 0 : index
    %1 = vector.load %arg2[%c0_1, %c0_2] : memref<1x32xf32, #tpu.memory_space<vmem>>, vector<1x32xf32>
    %2 = vector.broadcast %1 : vector<1x32xf32> to vector<32x32xf32>
    %3 = arith.mulf %0, %2 : vector<32x32xf32>
    %c0_3 = arith.constant 0 : index
    %c0_4 = arith.constant 0 : index
    %4 = vector.load %arg3[%c0_3, %c0_4] : memref<1x32xf32, #tpu.memory_space<vmem>>, vector<1x32xf32>
    %5 = vector.broadcast %4 : vector<1x32xf32> to vector<32x32xf32>
    %6 = arith.addf %3, %5 : vector<32x32xf32>
    %cst = arith.constant 0.000000e+00 : f32
    %7 = vector.broadcast %cst : f32 to vector<32x32xf32>
    %8 = arith.cmpf ogt, %6, %7 : vector<32x32xf32>
    %cst_5 = arith.constant 2.000000e-01 : f32
    %9 = vector.broadcast %cst_5 : f32 to vector<32x32xf32>
    %10 = arith.mulf %9, %6 : vector<32x32xf32>
    %11 = arith.select %8, %6, %10 : vector<32x32xi1>, vector<32x32xf32>
    %12 = arith.truncf %11 : vector<32x32xf32> to vector<32x32xbf16>
    %c0_6 = arith.constant 0 : index
    %c0_7 = arith.constant 0 : index
    %13 = vector.load %arg4[%c0_6, %c0_7] : memref<32x32xbf16, #tpu.memory_space<vmem>>, vector<32x32xbf16>
    tpu.vector_store %arg4[%c0_6, %c0_7], %12 {strides = array<i32>} : memref<32x32xbf16, #tpu.memory_space<vmem>>, vector<32x32xbf16>,
    return
  }
  func.func @transform_0(%arg0: i32) -> (i32, i32) {
    %c0_i32 = arith.constant 0 : i32
    %c0_i32_0 = arith.constant 0 : i32
    return %arg0, %c0_i32 : i32, i32
  }
  func.func @transform_1(%arg0: i32) -> (i32, i32) {
    %c0_i32 = arith.constant 0 : i32
    %c0_i32_0 = arith.constant 0 : i32
    %c0_i32_1 = arith.constant 0 : i32
    return %c0_i32, %c0_i32_0 : i32, i32
  }
  func.func @transform_2(%arg0: i32) -> (i32, i32) {
    %c0_i32 = arith.constant 0 : i32
    %c0_i32_0 = arith.constant 0 : i32
    %c0_i32_1 = arith.constant 0 : i32
    return %c0_i32, %c0_i32_0 : i32, i32
  }
  func.func @transform_3(%arg0: i32) -> (i32, i32) {
    %c0_i32 = arith.constant 0 : i32
    %c0_i32_0 = arith.constant 0 : i32
    return %arg0, %c0_i32 : i32, i32
  }
}

module attributes {stable_mosaic.version = 11 : i64} {
  func.func @_affine_leaky_kernel(%arg0: i32, %arg1: memref<32x64xf32, #tpu.memory_space<vmem>>, %arg2: memref<1x64xf32, #tpu.memory_space<vmem>>, %arg3: memref<1x64xf32, #tpu.memory_space<vmem>>, %arg4: memref<32x64xbf16, #tpu.memory_space<vmem>>) attributes {dimension_semantics = [#tpu.dimension_semantics<parallel>], iteration_bounds = array<i64: 1>, scalar_prefetch = 0 : i64, scratch_operands = 0 : i64, tpu.core_type = #tpu.core_type<tc>, window_params = [{transform_indices = @transform_0, window_bounds = array<i64: 32, 64>}, {pipeline_mode = #tpu.pipeline_mode<synchronous>, transform_indices = @transform_1, window_bounds = array<i64: 1, 64>}, {pipeline_mode = #tpu.pipeline_mode<synchronous>, transform_indices = @transform_2, window_bounds = array<i64: 1, 64>}, {transform_indices = @transform_3, window_bounds = array<i64: 32, 64>}]} {
    %c0 = arith.constant 0 : index
    %c0_0 = arith.constant 0 : index
    %0 = vector.load %arg1[%c0, %c0_0] : memref<32x64xf32, #tpu.memory_space<vmem>>, vector<32x64xf32>
    %c0_1 = arith.constant 0 : index
    %c0_2 = arith.constant 0 : index
    %1 = vector.load %arg2[%c0_1, %c0_2] : memref<1x64xf32, #tpu.memory_space<vmem>>, vector<1x64xf32>
    %2 = vector.broadcast %1 : vector<1x64xf32> to vector<32x64xf32>
    %3 = arith.mulf %0, %2 : vector<32x64xf32>
    %c0_3 = arith.constant 0 : index
    %c0_4 = arith.constant 0 : index
    %4 = vector.load %arg3[%c0_3, %c0_4] : memref<1x64xf32, #tpu.memory_space<vmem>>, vector<1x64xf32>
    %5 = vector.broadcast %4 : vector<1x64xf32> to vector<32x64xf32>
    %6 = arith.addf %3, %5 : vector<32x64xf32>
    %cst = arith.constant 0.000000e+00 : f32
    %7 = vector.broadcast %cst : f32 to vector<32x64xf32>
    %8 = arith.cmpf ogt, %6, %7 : vector<32x64xf32>
    %cst_5 = arith.constant 2.000000e-01 : f32
    %9 = vector.broadcast %cst_5 : f32 to vector<32x64xf32>
    %10 = arith.mulf %9, %6 : vector<32x64xf32>
    %11 = arith.select %8, %6, %10 : vector<32x64xi1>, vector<32x64xf32>
    %12 = arith.truncf %11 : vector<32x64xf32> to vector<32x64xbf16>
    %c0_6 = arith.constant 0 : index
    %c0_7 = arith.constant 0 : index
    %13 = vector.load %arg4[%c0_6, %c0_7] : memref<32x64xbf16, #tpu.memory_space<vmem>>, vector<32x64xbf16>
    tpu.vector_store %arg4[%c0_6, %c0_7], %12 {strides = array<i32>} : memref<32x64xbf16, #tpu.memory_space<vmem>>, vector<32x64xbf16>,
    return
  }
  func.func @transform_0(%arg0: i32) -> (i32, i32) {
    %c0_i32 = arith.constant 0 : i32
    %c0_i32_0 = arith.constant 0 : i32
    return %arg0, %c0_i32 : i32, i32
  }
  func.func @transform_1(%arg0: i32) -> (i32, i32) {
    %c0_i32 = arith.constant 0 : i32
    %c0_i32_0 = arith.constant 0 : i32
    %c0_i32_1 = arith.constant 0 : i32
    return %c0_i32, %c0_i32_0 : i32, i32
  }
  func.func @transform_2(%arg0: i32) -> (i32, i32) {
    %c0_i32 = arith.constant 0 : i32
    %c0_i32_0 = arith.constant 0 : i32
    %c0_i32_1 = arith.constant 0 : i32
    return %c0_i32, %c0_i32_0 : i32, i32
  }
  func.func @transform_3(%arg0: i32) -> (i32, i32) {
    %c0_i32 = arith.constant 0 : i32
    %c0_i32_0 = arith.constant 0 : i32
    return %arg0, %c0_i32 : i32, i32
  }
}

module attributes {stable_mosaic.version = 11 : i64} {
  func.func @_conv_mm_kernel(%arg0: i32, %arg1: memref<32x512xbf16, #tpu.memory_space<vmem>>, %arg2: memref<512x128xbf16, #tpu.memory_space<vmem>>, %arg3: memref<32x128xf32, #tpu.memory_space<vmem>>, %arg4: memref<8x128xf32, #tpu.memory_space<vmem>>, %arg5: memref<8x128xf32, #tpu.memory_space<vmem>>) attributes {dimension_semantics = [#tpu.dimension_semantics<parallel>], iteration_bounds = array<i64: 1>, scalar_prefetch = 0 : i64, scratch_operands = 0 : i64, tpu.core_type = #tpu.core_type<tc>, window_params = [{transform_indices = @transform_0, window_bounds = array<i64: 32, 512>}, {pipeline_mode = #tpu.pipeline_mode<synchronous>, transform_indices = @transform_1, window_bounds = array<i64: 512, 128>}, {transform_indices = @transform_2, window_bounds = array<i64: 32, 128>}, {transform_indices = @transform_3, window_bounds = array<i64: 8, 128>}, {transform_indices = @transform_4, window_bounds = array<i64: 8, 128>}]} {
    %c0 = arith.constant 0 : index
    %c0_0 = arith.constant 0 : index
    %0 = vector.load %arg1[%c0, %c0_0] : memref<32x512xbf16, #tpu.memory_space<vmem>>, vector<32x512xbf16>
    %c0_1 = arith.constant 0 : index
    %c0_2 = arith.constant 0 : index
    %1 = vector.load %arg2[%c0_1, %c0_2] : memref<512x128xbf16, #tpu.memory_space<vmem>>, vector<512x128xbf16>
    %cst = arith.constant dense<0.000000e+00> : vector<32x128xf32>
    %2 = tpu.matmul %0, %1, %cst {dimension_numbers = #tpu.dot_dimension_numbers<[1], [0], [0], [1], [0, 0, 1, 1], [], []>} : vector<32x512xbf16>, vector<512x128xbf16>, vector<32x128xf32> -> vector<32x128xf32>
    %c0_3 = arith.constant 0 : index
    %c0_4 = arith.constant 0 : index
    %3 = vector.load %arg3[%c0_3, %c0_4] : memref<32x128xf32, #tpu.memory_space<vmem>>, vector<32x128xf32>
    tpu.vector_store %arg3[%c0_3, %c0_4], %2 {strides = array<i32>} : memref<32x128xf32, #tpu.memory_space<vmem>>, vector<32x128xf32>,
    %cst_5 = arith.constant dense<0.000000e+00> : vector<128xf32>
    %4 = vector.multi_reduction <add>, %2, %cst_5 [0] : vector<32x128xf32> to vector<128xf32>
    %5 = vector.shape_cast %4 : vector<128xf32> to vector<1x128xf32>
    %6 = arith.mulf %2, %2 : vector<32x128xf32>
    %cst_6 = arith.constant dense<0.000000e+00> : vector<128xf32>
    %7 = vector.multi_reduction <add>, %6, %cst_6 [0] : vector<32x128xf32> to vector<128xf32>
    %8 = vector.shape_cast %7 : vector<128xf32> to vector<1x128xf32>
    %9 = vector.shape_cast %5 : vector<1x128xf32> to vector<1x128xf32>
    %10 = vector.broadcast %9 : vector<1x128xf32> to vector<8x128xf32>
    %c0_7 = arith.constant 0 : index
    %c0_8 = arith.constant 0 : index
    %11 = vector.load %arg4[%c0_7, %c0_8] : memref<8x128xf32, #tpu.memory_space<vmem>>, vector<8x128xf32>
    tpu.vector_store %arg4[%c0_7, %c0_8], %10 {strides = array<i32>} : memref<8x128xf32, #tpu.memory_space<vmem>>, vector<8x128xf32>,
    %12 = vector.shape_cast %8 : vector<1x128xf32> to vector<1x128xf32>
    %13 = vector.broadcast %12 : vector<1x128xf32> to vector<8x128xf32>
    %c0_9 = arith.constant 0 : index
    %c0_10 = arith.constant 0 : index
    %14 = vector.load %arg5[%c0_9, %c0_10] : memref<8x128xf32, #tpu.memory_space<vmem>>, vector<8x128xf32>
    tpu.vector_store %arg5[%c0_9, %c0_10], %13 {strides = array<i32>} : memref<8x128xf32, #tpu.memory_space<vmem>>, vector<8x128xf32>,
    return
  }
  func.func @transform_0(%arg0: i32) -> (i32, i32) {
    %c0_i32 = arith.constant 0 : i32
    %c0_i32_0 = arith.constant 0 : i32
    return %arg0, %c0_i32 : i32, i32
  }
  func.func @transform_1(%arg0: i32) -> (i32, i32) {
    %c0_i32 = arith.constant 0 : i32
    %c0_i32_0 = arith.constant 0 : i32
    %c0_i32_1 = arith.constant 0 : i32
    return %c0_i32, %c0_i32_0 : i32, i32
  }
  func.func @transform_2(%arg0: i32) -> (i32, i32) {
    %c0_i32 = arith.constant 0 : i32
    %c0_i32_0 = arith.constant 0 : i32
    return %arg0, %c0_i32 : i32, i32
  }
  func.func @transform_3(%arg0: i32) -> (i32, i32) {
    %c0_i32 = arith.constant 0 : i32
    %c0_i32_0 = arith.constant 0 : i32
    return %arg0, %c0_i32 : i32, i32
  }
  func.func @transform_4(%arg0: i32) -> (i32, i32) {
    %c0_i32 = arith.constant 0 : i32
    %c0_i32_0 = arith.constant 0 : i32
    return %arg0, %c0_i32 : i32, i32
  }
}

module attributes {stable_mosaic.version = 11 : i64} {
  func.func @_conv_mm_kernel(%arg0: i32, %arg1: memref<16x1024xbf16, #tpu.memory_space<vmem>>, %arg2: memref<1024x128xbf16, #tpu.memory_space<vmem>>, %arg3: memref<16x128xf32, #tpu.memory_space<vmem>>) attributes {dimension_semantics = [#tpu.dimension_semantics<parallel>], iteration_bounds = array<i64: 1>, scalar_prefetch = 0 : i64, scratch_operands = 0 : i64, tpu.core_type = #tpu.core_type<tc>, window_params = [{transform_indices = @transform_0, window_bounds = array<i64: 16, 1024>}, {pipeline_mode = #tpu.pipeline_mode<synchronous>, transform_indices = @transform_1, window_bounds = array<i64: 1024, 128>}, {transform_indices = @transform_2, window_bounds = array<i64: 16, 128>}]} {
    %c0 = arith.constant 0 : index
    %c0_0 = arith.constant 0 : index
    %0 = vector.load %arg1[%c0, %c0_0] : memref<16x1024xbf16, #tpu.memory_space<vmem>>, vector<16x1024xbf16>
    %c0_1 = arith.constant 0 : index
    %c0_2 = arith.constant 0 : index
    %1 = vector.load %arg2[%c0_1, %c0_2] : memref<1024x128xbf16, #tpu.memory_space<vmem>>, vector<1024x128xbf16>
    %cst = arith.constant dense<0.000000e+00> : vector<16x128xf32>
    %2 = tpu.matmul %0, %1, %cst {dimension_numbers = #tpu.dot_dimension_numbers<[1], [0], [0], [1], [0, 0, 1, 1], [], []>} : vector<16x1024xbf16>, vector<1024x128xbf16>, vector<16x128xf32> -> vector<16x128xf32>
    %cst_3 = arith.constant 0.000000e+00 : f32
    %3 = vector.broadcast %cst_3 : f32 to vector<16x128xf32>
    %4 = arith.subf %3, %2 : vector<16x128xf32>
    %5 = math.exp %4 : vector<16x128xf32>
    %cst_4 = arith.constant 1.000000e+00 : f32
    %6 = vector.broadcast %cst_4 : f32 to vector<16x128xf32>
    %7 = arith.addf %6, %5 : vector<16x128xf32>
    %cst_5 = arith.constant 1.000000e+00 : f32
    %8 = vector.broadcast %cst_5 : f32 to vector<16x128xf32>
    %9 = arith.divf %8, %7 : vector<16x128xf32>
    %c0_6 = arith.constant 0 : index
    %c0_7 = arith.constant 0 : index
    %10 = vector.load %arg3[%c0_6, %c0_7] : memref<16x128xf32, #tpu.memory_space<vmem>>, vector<16x128xf32>
    tpu.vector_store %arg3[%c0_6, %c0_7], %9 {strides = array<i32>} : memref<16x128xf32, #tpu.memory_space<vmem>>, vector<16x128xf32>,
    return
  }
  func.func @transform_0(%arg0: i32) -> (i32, i32) {
    %c0_i32 = arith.constant 0 : i32
    %c0_i32_0 = arith.constant 0 : i32
    return %arg0, %c0_i32 : i32, i32
  }
  func.func @transform_1(%arg0: i32) -> (i32, i32) {
    %c0_i32 = arith.constant 0 : i32
    %c0_i32_0 = arith.constant 0 : i32
    %c0_i32_1 = arith.constant 0 : i32
    return %c0_i32, %c0_i32_0 : i32, i32
  }
  func.func @transform_2(%arg0: i32) -> (i32, i32) {
    %c0_i32 = arith.constant 0 : i32
    %c0_i32_0 = arith.constant 0 : i32
    return %arg0, %c0_i32 : i32, i32
  }
}

</mosaic_0001>

<llo_original>
// kernel: d_forward.9
$region0: #{d_forward.9}
  #allocation0 [shape = 'u32[]', space=smem, size = 0x4, offset = 0x4, fixed_abs, tag = 'smem constant byte address 0x4 - core index']
  #allocation1 [shape = 'u32[144,128]{1,0:T(1,128)}', space=vmem, size = 0x12000, scoped, tag = 'internal scratch']
  %s0 = inlined_call_operand.vmem [shape: bf16[512,128], index: 0, kind: input, shape index: {}]
  %s1 = inlined_call_operand.vmem [shape: bf16[128,128], index: 1, kind: input, shape index: {}]
  %s2 = inlined_call_operand.vmem [shape: f32[512,128], index: 2, kind: output, shape index: {}]
  %s3 = sld [smem:[#allocation0]]
  $region41: #{d_forward.9} parent=0
    _
  %s5 = ssub.s32 1, %s3
  %s6 = scalar_select 0, %s5, %s3
  loop: start=0, step=1, limit=10
  $region2: #{d_forward.9} parent=0 // loop_pre_header
    _
  $region3: #{d_forward.9} parent=0 // loop_header
    %s8 = sphi 0, %s12
    %p9 = scmp.ge.s32.totalorder %s8, 10
    %s18 = sphi 0, %s20
    %s21 = sphi 0, %s18
    %s22 = sphi 0, %s21
    %s38 = sphi 0, %s22
    %s42 = sphi 0, %s42
    %s44 = sphi 0, %s42
    %s45 = sphi 0, %s44
    %s59 = sphi 0, %s45
    %s65 = sphi 0, %s67
    %s68 = sphi 0, %s65
    %s69 = sphi 0, %s68
    %s85 = sphi 0, %s69
  $region4: #{d_forward.9} parent=0 // loop_header_branch
    %11 = sbr.rel (%p9) target = $region8
  $region5: #{d_forward.9} parent=0 // loop_body
    %s13 = ssub.s32 %s8, 1
    %s14 = ssub.s32 %s8, 2
    %s15 = sadd.s32 %s8, 1
    %s16 = ssub.s32 %s8, %s15
    %p17 = scmp.eq.s32.totalorder %s16, 0
    %s19 = sadd.s32 %s18, 1
    %s20 = scalar_select %p17, %s18, %s19
    %p23 = pneg %p17
    %p24 = scmp.eq.s32.totalorder %s8, 7
    %p25 = por %p23, %p24
    %p26 = scmp.ne.s32.totalorder %s18, %s21
    %p27 = scmp.eq.s32.totalorder %s8, 0
    %p28 = por %p26, %p27
    %p29 = scmp.ne.s32.totalorder %s18, %s21
    %p30 = scmp.eq.s32.totalorder %s13, 7
    %p31 = por %p29, %p30
    %p32 = scmp.ne.s32.totalorder %s21, %s22
    %p33 = scmp.eq.s32.totalorder %s13, 0
    %p34 = por %p32, %p33
    %p35 = scmp.ne.s32.totalorder %s21, %s22
    %p36 = scmp.eq.s32.totalorder %s14, 7
    %p37 = por %p35, %p36
    %p39 = scmp.ne.s32.totalorder %s22, %s38
    %p40 = scmp.eq.s32.totalorder %s14, 0
    %p41 = por %p39, %p40
    %s43 = sadd.s32 %s42, 1
    %p46 = scmp.eq.s32.totalorder %s8, 7
    %p47 = scmp.ne.s32.totalorder %s42, %s44
    %p48 = scmp.eq.s32.totalorder %s8, 0
    %p49 = por %p47, %p48
    %p50 = scmp.ne.s32.totalorder %s42, %s44
    %p51 = scmp.eq.s32.totalorder %s13, 7
    %p52 = por %p50, %p51
    %p53 = scmp.ne.s32.totalorder %s44, %s45
    %p54 = scmp.eq.s32.totalorder %s13, 0
    %p55 = por %p53, %p54
    %p56 = scmp.ne.s32.totalorder %s44, %s45
    %p57 = scmp.eq.s32.totalorder %s14, 7
    %p58 = por %p56, %p57
    %p60 = scmp.ne.s32.totalorder %s45, %s59
    %p61 = scmp.eq.s32.totalorder %s14, 0
    %p62 = por %p60, %p61
    %s63 = ssub.s32 %s8, %s15
    %p64 = scmp.eq.s32.totalorder %s63, 0
    %s66 = sadd.s32 %s65, 1
    %s67 = scalar_select %p64, %s65, %s66
    %p70 = pneg %p64
    %p71 = scmp.eq.s32.totalorder %s8, 7
    %p72 = por %p70, %p71
    %p73 = scmp.ne.s32.totalorder %s65, %s68
    %p74 = scmp.eq.s32.totalorder %s8, 0
    %p75 = por %p73, %p74
    %p76 = scmp.ne.s32.totalorder %s65, %s68
    %p77 = scmp.eq.s32.totalorder %s13, 7
    %p78 = por %p76, %p77
    %p79 = scmp.ne.s32.totalorder %s68, %s69
    %p80 = scmp.eq.s32.totalorder %s13, 0
    %p81 = por %p79, %p80
    %p82 = scmp.ne.s32.totalorder %s68, %s69
    %p83 = scmp.eq.s32.totalorder %s14, 7
    %p84 = por %p82, %p83
    %p86 = scmp.ne.s32.totalorder %s69, %s85
    %p87 = scmp.eq.s32.totalorder %s14, 0
    %p88 = por %p86, %p87
    %p89 = scmp.le.s32.totalorder 1, %s8
    %p90 = scmp.lt.s32.totalorder %s8, 9
    %p91 = pnand %p89, %p90
    %p92 = pneg %p91
    // Predicated region
    $region9: #{d_forward.9} parent=5 // pred_check
      _
    $region10: #{d_forward.9} parent=5 // pred_check_branch
      %94 = sbr.rel (%p91) target = $region12
    $region11: #{d_forward.9} parent=5 // pred_region
      %s95 = ssub.s32 %s8, 1
      // Predicated region
      $region13: #{d_forward.9} parent=11 // pred_check
        %p96 = pneg %p55
      $region14: #{d_forward.9} parent=11 // pred_check_branch
        %98 = sbr.rel (%p96) target = $region16
      $region15: #{d_forward.9} parent=11 // pred_region
        _
      $region16: #{d_forward.9} parent=11 // pred_fallthru
        _
    $region12: #{d_forward.9} parent=5 // pred_fallthru
      _
    %p99 = scmp.lt.s32.totalorder %s8, 8
    // Predicated region
    $region17: #{d_forward.9} parent=5 // pred_check
      %p100 = pneg %p99
    $region18: #{d_forward.9} parent=5 // pred_check_branch
      %102 = sbr.rel (%p100) target = $region20
    $region19: #{d_forward.9} parent=5 // pred_region
      // Predicated region
      $region21: #{d_forward.9} parent=19 // pred_check
        %p103 = pneg %p28
      $region22: #{d_forward.9} parent=19 // pred_check_branch
        %105 = sbr.rel (%p103) target = $region24
      $region23: #{d_forward.9} parent=19 // pred_region
        %s106 = smul.u32 8, %s8
        %p107 = scmp.lt.s32.totalorder %s106, 63
        %s108 = scalar_select %p107, %s106, 63
        %s109 = smul.addr %s108, 4
        %s110 = scalar_lea.vmem %s0, %s109
        %s111 = smul.u32 8, %s8
      $region24: #{d_forward.9} parent=19 // pred_fallthru
        _
    $region20: #{d_forward.9} parent=5 // pred_fallthru
      _
    %p112 = scmp.le.s32.totalorder 1, %s8
    %p113 = scmp.lt.s32.totalorder %s8, 9
    %p114 = pnand %p112, %p113
    %p115 = pneg %p114
    // Predicated region
    $region25: #{d_forward.9} parent=5 // pred_check
      _
    $region26: #{d_forward.9} parent=5 // pred_check_branch
      %117 = sbr.rel (%p114) target = $region28
    $region27: #{d_forward.9} parent=5 // pred_region
      %s118 = ssub.s32 %s8, 1
      %s119 = smul.u32 8, %s13
      %p120 = scmp.lt.s32.totalorder %s119, 63
      %s121 = scalar_select %p120, %s119, 63
      %s122 = smul.addr %s121, 4
      %s123 = scalar_lea.vmem %s0, %s122
      %p124 = pneg %p34
      %p125 = pneg %p31
      %p126 = pneg %p55
      %p127 = pneg %p52
      %p128 = pneg %p81
      %p129 = pneg %p78
      %s130 = smul.u32 8, %s13
      %p131 = scmp.lt.s32.totalorder %s130, 63
      %s132 = scalar_select %p131, %s130, 63
      %s133 = smul.addr %s132, 8
      %s134 = scalar_lea.vmem %s2, %s133
      %s135 = smul.u32 8, %s13
      %p136 = scmp.lt.s32.totalorder %s135, 63
      %s137 = scalar_select %p136, %s135, 63
      %s138 = smul.addr %s137, 4
      %s139 = scalar_lea.vmem %s0, %s138
      %s140 = smul.u32 8, %s13
      %s141 = smul.u32 8, %s13
      %p142 = scmp.lt.s32.totalorder %s141, 63
      %s143 = scalar_select %p142, %s141, 63
      %s144 = smul.addr %s143, 8
      %s145 = scalar_lea.vmem %s2, %s144
      %s146 = smul.u32 8, %s13
      %v148 = vld [vmem:[%s139] sm:$0xf]
      %v149 = vld [vmem:[%s139 + $0x4] sm:$0xf]
      %v150 = vld [vmem:[%s139 + $0x8] sm:$0xf]
      %v151 = vld [vmem:[%s139 + $0xc] sm:$0xf]
      %v152 = vld [vmem:[%s139 + $0x10] sm:$0xf]
      %v153 = vld [vmem:[%s139 + $0x14] sm:$0xf]
      %v154 = vld [vmem:[%s139 + $0x18] sm:$0xf]
      %v155 = vld [vmem:[%s139 + $0x1c] sm:$0xf]
      %v156 = vld [vmem:[%s1] sm:$0xf]
      %v157 = vld [vmem:[%s1 + $0x4] sm:$0xf]
      %v158 = vld [vmem:[%s1 + $0x8] sm:$0xf]
      %v159 = vld [vmem:[%s1 + $0xc] sm:$0xf]
      %v160 = vld [vmem:[%s1 + $0x10] sm:$0xf]
      %v161 = vld [vmem:[%s1 + $0x14] sm:$0xf]
      %v162 = vld [vmem:[%s1 + $0x18] sm:$0xf]
      %v163 = vld [vmem:[%s1 + $0x1c] sm:$0xf]
      %v164 = vld [vmem:[%s1 + $0x20] sm:$0xf]
      %v165 = vld [vmem:[%s1 + $0x24] sm:$0xf]
      %v166 = vld [vmem:[%s1 + $0x28] sm:$0xf]
      %v167 = vld [vmem:[%s1 + $0x2c] sm:$0xf]
      %v168 = vld [vmem:[%s1 + $0x30] sm:$0xf]
      %v169 = vld [vmem:[%s1 + $0x34] sm:$0xf]
      %v170 = vld [vmem:[%s1 + $0x38] sm:$0xf]
      %v171 = vld [vmem:[%s1 + $0x3c] sm:$0xf]
      %v180 = vunpack.c.l.b16 %v148
      %v181 = vunpack.c.l.b16 %v149
      %v182 = vunpack.c.l.b16 %v150
      %v183 = vunpack.c.l.b16 %v151
      %v184 = vunpack.c.l.b16 %v152
      %v185 = vunpack.c.l.b16 %v153
      %v186 = vunpack.c.l.b16 %v154
      %v187 = vunpack.c.l.b16 %v155
      %v188 = vpack.c.b16 %v181, %v180
      %v189 = vpack.c.b16 %v183, %v182
      %v190 = vpack.c.b16 %v185, %v184
      %v191 = vpack.c.b16 %v187, %v186
      %v212 = vunpack.c.l.b16 %v156
      %v213 = vunpack.c.l.b16 %v157
      %v214 = vunpack.c.l.b16 %v158
      %v215 = vunpack.c.l.b16 %v159
      %v216 = vunpack.c.l.b16 %v160
      %v217 = vunpack.c.l.b16 %v161
      %v218 = vunpack.c.l.b16 %v162
      %v219 = vunpack.c.l.b16 %v163
      %v220 = vunpack.c.l.b16 %v164
      %v221 = vunpack.c.l.b16 %v165
      %v222 = vunpack.c.l.b16 %v166
      %v223 = vunpack.c.l.b16 %v167
      %v224 = vunpack.c.l.b16 %v168
      %v225 = vunpack.c.l.b16 %v169
      %v226 = vunpack.c.l.b16 %v170
      %v227 = vunpack.c.l.b16 %v171
      %v228 = vpack.c.b16 %v213, %v212
      %v229 = vpack.c.b16 %v215, %v214
      %v230 = vpack.c.b16 %v217, %v216
      %v231 = vpack.c.b16 %v219, %v218
      %v232 = vpack.c.b16 %v221, %v220
      %v233 = vpack.c.b16 %v223, %v222
      %v234 = vpack.c.b16 %v225, %v224
      %v235 = vpack.c.b16 %v227, %v226
      %244 = vmatprep.subr.bf16.mxu0 0
      %245 = vmatpush1.bf16.msra.mxu0 %v228
      %246 = vmatprep.subr.bf16.mxu0 0
      %247 = vmatpush1.bf16.msra.mxu0 %v229
      %248 = vmatprep.subr.bf16.mxu0 0
      %249 = vmatpush1.bf16.msra.mxu0 %v230
      %250 = vmatprep.subr.bf16.mxu0 0
      %251 = vmatpush1.bf16.msra.mxu0 %v231
      %252 = vmatprep.subr.bf16.mxu0 0
      %253 = vmatpush1.bf16.msra.mxu0 %v232
      %254 = vmatprep.subr.bf16.mxu0 0
      %255 = vmatpush1.bf16.msra.mxu0 %v233
      %256 = vmatprep.subr.bf16.mxu0 0
      %257 = vmatpush1.bf16.msra.mxu0 %v234
      %258 = vmatprep.subr.bf16.mxu0 0
      %259 = vmatpush1.bf16.msra.mxu0 %v235
      %260 = vmatprep.subr.bf16.mxu0 0
      %261 = vmatpush1.bf16.msra.mxu0 0
      %262 = vmatprep.subr.bf16.mxu0 0
      %263 = vmatpush1.bf16.msra.mxu0 0
      %264 = vmatprep.subr.bf16.mxu0 0
      %265 = vmatpush1.bf16.msra.mxu0 0
      %266 = vmatprep.subr.bf16.mxu0 0
      %267 = vmatpush1.bf16.msra.mxu0 0
      %268 = vmatprep.subr.bf16.mxu0 0
      %269 = vmatpush1.bf16.msra.mxu0 0
      %270 = vmatprep.subr.bf16.mxu0 0
      %271 = vmatpush1.bf16.msra.mxu0 0
      %272 = vmatprep.subr.bf16.mxu0 0
      %273 = vmatpush1.bf16.msra.mxu0 0
      %274 = vmatprep.subr.bf16.mxu0 0
      %275 = vmatpush1.bf16.msra.mxu0 0
      %276 = vmatprep.mubr.bf16.mxu0 0
      %277 = vmatmul.mubr.bf16.gmra.mrb[0].mxu0 %v188
      %v278 = vpop.f32.mrb[0].mxu0
      %v279 = vadd.f32 0.0, %v278
      %v280 = vpop.f32.mrb[0].mxu0
      %v281 = vpop.f32.mrb[0].mxu0
      %v282 = vadd.f32 0.0, %v281
      %v283 = vpop.f32.mrb[0].mxu0
      %284 = vmatprep.mubr.bf16.mxu0 0
      %285 = vmatmul.mubr.bf16.gmra.mrb[0].mxu0 %v189
      %v286 = vpop.f32.mrb[0].mxu0
      %v287 = vadd.f32 0.0, %v286
      %v288 = vpop.f32.mrb[0].mxu0
      %v289 = vpop.f32.mrb[0].mxu0
      %v290 = vadd.f32 0.0, %v289
      %v291 = vpop.f32.mrb[0].mxu0
      %292 = vmatprep.mubr.bf16.mxu0 0
      %293 = vmatmul.mubr.bf16.gmra.mrb[0].mxu0 %v190
      %v294 = vpop.f32.mrb[0].mxu0
      %v295 = vadd.f32 0.0, %v294
      %v296 = vpop.f32.mrb[0].mxu0
      %v297 = vpop.f32.mrb[0].mxu0
      %v298 = vadd.f32 0.0, %v297
      %v299 = vpop.f32.mrb[0].mxu0
      %300 = vmatprep.mubr.bf16.mxu0 0
      %301 = vmatmul.mubr.bf16.gmra.mrb[0].mxu0 %v191
      %v302 = vpop.f32.mrb[0].mxu0
      %v303 = vadd.f32 0.0, %v302
      %v304 = vpop.f32.mrb[0].mxu0
      %v305 = vpop.f32.mrb[0].mxu0
      %v306 = vadd.f32 0.0, %v305
      %v307 = vpop.f32.mrb[0].mxu0
      %308 = vdwg.mxu0
      %309 = vst [vmem:[%s145] sm:$0xff] %v279
      %310 = vst [vmem:[%s145 + $0x8] sm:$0xff] %v282
      %311 = vst [vmem:[%s145 + $0x10] sm:$0xff] %v287
      %312 = vst [vmem:[%s145 + $0x18] sm:$0xff] %v290
      %313 = vst [vmem:[%s145 + $0x20] sm:$0xff] %v295
      %314 = vst [vmem:[%s145 + $0x28] sm:$0xff] %v298
      %315 = vst [vmem:[%s145 + $0x30] sm:$0xff] %v303
      %316 = vst [vmem:[%s145 + $0x38] sm:$0xff] %v306
      %s317 = smul.u32 8, %s13
      %p318 = scmp.lt.s32.totalorder %s317, 63
      %s319 = scalar_select %p318, %s317, 63
      %s320 = smul.addr %s319, 8
      %s321 = scalar_lea.vmem %s2, %s320
      // Predicated region
      $region29: #{d_forward.9} parent=27 // pred_check
        %p322 = pneg %p78
      $region30: #{d_forward.9} parent=27 // pred_check_branch
        %324 = sbr.rel (%p322) target = $region32
      $region31: #{d_forward.9} parent=27 // pred_region
        %s325 = smul.u32 8, %s13
      $region32: #{d_forward.9} parent=27 // pred_fallthru
        _
    $region28: #{d_forward.9} parent=5 // pred_fallthru
      _
    %p326 = scmp.le.s32.totalorder 2, %s8
    // Predicated region
    $region33: #{d_forward.9} parent=5 // pred_check
      %p327 = pneg %p326
    $region34: #{d_forward.9} parent=5 // pred_check_branch
      %329 = sbr.rel (%p327) target = $region36
    $region35: #{d_forward.9} parent=5 // pred_region
      %s330 = ssub.s32 %s8, 2
      // Predicated region
      $region37: #{d_forward.9} parent=35 // pred_check
        %p331 = pneg %p84
      $region38: #{d_forward.9} parent=35 // pred_check_branch
        %333 = sbr.rel (%p331) target = $region40
      $region39: #{d_forward.9} parent=35 // pred_region
        %s334 = smul.u32 8, %s14
        %p335 = scmp.lt.s32.totalorder %s334, 63
        %s336 = scalar_select %p335, %s334, 63
        %s337 = smul.addr %s336, 8
        %s338 = scalar_lea.vmem %s2, %s337
      $region40: #{d_forward.9} parent=35 // pred_fallthru
        _
    $region36: #{d_forward.9} parent=5 // pred_fallthru
      _
  $region6: #{d_forward.9} parent=0 // loop_footer
    %s12 = sadd.s32 1, %s8
  $region7: #{d_forward.9} parent=0 // loop_footer_branch
    %7 = sbr.rel target = $region3
  $region8: #{d_forward.9} parent=0 // loop_exit
    _

// kernel: d_forward.10
$region0: #{d_forward.10}
  #allocation0 [shape = 'u32[]', space=smem, size = 0x4, offset = 0x4, fixed_abs, tag = 'smem constant byte address 0x4 - core index']
  #allocation1 [shape = 'u32[144,128]{1,0:T(1,128)}', space=vmem, size = 0x12000, scoped, tag = 'internal scratch']
  %s0 = inlined_call_operand.vmem [shape: f32[512,8], index: 0, kind: input, shape index: {}]
  %s1 = inlined_call_operand.vmem [shape: f32[1,8], index: 1, kind: input, shape index: {}]
  %s2 = inlined_call_operand.vmem [shape: f32[1,8], index: 2, kind: input, shape index: {}]
  %s3 = inlined_call_operand.vmem [shape: bf16[512,8], index: 3, kind: output, shape index: {}]
  %s4 = sld [smem:[#allocation0]]
  $region22: #{d_forward.10} parent=0
    _
  %s6 = ssub.s32 1, %s4
  %s7 = scalar_select 0, %s6, %s4
  // Predicated region
  $region2: #{d_forward.10} parent=0 // pred_check
    _
  $region3: #{d_forward.10} parent=0 // pred_check_branch
    %9 = sbr.rel (0) target = $region5
  $region4: #{d_forward.10} parent=0 // pred_region
    _
  $region5: #{d_forward.10} parent=0 // pred_fallthru
    _
  // Predicated region
  $region6: #{d_forward.10} parent=0 // pred_check
    _
  $region7: #{d_forward.10} parent=0 // pred_check_branch
    %11 = sbr.rel (0) target = $region9
  $region8: #{d_forward.10} parent=0 // pred_region
    _
  $region9: #{d_forward.10} parent=0 // pred_fallthru
    _
  // Predicated region
  $region10: #{d_forward.10} parent=0 // pred_check
    _
  $region11: #{d_forward.10} parent=0 // pred_check_branch
    %13 = sbr.rel (0) target = $region13
  $region12: #{d_forward.10} parent=0 // pred_region
    _
  $region13: #{d_forward.10} parent=0 // pred_fallthru
    _
  %v14 = vld [vmem:[%s0] sm:$0xff]
  %v15 = vld [vmem:[%s0 + $0x8] sm:$0xff]
  %v16 = vld [vmem:[%s0 + $0x10] sm:$0xff]
  %v17 = vld [vmem:[%s0 + $0x18] sm:$0xff]
  %v18 = vld [vmem:[%s0 + $0x20] sm:$0xff]
  %v19 = vld [vmem:[%s0 + $0x28] sm:$0xff]
  %v20 = vld [vmem:[%s0 + $0x30] sm:$0xff]
  %v21 = vld [vmem:[%s0 + $0x38] sm:$0xff]
  %v22 = vld [vmem:[%s0 + $0x40] sm:$0xff]
  %v23 = vld [vmem:[%s0 + $0x48] sm:$0xff]
  %v24 = vld [vmem:[%s0 + $0x50] sm:$0xff]
  %v25 = vld [vmem:[%s0 + $0x58] sm:$0xff]
  %v26 = vld [vmem:[%s0 + $0x60] sm:$0xff]
  %v27 = vld [vmem:[%s0 + $0x68] sm:$0xff]
  %v28 = vld [vmem:[%s0 + $0x70] sm:$0xff]
  %v29 = vld [vmem:[%s0 + $0x78] sm:$0xff]
  %v30 = vld [vmem:[%s0 + $0x80] sm:$0xff]
  %v31 = vld [vmem:[%s0 + $0x88] sm:$0xff]
  %v32 = vld [vmem:[%s0 + $0x90] sm:$0xff]
  %v33 = vld [vmem:[%s0 + $0x98] sm:$0xff]
  %v34 = vld [vmem:[%s0 + $0xa0] sm:$0xff]
  %v35 = vld [vmem:[%s0 + $0xa8] sm:$0xff]
  %v36 = vld [vmem:[%s0 + $0xb0] sm:$0xff]
  %v37 = vld [vmem:[%s0 + $0xb8] sm:$0xff]
  %v38 = vld [vmem:[%s0 + $0xc0] sm:$0xff]
  %v39 = vld [vmem:[%s0 + $0xc8] sm:$0xff]
  %v40 = vld [vmem:[%s0 + $0xd0] sm:$0xff]
  %v41 = vld [vmem:[%s0 + $0xd8] sm:$0xff]
  %v42 = vld [vmem:[%s0 + $0xe0] sm:$0xff]
  %v43 = vld [vmem:[%s0 + $0xe8] sm:$0xff]
  %v44 = vld [vmem:[%s0 + $0xf0] sm:$0xff]
  %v45 = vld [vmem:[%s0 + $0xf8] sm:$0xff]
  %v46 = vld [vmem:[%s0 + $0x100] sm:$0xff]
  %v47 = vld [vmem:[%s0 + $0x108] sm:$0xff]
  %v48 = vld [vmem:[%s0 + $0x110] sm:$0xff]
  %v49 = vld [vmem:[%s0 + $0x118] sm:$0xff]
  %v50 = vld [vmem:[%s0 + $0x120] sm:$0xff]
  %v51 = vld [vmem:[%s0 + $0x128] sm:$0xff]
  %v52 = vld [vmem:[%s0 + $0x130] sm:$0xff]
  %v53 = vld [vmem:[%s0 + $0x138] sm:$0xff]
  %v54 = vld [vmem:[%s0 + $0x140] sm:$0xff]
  %v55 = vld [vmem:[%s0 + $0x148] sm:$0xff]
  %v56 = vld [vmem:[%s0 + $0x150] sm:$0xff]
  %v57 = vld [vmem:[%s0 + $0x158] sm:$0xff]
  %v58 = vld [vmem:[%s0 + $0x160] sm:$0xff]
  %v59 = vld [vmem:[%s0 + $0x168] sm:$0xff]
  %v60 = vld [vmem:[%s0 + $0x170] sm:$0xff]
  %v61 = vld [vmem:[%s0 + $0x178] sm:$0xff]
  %v62 = vld [vmem:[%s0 + $0x180] sm:$0xff]
  %v63 = vld [vmem:[%s0 + $0x188] sm:$0xff]
  %v64 = vld [vmem:[%s0 + $0x190] sm:$0xff]
  %v65 = vld [vmem:[%s0 + $0x198] sm:$0xff]
  %v66 = vld [vmem:[%s0 + $0x1a0] sm:$0xff]
  %v67 = vld [vmem:[%s0 + $0x1a8] sm:$0xff]
  %v68 = vld [vmem:[%s0 + $0x1b0] sm:$0xff]
  %v69 = vld [vmem:[%s0 + $0x1b8] sm:$0xff]
  %v70 = vld [vmem:[%s0 + $0x1c0] sm:$0xff]
  %v71 = vld [vmem:[%s0 + $0x1c8] sm:$0xff]
  %v72 = vld [vmem:[%s0 + $0x1d0] sm:$0xff]
  %v73 = vld [vmem:[%s0 + $0x1d8] sm:$0xff]
  %v74 = vld [vmem:[%s0 + $0x1e0] sm:$0xff]
  %v75 = vld [vmem:[%s0 + $0x1e8] sm:$0xff]
  %v76 = vld [vmem:[%s0 + $0x1f0] sm:$0xff]
  %v77 = vld [vmem:[%s0 + $0x1f8] sm:$0xff]
  %v78 = vld [vmem:[%s1] sm:$0x1]
  %v80 = vlaneseq
  %v81 = vshrl.u32 %v80, 7
  %v82 = vsub.s32 0, %v81
  %v83 = vrot.slane %v78, %v82
  %v85 = vmul.f32 %v14, %v83
  %v86 = vmul.f32 %v15, %v83
  %v87 = vmul.f32 %v16, %v83
  %v88 = vmul.f32 %v17, %v83
  %v89 = vmul.f32 %v18, %v83
  %v90 = vmul.f32 %v19, %v83
  %v91 = vmul.f32 %v20, %v83
  %v92 = vmul.f32 %v21, %v83
  %v93 = vmul.f32 %v22, %v83
  %v94 = vmul.f32 %v23, %v83
  %v95 = vmul.f32 %v24, %v83
  %v96 = vmul.f32 %v25, %v83
  %v97 = vmul.f32 %v26, %v83
  %v98 = vmul.f32 %v27, %v83
  %v99 = vmul.f32 %v28, %v83
  %v100 = vmul.f32 %v29, %v83
  %v101 = vmul.f32 %v30, %v83
  %v102 = vmul.f32 %v31, %v83
  %v103 = vmul.f32 %v32, %v83
  %v104 = vmul.f32 %v33, %v83
  %v105 = vmul.f32 %v34, %v83
  %v106 = vmul.f32 %v35, %v83
  %v107 = vmul.f32 %v36, %v83
  %v108 = vmul.f32 %v37, %v83
  %v109 = vmul.f32 %v38, %v83
  %v110 = vmul.f32 %v39, %v83
  %v111 = vmul.f32 %v40, %v83
  %v112 = vmul.f32 %v41, %v83
  %v113 = vmul.f32 %v42, %v83
  %v114 = vmul.f32 %v43, %v83
  %v115 = vmul.f32 %v44, %v83
  %v116 = vmul.f32 %v45, %v83
  %v117 = vmul.f32 %v46, %v83
  %v118 = vmul.f32 %v47, %v83
  %v119 = vmul.f32 %v48, %v83
  %v120 = vmul.f32 %v49, %v83
  %v121 = vmul.f32 %v50, %v83
  %v122 = vmul.f32 %v51, %v83
  %v123 = vmul.f32 %v52, %v83
  %v124 = vmul.f32 %v53, %v83
  %v125 = vmul.f32 %v54, %v83
  %v126 = vmul.f32 %v55, %v83
  %v127 = vmul.f32 %v56, %v83
  %v128 = vmul.f32 %v57, %v83
  %v129 = vmul.f32 %v58, %v83
  %v130 = vmul.f32 %v59, %v83
  %v131 = vmul.f32 %v60, %v83
  %v132 = vmul.f32 %v61, %v83
  %v133 = vmul.f32 %v62, %v83
  %v134 = vmul.f32 %v63, %v83
  %v135 = vmul.f32 %v64, %v83
  %v136 = vmul.f32 %v65, %v83
  %v137 = vmul.f32 %v66, %v83
  %v138 = vmul.f32 %v67, %v83
  %v139 = vmul.f32 %v68, %v83
  %v140 = vmul.f32 %v69, %v83
  %v141 = vmul.f32 %v70, %v83
  %v142 = vmul.f32 %v71, %v83
  %v143 = vmul.f32 %v72, %v83
  %v144 = vmul.f32 %v73, %v83
  %v145 = vmul.f32 %v74, %v83
  %v146 = vmul.f32 %v75, %v83
  %v147 = vmul.f32 %v76, %v83
  %v148 = vmul.f32 %v77, %v83
  %v149 = vld [vmem:[%s2] sm:$0x1]
  %v151 = vlaneseq
  %v152 = vshrl.u32 %v151, 7
  %v153 = vsub.s32 0, %v152
  %v154 = vrot.slane %v149, %v153
  %v156 = vadd.f32 %v85, %v154
  %v157 = vadd.f32 %v86, %v154
  %v158 = vadd.f32 %v87, %v154
  %v159 = vadd.f32 %v88, %v154
  %v160 = vadd.f32 %v89, %v154
  %v161 = vadd.f32 %v90, %v154
  %v162 = vadd.f32 %v91, %v154
  %v163 = vadd.f32 %v92, %v154
  %v164 = vadd.f32 %v93, %v154
  %v165 = vadd.f32 %v94, %v154
  %v166 = vadd.f32 %v95, %v154
  %v167 = vadd.f32 %v96, %v154
  %v168 = vadd.f32 %v97, %v154
  %v169 = vadd.f32 %v98, %v154
  %v170 = vadd.f32 %v99, %v154
  %v171 = vadd.f32 %v100, %v154
  %v172 = vadd.f32 %v101, %v154
  %v173 = vadd.f32 %v102, %v154
  %v174 = vadd.f32 %v103, %v154
  %v175 = vadd.f32 %v104, %v154
  %v176 = vadd.f32 %v105, %v154
  %v177 = vadd.f32 %v106, %v154
  %v178 = vadd.f32 %v107, %v154
  %v179 = vadd.f32 %v108, %v154
  %v180 = vadd.f32 %v109, %v154
  %v181 = vadd.f32 %v110, %v154
  %v182 = vadd.f32 %v111, %v154
  %v183 = vadd.f32 %v112, %v154
  %v184 = vadd.f32 %v113, %v154
  %v185 = vadd.f32 %v114, %v154
  %v186 = vadd.f32 %v115, %v154
  %v187 = vadd.f32 %v116, %v154
  %v188 = vadd.f32 %v117, %v154
  %v189 = vadd.f32 %v118, %v154
  %v190 = vadd.f32 %v119, %v154
  %v191 = vadd.f32 %v120, %v154
  %v192 = vadd.f32 %v121, %v154
  %v193 = vadd.f32 %v122, %v154
  %v194 = vadd.f32 %v123, %v154
  %v195 = vadd.f32 %v124, %v154
  %v196 = vadd.f32 %v125, %v154
  %v197 = vadd.f32 %v126, %v154
  %v198 = vadd.f32 %v127, %v154
  %v199 = vadd.f32 %v128, %v154
  %v200 = vadd.f32 %v129, %v154
  %v201 = vadd.f32 %v130, %v154
  %v202 = vadd.f32 %v131, %v154
  %v203 = vadd.f32 %v132, %v154
  %v204 = vadd.f32 %v133, %v154
  %v205 = vadd.f32 %v134, %v154
  %v206 = vadd.f32 %v135, %v154
  %v207 = vadd.f32 %v136, %v154
  %v208 = vadd.f32 %v137, %v154
  %v209 = vadd.f32 %v138, %v154
  %v210 = vadd.f32 %v139, %v154
  %v211 = vadd.f32 %v140, %v154
  %v212 = vadd.f32 %v141, %v154
  %v213 = vadd.f32 %v142, %v154
  %v214 = vadd.f32 %v143, %v154
  %v215 = vadd.f32 %v144, %v154
  %v216 = vadd.f32 %v145, %v154
  %v217 = vadd.f32 %v146, %v154
  %v218 = vadd.f32 %v147, %v154
  %v219 = vadd.f32 %v148, %v154
  %vm220 = vcmp.gt.f32.partialorder %v156, 0.0
  %vm221 = vcmp.gt.f32.partialorder %v157, 0.0
  %vm222 = vcmp.gt.f32.partialorder %v158, 0.0
  %vm223 = vcmp.gt.f32.partialorder %v159, 0.0
  %vm224 = vcmp.gt.f32.partialorder %v160, 0.0
  %vm225 = vcmp.gt.f32.partialorder %v161, 0.0
  %vm226 = vcmp.gt.f32.partialorder %v162, 0.0
  %vm227 = vcmp.gt.f32.partialorder %v163, 0.0
  %vm228 = vcmp.gt.f32.partialorder %v164, 0.0
  %vm229 = vcmp.gt.f32.partialorder %v165, 0.0
  %vm230 = vcmp.gt.f32.partialorder %v166, 0.0
  %vm231 = vcmp.gt.f32.partialorder %v167, 0.0
  %vm232 = vcmp.gt.f32.partialorder %v168, 0.0
  %vm233 = vcmp.gt.f32.partialorder %v169, 0.0
  %vm234 = vcmp.gt.f32.partialorder %v170, 0.0
  %vm235 = vcmp.gt.f32.partialorder %v171, 0.0
  %vm236 = vcmp.gt.f32.partialorder %v172, 0.0
  %vm237 = vcmp.gt.f32.partialorder %v173, 0.0
  %vm238 = vcmp.gt.f32.partialorder %v174, 0.0
  %vm239 = vcmp.gt.f32.partialorder %v175, 0.0
  %vm240 = vcmp.gt.f32.partialorder %v176, 0.0
  %vm241 = vcmp.gt.f32.partialorder %v177, 0.0
  %vm242 = vcmp.gt.f32.partialorder %v178, 0.0
  %vm243 = vcmp.gt.f32.partialorder %v179, 0.0
  %vm244 = vcmp.gt.f32.partialorder %v180, 0.0
  %vm245 = vcmp.gt.f32.partialorder %v181, 0.0
  %vm246 = vcmp.gt.f32.partialorder %v182, 0.0
  %vm247 = vcmp.gt.f32.partialorder %v183, 0.0
  %vm248 = vcmp.gt.f32.partialorder %v184, 0.0
  %vm249 = vcmp.gt.f32.partialorder %v185, 0.0
  %vm250 = vcmp.gt.f32.partialorder %v186, 0.0
  %vm251 = vcmp.gt.f32.partialorder %v187, 0.0
  %vm252 = vcmp.gt.f32.partialorder %v188, 0.0
  %vm253 = vcmp.gt.f32.partialorder %v189, 0.0
  %vm254 = vcmp.gt.f32.partialorder %v190, 0.0
  %vm255 = vcmp.gt.f32.partialorder %v191, 0.0
  %vm256 = vcmp.gt.f32.partialorder %v192, 0.0
  %vm257 = vcmp.gt.f32.partialorder %v193, 0.0
  %vm258 = vcmp.gt.f32.partialorder %v194, 0.0
  %vm259 = vcmp.gt.f32.partialorder %v195, 0.0
  %vm260 = vcmp.gt.f32.partialorder %v196, 0.0
  %vm261 = vcmp.gt.f32.partialorder %v197, 0.0
  %vm262 = vcmp.gt.f32.partialorder %v198, 0.0
  %vm263 = vcmp.gt.f32.partialorder %v199, 0.0
  %vm264 = vcmp.gt.f32.partialorder %v200, 0.0
  %vm265 = vcmp.gt.f32.partialorder %v201, 0.0
  %vm266 = vcmp.gt.f32.partialorder %v202, 0.0
  %vm267 = vcmp.gt.f32.partialorder %v203, 0.0
  %vm268 = vcmp.gt.f32.partialorder %v204, 0.0
  %vm269 = vcmp.gt.f32.partialorder %v205, 0.0
  %vm270 = vcmp.gt.f32.partialorder %v206, 0.0
  %vm271 = vcmp.gt.f32.partialorder %v207, 0.0
  %vm272 = vcmp.gt.f32.partialorder %v208, 0.0
  %vm273 = vcmp.gt.f32.partialorder %v209, 0.0
  %vm274 = vcmp.gt.f32.partialorder %v210, 0.0
  %vm275 = vcmp.gt.f32.partialorder %v211, 0.0
  %vm276 = vcmp.gt.f32.partialorder %v212, 0.0
  %vm277 = vcmp.gt.f32.partialorder %v213, 0.0
  %vm278 = vcmp.gt.f32.partialorder %v214, 0.0
  %vm279 = vcmp.gt.f32.partialorder %v215, 0.0
  %vm280 = vcmp.gt.f32.partialorder %v216, 0.0
  %vm281 = vcmp.gt.f32.partialorder %v217, 0.0
  %vm282 = vcmp.gt.f32.partialorder %v218, 0.0
  %vm283 = vcmp.gt.f32.partialorder %v219, 0.0
  %v284 = vmul.f32 %v156, 0.2
  %v285 = vmul.f32 %v157, 0.2
  %v286 = vmul.f32 %v158, 0.2
  %v287 = vmul.f32 %v159, 0.2
  %v288 = vmul.f32 %v160, 0.2
  %v289 = vmul.f32 %v161, 0.2
  %v290 = vmul.f32 %v162, 0.2
  %v291 = vmul.f32 %v163, 0.2
  %v292 = vmul.f32 %v164, 0.2
  %v293 = vmul.f32 %v165, 0.2
  %v294 = vmul.f32 %v166, 0.2
  %v295 = vmul.f32 %v167, 0.2
  %v296 = vmul.f32 %v168, 0.2
  %v297 = vmul.f32 %v169, 0.2
  %v298 = vmul.f32 %v170, 0.2
  %v299 = vmul.f32 %v171, 0.2
  %v300 = vmul.f32 %v172, 0.2
  %v301 = vmul.f32 %v173, 0.2
  %v302 = vmul.f32 %v174, 0.2
  %v303 = vmul.f32 %v175, 0.2
  %v304 = vmul.f32 %v176, 0.2
  %v305 = vmul.f32 %v177, 0.2
  %v306 = vmul.f32 %v178, 0.2
  %v307 = vmul.f32 %v179, 0.2
  %v308 = vmul.f32 %v180, 0.2
  %v309 = vmul.f32 %v181, 0.2
  %v310 = vmul.f32 %v182, 0.2
  %v311 = vmul.f32 %v183, 0.2
  %v312 = vmul.f32 %v184, 0.2
  %v313 = vmul.f32 %v185, 0.2
  %v314 = vmul.f32 %v186, 0.2
  %v315 = vmul.f32 %v187, 0.2
  %v316 = vmul.f32 %v188, 0.2
  %v317 = vmul.f32 %v189, 0.2
  %v318 = vmul.f32 %v190, 0.2
  %v319 = vmul.f32 %v191, 0.2
  %v320 = vmul.f32 %v192, 0.2
  %v321 = vmul.f32 %v193, 0.2
  %v322 = vmul.f32 %v194, 0.2
  %v323 = vmul.f32 %v195, 0.2
  %v324 = vmul.f32 %v196, 0.2
  %v325 = vmul.f32 %v197, 0.2
  %v326 = vmul.f32 %v198, 0.2
  %v327 = vmul.f32 %v199, 0.2
  %v328 = vmul.f32 %v200, 0.2
  %v329 = vmul.f32 %v201, 0.2
  %v330 = vmul.f32 %v202, 0.2
  %v331 = vmul.f32 %v203, 0.2
  %v332 = vmul.f32 %v204, 0.2
  %v333 = vmul.f32 %v205, 0.2
  %v334 = vmul.f32 %v206, 0.2
  %v335 = vmul.f32 %v207, 0.2
  %v336 = vmul.f32 %v208, 0.2
  %v337 = vmul.f32 %v209, 0.2
  %v338 = vmul.f32 %v210, 0.2
  %v339 = vmul.f32 %v211, 0.2
  %v340 = vmul.f32 %v212, 0.2
  %v341 = vmul.f32 %v213, 0.2
  %v342 = vmul.f32 %v214, 0.2
  %v343 = vmul.f32 %v215, 0.2
  %v344 = vmul.f32 %v216, 0.2
  %v345 = vmul.f32 %v217, 0.2
  %v346 = vmul.f32 %v218, 0.2
  %v347 = vmul.f32 %v219, 0.2
  %v348 = vsel %vm220, %v156, %v284
  %v349 = vsel %vm221, %v157, %v285
  %v350 = vsel %vm222, %v158, %v286
  %v351 = vsel %vm223, %v159, %v287
  %v352 = vsel %vm224, %v160, %v288
  %v353 = vsel %vm225, %v161, %v289
  %v354 = vsel %vm226, %v162, %v290
  %v355 = vsel %vm227, %v163, %v291
  %v356 = vsel %vm228, %v164, %v292
  %v357 = vsel %vm229, %v165, %v293
  %v358 = vsel %vm230, %v166, %v294
  %v359 = vsel %vm231, %v167, %v295
  %v360 = vsel %vm232, %v168, %v296
  %v361 = vsel %vm233, %v169, %v297
  %v362 = vsel %vm234, %v170, %v298
  %v363 = vsel %vm235, %v171, %v299
  %v364 = vsel %vm236, %v172, %v300
  %v365 = vsel %vm237, %v173, %v301
  %v366 = vsel %vm238, %v174, %v302
  %v367 = vsel %vm239, %v175, %v303
  %v368 = vsel %vm240, %v176, %v304
  %v369 = vsel %vm241, %v177, %v305
  %v370 = vsel %vm242, %v178, %v306
  %v371 = vsel %vm243, %v179, %v307
  %v372 = vsel %vm244, %v180, %v308
  %v373 = vsel %vm245, %v181, %v309
  %v374 = vsel %vm246, %v182, %v310
  %v375 = vsel %vm247, %v183, %v311
  %v376 = vsel %vm248, %v184, %v312
  %v377 = vsel %vm249, %v185, %v313
  %v378 = vsel %vm250, %v186, %v314
  %v379 = vsel %vm251, %v187, %v315
  %v380 = vsel %vm252, %v188, %v316
  %v381 = vsel %vm253, %v189, %v317
  %v382 = vsel %vm254, %v190, %v318
  %v383 = vsel %vm255, %v191, %v319
  %v384 = vsel %vm256, %v192, %v320
  %v385 = vsel %vm257, %v193, %v321
  %v386 = vsel %vm258, %v194, %v322
  %v387 = vsel %vm259, %v195, %v323
  %v388 = vsel %vm260, %v196, %v324
  %v389 = vsel %vm261, %v197, %v325
  %v390 = vsel %vm262, %v198, %v326
  %v391 = vsel %vm263, %v199, %v327
  %v392 = vsel %vm264, %v200, %v328
  %v393 = vsel %vm265, %v201, %v329
  %v394 = vsel %vm266, %v202, %v330
  %v395 = vsel %vm267, %v203, %v331
  %v396 = vsel %vm268, %v204, %v332
  %v397 = vsel %vm269, %v205, %v333
  %v398 = vsel %vm270, %v206, %v334
  %v399 = vsel %vm271, %v207, %v335
  %v400 = vsel %vm272, %v208, %v336
  %v401 = vsel %vm273, %v209, %v337
  %v402 = vsel %vm274, %v210, %v338
  %v403 = vsel %vm275, %v211, %v339
  %v404 = vsel %vm276, %v212, %v340
  %v405 = vsel %vm277, %v213, %v341
  %v406 = vsel %vm278, %v214, %v342
  %v407 = vsel %vm279, %v215, %v343
  %v408 = vsel %vm280, %v216, %v344
  %v409 = vsel %vm281, %v217, %v345
  %v410 = vsel %vm282, %v218, %v346
  %v411 = vsel %vm283, %v219, %v347
  %v412 = vpack.c.bf16 %v349, %v348
  %v413 = vpack.c.bf16 %v351, %v350
  %v414 = vpack.c.bf16 %v353, %v352
  %v415 = vpack.c.bf16 %v355, %v354
  %v416 = vpack.c.bf16 %v357, %v356
  %v417 = vpack.c.bf16 %v359, %v358
  %v418 = vpack.c.bf16 %v361, %v360
  %v419 = vpack.c.bf16 %v363, %v362
  %v420 = vpack.c.bf16 %v365, %v364
  %v421 = vpack.c.bf16 %v367, %v366
  %v422 = vpack.c.bf16 %v369, %v368
  %v423 = vpack.c.bf16 %v371, %v370
  %v424 = vpack.c.bf16 %v373, %v372
  %v425 = vpack.c.bf16 %v375, %v374
  %v426 = vpack.c.bf16 %v377, %v376
  %v427 = vpack.c.bf16 %v379, %v378
  %v428 = vpack.c.bf16 %v381, %v380
  %v429 = vpack.c.bf16 %v383, %v382
  %v430 = vpack.c.bf16 %v385, %v384
  %v431 = vpack.c.bf16 %v387, %v386
  %v432 = vpack.c.bf16 %v389, %v388
  %v433 = vpack.c.bf16 %v391, %v390
  %v434 = vpack.c.bf16 %v393, %v392
  %v435 = vpack.c.bf16 %v395, %v394
  %v436 = vpack.c.bf16 %v397, %v396
  %v437 = vpack.c.bf16 %v399, %v398
  %v438 = vpack.c.bf16 %v401, %v400
  %v439 = vpack.c.bf16 %v403, %v402
  %v440 = vpack.c.bf16 %v405, %v404
  %v441 = vpack.c.bf16 %v407, %v406
  %v442 = vpack.c.bf16 %v409, %v408
  %v443 = vpack.c.bf16 %v411, %v410
  %v476 = vunpack.c.l.b16 %v412
  %v477 = vunpack.c.h.b16 %v412
  %v478 = vunpack.c.l.b16 %v413
  %v479 = vunpack.c.h.b16 %v413
  %v480 = vunpack.c.l.b16 %v414
  %v481 = vunpack.c.h.b16 %v414
  %v482 = vunpack.c.l.b16 %v415
  %v483 = vunpack.c.h.b16 %v415
  %v484 = vunpack.c.l.b16 %v416
  %v485 = vunpack.c.h.b16 %v416
  %v486 = vunpack.c.l.b16 %v417
  %v487 = vunpack.c.h.b16 %v417
  %v488 = vunpack.c.l.b16 %v418
  %v489 = vunpack.c.h.b16 %v418
  %v490 = vunpack.c.l.b16 %v419
  %v491 = vunpack.c.h.b16 %v419
  %v492 = vunpack.c.l.b16 %v420
  %v493 = vunpack.c.h.b16 %v420
  %v494 = vunpack.c.l.b16 %v421
  %v495 = vunpack.c.h.b16 %v421
  %v496 = vunpack.c.l.b16 %v422
  %v497 = vunpack.c.h.b16 %v422
  %v498 = vunpack.c.l.b16 %v423
  %v499 = vunpack.c.h.b16 %v423
  %v500 = vunpack.c.l.b16 %v424
  %v501 = vunpack.c.h.b16 %v424
  %v502 = vunpack.c.l.b16 %v425
  %v503 = vunpack.c.h.b16 %v425
  %v504 = vunpack.c.l.b16 %v426
  %v505 = vunpack.c.h.b16 %v426
  %v506 = vunpack.c.l.b16 %v427
  %v507 = vunpack.c.h.b16 %v427
  %v508 = vunpack.c.l.b16 %v428
  %v509 = vunpack.c.h.b16 %v428
  %v510 = vunpack.c.l.b16 %v429
  %v511 = vunpack.c.h.b16 %v429
  %v512 = vunpack.c.l.b16 %v430
  %v513 = vunpack.c.h.b16 %v430
  %v514 = vunpack.c.l.b16 %v431
  %v515 = vunpack.c.h.b16 %v431
  %v516 = vunpack.c.l.b16 %v432
  %v517 = vunpack.c.h.b16 %v432
  %v518 = vunpack.c.l.b16 %v433
  %v519 = vunpack.c.h.b16 %v433
  %v520 = vunpack.c.l.b16 %v434
  %v521 = vunpack.c.h.b16 %v434
  %v522 = vunpack.c.l.b16 %v435
  %v523 = vunpack.c.h.b16 %v435
  %v524 = vunpack.c.l.b16 %v436
  %v525 = vunpack.c.h.b16 %v436
  %v526 = vunpack.c.l.b16 %v437
  %v527 = vunpack.c.h.b16 %v437
  %v528 = vunpack.c.l.b16 %v438
  %v529 = vunpack.c.h.b16 %v438
  %v530 = vunpack.c.l.b16 %v439
  %v531 = vunpack.c.h.b16 %v439
  %v532 = vunpack.c.l.b16 %v440
  %v533 = vunpack.c.h.b16 %v440
  %v534 = vunpack.c.l.b16 %v441
  %v535 = vunpack.c.h.b16 %v441
  %v536 = vunpack.c.l.b16 %v442
  %v537 = vunpack.c.h.b16 %v442
  %v538 = vunpack.c.l.b16 %v443
  %v539 = vunpack.c.h.b16 %v443
  %v540 = vpack.c.b16 %v476, %v476
  %v541 = vpack.c.b16 %v477, %v477
  %v542 = vpack.c.b16 %v478, %v478
  %v543 = vpack.c.b16 %v479, %v479
  %v544 = vpack.c.b16 %v480, %v480
  %v545 = vpack.c.b16 %v481, %v481
  %v546 = vpack.c.b16 %v482, %v482
  %v547 = vpack.c.b16 %v483, %v483
  %v548 = vpack.c.b16 %v484, %v484
  %v549 = vpack.c.b16 %v485, %v485
  %v550 = vpack.c.b16 %v486, %v486
  %v551 = vpack.c.b16 %v487, %v487
  %v552 = vpack.c.b16 %v488, %v488
  %v553 = vpack.c.b16 %v489, %v489
  %v554 = vpack.c.b16 %v490, %v490
  %v555 = vpack.c.b16 %v491, %v491
  %v556 = vpack.c.b16 %v492, %v492
  %v557 = vpack.c.b16 %v493, %v493
  %v558 = vpack.c.b16 %v494, %v494
  %v559 = vpack.c.b16 %v495, %v495
  %v560 = vpack.c.b16 %v496, %v496
  %v561 = vpack.c.b16 %v497, %v497
  %v562 = vpack.c.b16 %v498, %v498
  %v563 = vpack.c.b16 %v499, %v499
  %v564 = vpack.c.b16 %v500, %v500
  %v565 = vpack.c.b16 %v501, %v501
  %v566 = vpack.c.b16 %v502, %v502
  %v567 = vpack.c.b16 %v503, %v503
  %v568 = vpack.c.b16 %v504, %v504
  %v569 = vpack.c.b16 %v505, %v505
  %v570 = vpack.c.b16 %v506, %v506
  %v571 = vpack.c.b16 %v507, %v507
  %v572 = vpack.c.b16 %v508, %v508
  %v573 = vpack.c.b16 %v509, %v509
  %v574 = vpack.c.b16 %v510, %v510
  %v575 = vpack.c.b16 %v511, %v511
  %v576 = vpack.c.b16 %v512, %v512
  %v577 = vpack.c.b16 %v513, %v513
  %v578 = vpack.c.b16 %v514, %v514
  %v579 = vpack.c.b16 %v515, %v515
  %v580 = vpack.c.b16 %v516, %v516
  %v581 = vpack.c.b16 %v517, %v517
  %v582 = vpack.c.b16 %v518, %v518
  %v583 = vpack.c.b16 %v519, %v519
  %v584 = vpack.c.b16 %v520, %v520
  %v585 = vpack.c.b16 %v521, %v521
  %v586 = vpack.c.b16 %v522, %v522
  %v587 = vpack.c.b16 %v523, %v523
  %v588 = vpack.c.b16 %v524, %v524
  %v589 = vpack.c.b16 %v525, %v525
  %v590 = vpack.c.b16 %v526, %v526
  %v591 = vpack.c.b16 %v527, %v527
  %v592 = vpack.c.b16 %v528, %v528
  %v593 = vpack.c.b16 %v529, %v529
  %v594 = vpack.c.b16 %v530, %v530
  %v595 = vpack.c.b16 %v531, %v531
  %v596 = vpack.c.b16 %v532, %v532
  %v597 = vpack.c.b16 %v533, %v533
  %v598 = vpack.c.b16 %v534, %v534
  %v599 = vpack.c.b16 %v535, %v535
  %v600 = vpack.c.b16 %v536, %v536
  %v601 = vpack.c.b16 %v537, %v537
  %v602 = vpack.c.b16 %v538, %v538
  %v603 = vpack.c.b16 %v539, %v539
  %vm668 = vcmask 60416
  %669 = vst.msk [vmem:[%s3] sm:$0xf] %vm668, %v540
  %670 = vst.msk [vmem:[%s3 + $0x4] sm:$0xf] %vm668, %v541
  %671 = vst.msk [vmem:[%s3 + $0x8] sm:$0xf] %vm668, %v542
  %672 = vst.msk [vmem:[%s3 + $0xc] sm:$0xf] %vm668, %v543
  %673 = vst.msk [vmem:[%s3 + $0x10] sm:$0xf] %vm668, %v544
  %674 = vst.msk [vmem:[%s3 + $0x14] sm:$0xf] %vm668, %v545
  %675 = vst.msk [vmem:[%s3 + $0x18] sm:$0xf] %vm668, %v546
  %676 = vst.msk [vmem:[%s3 + $0x1c] sm:$0xf] %vm668, %v547
  %677 = vst.msk [vmem:[%s3 + $0x20] sm:$0xf] %vm668, %v548
  %678 = vst.msk [vmem:[%s3 + $0x24] sm:$0xf] %vm668, %v549
  %679 = vst.msk [vmem:[%s3 + $0x28] sm:$0xf] %vm668, %v550
  %680 = vst.msk [vmem:[%s3 + $0x2c] sm:$0xf] %vm668, %v551
  %681 = vst.msk [vmem:[%s3 + $0x30] sm:$0xf] %vm668, %v552
  %682 = vst.msk [vmem:[%s3 + $0x34] sm:$0xf] %vm668, %v553
  %683 = vst.msk [vmem:[%s3 + $0x38] sm:$0xf] %vm668, %v554
  %684 = vst.msk [vmem:[%s3 + $0x3c] sm:$0xf] %vm668, %v555
  %685 = vst.msk [vmem:[%s3 + $0x40] sm:$0xf] %vm668, %v556
  %686 = vst.msk [vmem:[%s3 + $0x44] sm:$0xf] %vm668, %v557
  %687 = vst.msk [vmem:[%s3 + $0x48] sm:$0xf] %vm668, %v558
  %688 = vst.msk [vmem:[%s3 + $0x4c] sm:$0xf] %vm668, %v559
  %689 = vst.msk [vmem:[%s3 + $0x50] sm:$0xf] %vm668, %v560
  %690 = vst.msk [vmem:[%s3 + $0x54] sm:$0xf] %vm668, %v561
  %691 = vst.msk [vmem:[%s3 + $0x58] sm:$0xf] %vm668, %v562
  %692 = vst.msk [vmem:[%s3 + $0x5c] sm:$0xf] %vm668, %v563
  %693 = vst.msk [vmem:[%s3 + $0x60] sm:$0xf] %vm668, %v564
  %694 = vst.msk [vmem:[%s3 + $0x64] sm:$0xf] %vm668, %v565
  %695 = vst.msk [vmem:[%s3 + $0x68] sm:$0xf] %vm668, %v566
  %696 = vst.msk [vmem:[%s3 + $0x6c] sm:$0xf] %vm668, %v567
  %697 = vst.msk [vmem:[%s3 + $0x70] sm:$0xf] %vm668, %v568
  %698 = vst.msk [vmem:[%s3 + $0x74] sm:$0xf] %vm668, %v569
  %699 = vst.msk [vmem:[%s3 + $0x78] sm:$0xf] %vm668, %v570
  %700 = vst.msk [vmem:[%s3 + $0x7c] sm:$0xf] %vm668, %v571
  %701 = vst.msk [vmem:[%s3 + $0x80] sm:$0xf] %vm668, %v572
  %702 = vst.msk [vmem:[%s3 + $0x84] sm:$0xf] %vm668, %v573
  %703 = vst.msk [vmem:[%s3 + $0x88] sm:$0xf] %vm668, %v574
  %704 = vst.msk [vmem:[%s3 + $0x8c] sm:$0xf] %vm668, %v575
  %705 = vst.msk [vmem:[%s3 + $0x90] sm:$0xf] %vm668, %v576
  %706 = vst.msk [vmem:[%s3 + $0x94] sm:$0xf] %vm668, %v577
  %707 = vst.msk [vmem:[%s3 + $0x98] sm:$0xf] %vm668, %v578
  %708 = vst.msk [vmem:[%s3 + $0x9c] sm:$0xf] %vm668, %v579
  %709 = vst.msk [vmem:[%s3 + $0xa0] sm:$0xf] %vm668, %v580
  %710 = vst.msk [vmem:[%s3 + $0xa4] sm:$0xf] %vm668, %v581
  %711 = vst.msk [vmem:[%s3 + $0xa8] sm:$0xf] %vm668, %v582
  %712 = vst.msk [vmem:[%s3 + $0xac] sm:$0xf] %vm668, %v583
  %713 = vst.msk [vmem:[%s3 + $0xb0] sm:$0xf] %vm668, %v584
  %714 = vst.msk [vmem:[%s3 + $0xb4] sm:$0xf] %vm668, %v585
  %715 = vst.msk [vmem:[%s3 + $0xb8] sm:$0xf] %vm668, %v586
  %716 = vst.msk [vmem:[%s3 + $0xbc] sm:$0xf] %vm668, %v587
  %717 = vst.msk [vmem:[%s3 + $0xc0] sm:$0xf] %vm668, %v588
  %718 = vst.msk [vmem:[%s3 + $0xc4] sm:$0xf] %vm668, %v589
  %719 = vst.msk [vmem:[%s3 + $0xc8] sm:$0xf] %vm668, %v590
  %720 = vst.msk [vmem:[%s3 + $0xcc] sm:$0xf] %vm668, %v591
  %721 = vst.msk [vmem:[%s3 + $0xd0] sm:$0xf] %vm668, %v592
  %722 = vst.msk [vmem:[%s3 + $0xd4] sm:$0xf] %vm668, %v593
  %723 = vst.msk [vmem:[%s3 + $0xd8] sm:$0xf] %vm668, %v594
  %724 = vst.msk [vmem:[%s3 + $0xdc] sm:$0xf] %vm668, %v595
  %725 = vst.msk [vmem:[%s3 + $0xe0] sm:$0xf] %vm668, %v596
  %726 = vst.msk [vmem:[%s3 + $0xe4] sm:$0xf] %vm668, %v597
  %727 = vst.msk [vmem:[%s3 + $0xe8] sm:$0xf] %vm668, %v598
  %728 = vst.msk [vmem:[%s3 + $0xec] sm:$0xf] %vm668, %v599
  %729 = vst.msk [vmem:[%s3 + $0xf0] sm:$0xf] %vm668, %v600
  %730 = vst.msk [vmem:[%s3 + $0xf4] sm:$0xf] %vm668, %v601
  %731 = vst.msk [vmem:[%s3 + $0xf8] sm:$0xf] %vm668, %v602
  %732 = vst.msk [vmem:[%s3 + $0xfc] sm:$0xf] %vm668, %v603
  // Predicated region
  $region14: #{d_forward.10} parent=0 // pred_check
    _
  $region15: #{d_forward.10} parent=0 // pred_check_branch
    %734 = sbr.rel (0) target = $region17
  $region16: #{d_forward.10} parent=0 // pred_region
    _
  $region17: #{d_forward.10} parent=0 // pred_fallthru
    _
  // Predicated region
  $region18: #{d_forward.10} parent=0 // pred_check
    _
  $region19: #{d_forward.10} parent=0 // pred_check_branch
    %736 = sbr.rel (0) target = $region21
  $region20: #{d_forward.10} parent=0 // pred_region
    _
  $region21: #{d_forward.10} parent=0 // pred_fallthru
    _

// kernel: d_forward.11
$region0: #{d_forward.11}
  #allocation0 [shape = 'u32[]', space=smem, size = 0x4, offset = 0x4, fixed_abs, tag = 'smem constant byte address 0x4 - core index']
  #allocation1 [shape = 'u32[144,128]{1,0:T(1,128)}', space=vmem, size = 0x12000, scoped, tag = 'internal scratch']
  %s0 = inlined_call_operand.vmem [shape: bf16[128,128], index: 0, kind: input, shape index: {}]
  %s1 = inlined_call_operand.vmem [shape: bf16[128,128], index: 1, kind: input, shape index: {}]
  %s2 = inlined_call_operand.vmem [shape: f32[128,128], index: 2, kind: output, shape index: {0}]
  %s3 = inlined_call_operand.vmem [shape: f32[16,128], index: 3, kind: output, shape index: {1}]
  %s4 = inlined_call_operand.vmem [shape: f32[16,128], index: 4, kind: output, shape index: {2}]
  %5 = xla_tuple %s2, %s3, %s4
  %s6 = sld [smem:[#allocation0]]
  $region57: #{d_forward.11} parent=0
    _
  %s8 = ssub.s32 1, %s6
  %s9 = scalar_select 0, %s8, %s6
  loop: start=0, step=1, limit=4
  $region2: #{d_forward.11} parent=0 // loop_pre_header
    _
  $region3: #{d_forward.11} parent=0 // loop_header
    %s11 = sphi 0, %s15
    %p12 = scmp.ge.s32.totalorder %s11, 4
    %s21 = sphi 0, %s23
    %s24 = sphi 0, %s21
    %s25 = sphi 0, %s24
    %s41 = sphi 0, %s25
    %s45 = sphi 0, %s45
    %s47 = sphi 0, %s45
    %s48 = sphi 0, %s47
    %s62 = sphi 0, %s48
    %s68 = sphi 0, %s70
    %s71 = sphi 0, %s68
    %s72 = sphi 0, %s71
    %s88 = sphi 0, %s72
    %s94 = sphi 0, %s96
    %s97 = sphi 0, %s94
    %s98 = sphi 0, %s97
    %s114 = sphi 0, %s98
    %s120 = sphi 0, %s122
    %s123 = sphi 0, %s120
    %s124 = sphi 0, %s123
    %s140 = sphi 0, %s124
  $region4: #{d_forward.11} parent=0 // loop_header_branch
    %14 = sbr.rel (%p12) target = $region8
  $region5: #{d_forward.11} parent=0 // loop_body
    %s16 = ssub.s32 %s11, 1
    %s17 = ssub.s32 %s11, 2
    %s18 = sadd.s32 %s11, 1
    %s19 = ssub.s32 %s11, %s18
    %p20 = scmp.eq.s32.totalorder %s19, 0
    %s22 = sadd.s32 %s21, 1
    %s23 = scalar_select %p20, %s21, %s22
    %p26 = pneg %p20
    %p27 = scmp.eq.s32.totalorder %s11, 1
    %p28 = por %p26, %p27
    %p29 = scmp.ne.s32.totalorder %s21, %s24
    %p30 = scmp.eq.s32.totalorder %s11, 0
    %p31 = por %p29, %p30
    %p32 = scmp.ne.s32.totalorder %s21, %s24
    %p33 = scmp.eq.s32.totalorder %s16, 1
    %p34 = por %p32, %p33
    %p35 = scmp.ne.s32.totalorder %s24, %s25
    %p36 = scmp.eq.s32.totalorder %s16, 0
    %p37 = por %p35, %p36
    %p38 = scmp.ne.s32.totalorder %s24, %s25
    %p39 = scmp.eq.s32.totalorder %s17, 1
    %p40 = por %p38, %p39
    %p42 = scmp.ne.s32.totalorder %s25, %s41
    %p43 = scmp.eq.s32.totalorder %s17, 0
    %p44 = por %p42, %p43
    %s46 = sadd.s32 %s45, 1
    %p49 = scmp.eq.s32.totalorder %s11, 1
    %p50 = scmp.ne.s32.totalorder %s45, %s47
    %p51 = scmp.eq.s32.totalorder %s11, 0
    %p52 = por %p50, %p51
    %p53 = scmp.ne.s32.totalorder %s45, %s47
    %p54 = scmp.eq.s32.totalorder %s16, 1
    %p55 = por %p53, %p54
    %p56 = scmp.ne.s32.totalorder %s47, %s48
    %p57 = scmp.eq.s32.totalorder %s16, 0
    %p58 = por %p56, %p57
    %p59 = scmp.ne.s32.totalorder %s47, %s48
    %p60 = scmp.eq.s32.totalorder %s17, 1
    %p61 = por %p59, %p60
    %p63 = scmp.ne.s32.totalorder %s48, %s62
    %p64 = scmp.eq.s32.totalorder %s17, 0
    %p65 = por %p63, %p64
    %s66 = ssub.s32 %s11, %s18
    %p67 = scmp.eq.s32.totalorder %s66, 0
    %s69 = sadd.s32 %s68, 1
    %s70 = scalar_select %p67, %s68, %s69
    %p73 = pneg %p67
    %p74 = scmp.eq.s32.totalorder %s11, 1
    %p75 = por %p73, %p74
    %p76 = scmp.ne.s32.totalorder %s68, %s71
    %p77 = scmp.eq.s32.totalorder %s11, 0
    %p78 = por %p76, %p77
    %p79 = scmp.ne.s32.totalorder %s68, %s71
    %p80 = scmp.eq.s32.totalorder %s16, 1
    %p81 = por %p79, %p80
    %p82 = scmp.ne.s32.totalorder %s71, %s72
    %p83 = scmp.eq.s32.totalorder %s16, 0
    %p84 = por %p82, %p83
    %p85 = scmp.ne.s32.totalorder %s71, %s72
    %p86 = scmp.eq.s32.totalorder %s17, 1
    %p87 = por %p85, %p86
    %p89 = scmp.ne.s32.totalorder %s72, %s88
    %p90 = scmp.eq.s32.totalorder %s17, 0
    %p91 = por %p89, %p90
    %s92 = ssub.s32 %s11, %s18
    %p93 = scmp.eq.s32.totalorder %s92, 0
    %s95 = sadd.s32 %s94, 1
    %s96 = scalar_select %p93, %s94, %s95
    %p99 = pneg %p93
    %p100 = scmp.eq.s32.totalorder %s11, 1
    %p101 = por %p99, %p100
    %p102 = scmp.ne.s32.totalorder %s94, %s97
    %p103 = scmp.eq.s32.totalorder %s11, 0
    %p104 = por %p102, %p103
    %p105 = scmp.ne.s32.totalorder %s94, %s97
    %p106 = scmp.eq.s32.totalorder %s16, 1
    %p107 = por %p105, %p106
    %p108 = scmp.ne.s32.totalorder %s97, %s98
    %p109 = scmp.eq.s32.totalorder %s16, 0
    %p110 = por %p108, %p109
    %p111 = scmp.ne.s32.totalorder %s97, %s98
    %p112 = scmp.eq.s32.totalorder %s17, 1
    %p113 = por %p111, %p112
    %p115 = scmp.ne.s32.totalorder %s98, %s114
    %p116 = scmp.eq.s32.totalorder %s17, 0
    %p117 = por %p115, %p116
    %s118 = ssub.s32 %s11, %s18
    %p119 = scmp.eq.s32.totalorder %s118, 0
    %s121 = sadd.s32 %s120, 1
    %s122 = scalar_select %p119, %s120, %s121
    %p125 = pneg %p119
    %p126 = scmp.eq.s32.totalorder %s11, 1
    %p127 = por %p125, %p126
    %p128 = scmp.ne.s32.totalorder %s120, %s123
    %p129 = scmp.eq.s32.totalorder %s11, 0
    %p130 = por %p128, %p129
    %p131 = scmp.ne.s32.totalorder %s120, %s123
    %p132 = scmp.eq.s32.totalorder %s16, 1
    %p133 = por %p131, %p132
    %p134 = scmp.ne.s32.totalorder %s123, %s124
    %p135 = scmp.eq.s32.totalorder %s16, 0
    %p136 = por %p134, %p135
    %p137 = scmp.ne.s32.totalorder %s123, %s124
    %p138 = scmp.eq.s32.totalorder %s17, 1
    %p139 = por %p137, %p138
    %p141 = scmp.ne.s32.totalorder %s124, %s140
    %p142 = scmp.eq.s32.totalorder %s17, 0
    %p143 = por %p141, %p142
    %p144 = scmp.le.s32.totalorder 1, %s11
    %p145 = scmp.lt.s32.totalorder %s11, 3
    %p146 = pnand %p144, %p145
    %p147 = pneg %p146
    // Predicated region
    $region9: #{d_forward.11} parent=5 // pred_check
      _
    $region10: #{d_forward.11} parent=5 // pred_check_branch
      %149 = sbr.rel (%p146) target = $region12
    $region11: #{d_forward.11} parent=5 // pred_region
      %s150 = ssub.s32 %s11, 1
      // Predicated region
      $region13: #{d_forward.11} parent=11 // pred_check
        %p151 = pneg %p58
      $region14: #{d_forward.11} parent=11 // pred_check_branch
        %153 = sbr.rel (%p151) target = $region16
      $region15: #{d_forward.11} parent=11 // pred_region
        _
      $region16: #{d_forward.11} parent=11 // pred_fallthru
        _
    $region12: #{d_forward.11} parent=5 // pred_fallthru
      _
    %p154 = scmp.lt.s32.totalorder %s11, 2
    // Predicated region
    $region17: #{d_forward.11} parent=5 // pred_check
      %p155 = pneg %p154
    $region18: #{d_forward.11} parent=5 // pred_check_branch
      %157 = sbr.rel (%p155) target = $region20
    $region19: #{d_forward.11} parent=5 // pred_region
      // Predicated region
      $region21: #{d_forward.11} parent=19 // pred_check
        %p158 = pneg %p31
      $region22: #{d_forward.11} parent=19 // pred_check_branch
        %160 = sbr.rel (%p158) target = $region24
      $region23: #{d_forward.11} parent=19 // pred_region
        %s161 = smul.u32 8, %s11
        %p162 = scmp.lt.s32.totalorder %s161, 15
        %s163 = scalar_select %p162, %s161, 15
        %s164 = smul.addr %s163, 4
        %s165 = scalar_lea.vmem %s0, %s164
        %s166 = smul.u32 8, %s11
      $region24: #{d_forward.11} parent=19 // pred_fallthru
        _
    $region20: #{d_forward.11} parent=5 // pred_fallthru
      _
    %p167 = scmp.le.s32.totalorder 1, %s11
    %p168 = scmp.lt.s32.totalorder %s11, 3
    %p169 = pnand %p167, %p168
    %p170 = pneg %p169
    // Predicated region
    $region25: #{d_forward.11} parent=5 // pred_check
      _
    $region26: #{d_forward.11} parent=5 // pred_check_branch
      %172 = sbr.rel (%p169) target = $region28
    $region27: #{d_forward.11} parent=5 // pred_region
      %s173 = ssub.s32 %s11, 1
      %s174 = smul.u32 8, %s16
      %p175 = scmp.lt.s32.totalorder %s174, 15
      %s176 = scalar_select %p175, %s174, 15
      %s177 = smul.addr %s176, 4
      %s178 = scalar_lea.vmem %s0, %s177
      %p179 = pneg %p37
      %p180 = pneg %p34
      %p181 = pneg %p58
      %p182 = pneg %p55
      %p183 = pneg %p84
      %p184 = pneg %p81
      %s185 = smul.u32 8, %s16
      %p186 = scmp.lt.s32.totalorder %s185, 15
      %s187 = scalar_select %p186, %s185, 15
      %s188 = smul.addr %s187, 8
      %s189 = scalar_lea.vmem %s2, %s188
      %p190 = pneg %p110
      %p191 = pneg %p107
      %p192 = scmp.lt.s32.totalorder %s16, 1
      %s193 = scalar_select %p192, %s16, 1
      %s194 = smul.addr %s193, 8
      %s195 = scalar_lea.vmem %s3, %s194
      %p196 = pneg %p136
      %p197 = pneg %p133
      %p198 = scmp.lt.s32.totalorder %s16, 1
      %s199 = scalar_select %p198, %s16, 1
      %s200 = smul.addr %s199, 8
      %s201 = scalar_lea.vmem %s4, %s200
      %s202 = smul.u32 8, %s16
      %p203 = scmp.lt.s32.totalorder %s202, 15
      %s204 = scalar_select %p203, %s202, 15
      %s205 = smul.addr %s204, 4
      %s206 = scalar_lea.vmem %s0, %s205
      %s207 = smul.u32 8, %s16
      %s208 = smul.u32 8, %s16
      %p209 = scmp.lt.s32.totalorder %s208, 15
      %s210 = scalar_select %p209, %s208, 15
      %s211 = smul.addr %s210, 8
      %s212 = scalar_lea.vmem %s2, %s211
      %s213 = smul.u32 8, %s16
      %p214 = scmp.lt.s32.totalorder %s16, 1
      %s215 = scalar_select %p214, %s16, 1
      %s216 = smul.addr %s215, 8
      %s217 = scalar_lea.vmem %s3, %s216
      %p218 = scmp.lt.s32.totalorder %s16, 1
      %s219 = scalar_select %p218, %s16, 1
      %s220 = smul.addr %s219, 8
      %s221 = scalar_lea.vmem %s4, %s220
      %v223 = vld [vmem:[%s206] sm:$0xf]
      %v224 = vld [vmem:[%s206 + $0x4] sm:$0xf]
      %v225 = vld [vmem:[%s206 + $0x8] sm:$0xf]
      %v226 = vld [vmem:[%s206 + $0xc] sm:$0xf]
      %v227 = vld [vmem:[%s206 + $0x10] sm:$0xf]
      %v228 = vld [vmem:[%s206 + $0x14] sm:$0xf]
      %v229 = vld [vmem:[%s206 + $0x18] sm:$0xf]
      %v230 = vld [vmem:[%s206 + $0x1c] sm:$0xf]
      %v231 = vld [vmem:[%s1] sm:$0xf]
      %v232 = vld [vmem:[%s1 + $0x4] sm:$0xf]
      %v233 = vld [vmem:[%s1 + $0x8] sm:$0xf]
      %v234 = vld [vmem:[%s1 + $0xc] sm:$0xf]
      %v235 = vld [vmem:[%s1 + $0x10] sm:$0xf]
      %v236 = vld [vmem:[%s1 + $0x14] sm:$0xf]
      %v237 = vld [vmem:[%s1 + $0x18] sm:$0xf]
      %v238 = vld [vmem:[%s1 + $0x1c] sm:$0xf]
      %v239 = vld [vmem:[%s1 + $0x20] sm:$0xf]
      %v240 = vld [vmem:[%s1 + $0x24] sm:$0xf]
      %v241 = vld [vmem:[%s1 + $0x28] sm:$0xf]
      %v242 = vld [vmem:[%s1 + $0x2c] sm:$0xf]
      %v243 = vld [vmem:[%s1 + $0x30] sm:$0xf]
      %v244 = vld [vmem:[%s1 + $0x34] sm:$0xf]
      %v245 = vld [vmem:[%s1 + $0x38] sm:$0xf]
      %v246 = vld [vmem:[%s1 + $0x3c] sm:$0xf]
      %v255 = vunpack.c.l.b16 %v223
      %v256 = vunpack.c.l.b16 %v224
      %v257 = vunpack.c.l.b16 %v225
      %v258 = vunpack.c.l.b16 %v226
      %v259 = vunpack.c.l.b16 %v227
      %v260 = vunpack.c.l.b16 %v228
      %v261 = vunpack.c.l.b16 %v229
      %v262 = vunpack.c.l.b16 %v230
      %v263 = vpack.c.b16 %v256, %v255
      %v264 = vpack.c.b16 %v258, %v257
      %v265 = vpack.c.b16 %v260, %v259
      %v266 = vpack.c.b16 %v262, %v261
      %v287 = vunpack.c.l.b16 %v231
      %v288 = vunpack.c.l.b16 %v232
      %v289 = vunpack.c.l.b16 %v233
      %v290 = vunpack.c.l.b16 %v234
      %v291 = vunpack.c.l.b16 %v235
      %v292 = vunpack.c.l.b16 %v236
      %v293 = vunpack.c.l.b16 %v237
      %v294 = vunpack.c.l.b16 %v238
      %v295 = vunpack.c.l.b16 %v239
      %v296 = vunpack.c.l.b16 %v240
      %v297 = vunpack.c.l.b16 %v241
      %v298 = vunpack.c.l.b16 %v242
      %v299 = vunpack.c.l.b16 %v243
      %v300 = vunpack.c.l.b16 %v244
      %v301 = vunpack.c.l.b16 %v245
      %v302 = vunpack.c.l.b16 %v246
      %v303 = vpack.c.b16 %v288, %v287
      %v304 = vpack.c.b16 %v290, %v289
      %v305 = vpack.c.b16 %v292, %v291
      %v306 = vpack.c.b16 %v294, %v293
      %v307 = vpack.c.b16 %v296, %v295
      %v308 = vpack.c.b16 %v298, %v297
      %v309 = vpack.c.b16 %v300, %v299
      %v310 = vpack.c.b16 %v302, %v301
      %319 = vmatprep.subr.bf16.mxu0 0
      %320 = vmatpush1.bf16.msra.mxu0 %v303
      %321 = vmatprep.subr.bf16.mxu0 0
      %322 = vmatpush1.bf16.msra.mxu0 %v304
      %323 = vmatprep.subr.bf16.mxu0 0
      %324 = vmatpush1.bf16.msra.mxu0 %v305
      %325 = vmatprep.subr.bf16.mxu0 0
      %326 = vmatpush1.bf16.msra.mxu0 %v306
      %327 = vmatprep.subr.bf16.mxu0 0
      %328 = vmatpush1.bf16.msra.mxu0 %v307
      %329 = vmatprep.subr.bf16.mxu0 0
      %330 = vmatpush1.bf16.msra.mxu0 %v308
      %331 = vmatprep.subr.bf16.mxu0 0
      %332 = vmatpush1.bf16.msra.mxu0 %v309
      %333 = vmatprep.subr.bf16.mxu0 0
      %334 = vmatpush1.bf16.msra.mxu0 %v310
      %335 = vmatprep.subr.bf16.mxu0 0
      %336 = vmatpush1.bf16.msra.mxu0 0
      %337 = vmatprep.subr.bf16.mxu0 0
      %338 = vmatpush1.bf16.msra.mxu0 0
      %339 = vmatprep.subr.bf16.mxu0 0
      %340 = vmatpush1.bf16.msra.mxu0 0
      %341 = vmatprep.subr.bf16.mxu0 0
      %342 = vmatpush1.bf16.msra.mxu0 0
      %343 = vmatprep.subr.bf16.mxu0 0
      %344 = vmatpush1.bf16.msra.mxu0 0
      %345 = vmatprep.subr.bf16.mxu0 0
      %346 = vmatpush1.bf16.msra.mxu0 0
      %347 = vmatprep.subr.bf16.mxu0 0
      %348 = vmatpush1.bf16.msra.mxu0 0
      %349 = vmatprep.subr.bf16.mxu0 0
      %350 = vmatpush1.bf16.msra.mxu0 0
      %351 = vmatprep.mubr.bf16.mxu0 0
      %352 = vmatmul.mubr.bf16.gmra.mrb[0].mxu0 %v263
      %v353 = vpop.f32.mrb[0].mxu0
      %v354 = vadd.f32 0.0, %v353
      %v355 = vpop.f32.mrb[0].mxu0
      %v356 = vpop.f32.mrb[0].mxu0
      %v357 = vadd.f32 0.0, %v356
      %v358 = vpop.f32.mrb[0].mxu0
      %359 = vmatprep.mubr.bf16.mxu0 0
      %360 = vmatmul.mubr.bf16.gmra.mrb[0].mxu0 %v264
      %v361 = vpop.f32.mrb[0].mxu0
      %v362 = vadd.f32 0.0, %v361
      %v363 = vpop.f32.mrb[0].mxu0
      %v364 = vpop.f32.mrb[0].mxu0
      %v365 = vadd.f32 0.0, %v364
      %v366 = vpop.f32.mrb[0].mxu0
      %367 = vmatprep.mubr.bf16.mxu0 0
      %368 = vmatmul.mubr.bf16.gmra.mrb[0].mxu0 %v265
      %v369 = vpop.f32.mrb[0].mxu0
      %v370 = vadd.f32 0.0, %v369
      %v371 = vpop.f32.mrb[0].mxu0
      %v372 = vpop.f32.mrb[0].mxu0
      %v373 = vadd.f32 0.0, %v372
      %v374 = vpop.f32.mrb[0].mxu0
      %375 = vmatprep.mubr.bf16.mxu0 0
      %376 = vmatmul.mubr.bf16.gmra.mrb[0].mxu0 %v266
      %v377 = vpop.f32.mrb[0].mxu0
      %v378 = vadd.f32 0.0, %v377
      %v379 = vpop.f32.mrb[0].mxu0
      %v380 = vpop.f32.mrb[0].mxu0
      %v381 = vadd.f32 0.0, %v380
      %v382 = vpop.f32.mrb[0].mxu0
      %383 = vdwg.mxu0
      %384 = vst [vmem:[%s212] sm:$0xff] %v354
      %385 = vst [vmem:[%s212 + $0x8] sm:$0xff] %v357
      %386 = vst [vmem:[%s212 + $0x10] sm:$0xff] %v362
      %387 = vst [vmem:[%s212 + $0x18] sm:$0xff] %v365
      %388 = vst [vmem:[%s212 + $0x20] sm:$0xff] %v370
      %389 = vst [vmem:[%s212 + $0x28] sm:$0xff] %v373
      %390 = vst [vmem:[%s212 + $0x30] sm:$0xff] %v378
      %391 = vst [vmem:[%s212 + $0x38] sm:$0xff] %v381
      %v392 = vadd.f32 %v354, %v357
      %v393 = vadd.f32 %v392, %v362
      %v394 = vadd.f32 %v393, %v365
      %v395 = vadd.f32 %v394, %v370
      %v396 = vadd.f32 %v395, %v373
      %v397 = vadd.f32 %v396, %v378
      %v398 = vadd.f32 %v397, %v381
      %v399 = vrot.slane %v398, 4
      %v400 = vadd.f32 %v398, %v399
      %v401 = vrot.slane %v400, 2
      %v402 = vadd.f32 %v400, %v401
      %v403 = vrot.slane %v402, 1
      %v404 = vadd.f32 %v402, %v403
      %v405 = vmul.f32 %v354, %v354
      %v406 = vmul.f32 %v357, %v357
      %v407 = vmul.f32 %v362, %v362
      %v408 = vmul.f32 %v365, %v365
      %v409 = vmul.f32 %v370, %v370
      %v410 = vmul.f32 %v373, %v373
      %v411 = vmul.f32 %v378, %v378
      %v412 = vmul.f32 %v381, %v381
      %v413 = vadd.f32 %v405, %v406
      %v414 = vadd.f32 %v413, %v407
      %v415 = vadd.f32 %v414, %v408
      %v416 = vadd.f32 %v415, %v409
      %v417 = vadd.f32 %v416, %v410
      %v418 = vadd.f32 %v417, %v411
      %v419 = vadd.f32 %v418, %v412
      %v420 = vrot.slane %v419, 4
      %v421 = vadd.f32 %v419, %v420
      %v422 = vrot.slane %v421, 2
      %v423 = vadd.f32 %v421, %v422
      %v424 = vrot.slane %v423, 1
      %v425 = vadd.f32 %v423, %v424
      %426 = vst [vmem:[%s217] sm:$0xff] %v404
      %427 = vst [vmem:[%s221] sm:$0xff] %v425
      %s428 = smul.u32 8, %s16
      %p429 = scmp.lt.s32.totalorder %s428, 15
      %s430 = scalar_select %p429, %s428, 15
      %s431 = smul.addr %s430, 8
      %s432 = scalar_lea.vmem %s2, %s431
      %p433 = scmp.lt.s32.totalorder %s16, 1
      %s434 = scalar_select %p433, %s16, 1
      %s435 = smul.addr %s434, 8
      %s436 = scalar_lea.vmem %s3, %s435
      %p437 = scmp.lt.s32.totalorder %s16, 1
      %s438 = scalar_select %p437, %s16, 1
      %s439 = smul.addr %s438, 8
      %s440 = scalar_lea.vmem %s4, %s439
      // Predicated region
      $region29: #{d_forward.11} parent=27 // pred_check
        %p441 = pneg %p81
      $region30: #{d_forward.11} parent=27 // pred_check_branch
        %443 = sbr.rel (%p441) target = $region32
      $region31: #{d_forward.11} parent=27 // pred_region
        %s444 = smul.u32 8, %s16
      $region32: #{d_forward.11} parent=27 // pred_fallthru
        _
      // Predicated region
      $region33: #{d_forward.11} parent=27 // pred_check
        %p445 = pneg %p107
      $region34: #{d_forward.11} parent=27 // pred_check_branch
        %447 = sbr.rel (%p445) target = $region36
      $region35: #{d_forward.11} parent=27 // pred_region
        _
      $region36: #{d_forward.11} parent=27 // pred_fallthru
        _
      // Predicated region
      $region37: #{d_forward.11} parent=27 // pred_check
        %p448 = pneg %p133
      $region38: #{d_forward.11} parent=27 // pred_check_branch
        %450 = sbr.rel (%p448) target = $region40
      $region39: #{d_forward.11} parent=27 // pred_region
        _
      $region40: #{d_forward.11} parent=27 // pred_fallthru
        _
    $region28: #{d_forward.11} parent=5 // pred_fallthru
      _
    %p451 = scmp.le.s32.totalorder 2, %s11
    // Predicated region
    $region41: #{d_forward.11} parent=5 // pred_check
      %p452 = pneg %p451
    $region42: #{d_forward.11} parent=5 // pred_check_branch
      %454 = sbr.rel (%p452) target = $region44
    $region43: #{d_forward.11} parent=5 // pred_region
      %s455 = ssub.s32 %s11, 2
      // Predicated region
      $region45: #{d_forward.11} parent=43 // pred_check
        %p456 = pneg %p87
      $region46: #{d_forward.11} parent=43 // pred_check_branch
        %458 = sbr.rel (%p456) target = $region48
      $region47: #{d_forward.11} parent=43 // pred_region
        %s459 = smul.u32 8, %s17
        %p460 = scmp.lt.s32.totalorder %s459, 15
        %s461 = scalar_select %p460, %s459, 15
        %s462 = smul.addr %s461, 8
        %s463 = scalar_lea.vmem %s2, %s462
      $region48: #{d_forward.11} parent=43 // pred_fallthru
        _
      // Predicated region
      $region49: #{d_forward.11} parent=43 // pred_check
        %p464 = pneg %p113
      $region50: #{d_forward.11} parent=43 // pred_check_branch
        %466 = sbr.rel (%p464) target = $region52
      $region51: #{d_forward.11} parent=43 // pred_region
        %p467 = scmp.lt.s32.totalorder %s17, 1
        %s468 = scalar_select %p467, %s17, 1
        %s469 = smul.addr %s468, 8
        %s470 = scalar_lea.vmem %s3, %s469
      $region52: #{d_forward.11} parent=43 // pred_fallthru
        _
      // Predicated region
      $region53: #{d_forward.11} parent=43 // pred_check
        %p471 = pneg %p139
      $region54: #{d_forward.11} parent=43 // pred_check_branch
        %473 = sbr.rel (%p471) target = $region56
      $region55: #{d_forward.11} parent=43 // pred_region
        %p474 = scmp.lt.s32.totalorder %s17, 1
        %s475 = scalar_select %p474, %s17, 1
        %s476 = smul.addr %s475, 8
        %s477 = scalar_lea.vmem %s4, %s476
      $region56: #{d_forward.11} parent=43 // pred_fallthru
        _
    $region44: #{d_forward.11} parent=5 // pred_fallthru
      _
  $region6: #{d_forward.11} parent=0 // loop_footer
    %s15 = sadd.s32 1, %s11
  $region7: #{d_forward.11} parent=0 // loop_footer_branch
    %10 = sbr.rel target = $region3
  $region8: #{d_forward.11} parent=0 // loop_exit
    _

// kernel: d_forward.12
$region0: #{d_forward.12}
  #allocation0 [shape = 'u32[]', space=smem, size = 0x4, offset = 0x4, fixed_abs, tag = 'smem constant byte address 0x4 - core index']
  #allocation1 [shape = 'u32[144,128]{1,0:T(1,128)}', space=vmem, size = 0x12000, scoped, tag = 'internal scratch']
  %s0 = inlined_call_operand.vmem [shape: f32[128,16], index: 0, kind: input, shape index: {}]
  %s1 = inlined_call_operand.vmem [shape: f32[1,16], index: 1, kind: input, shape index: {}]
  %s2 = inlined_call_operand.vmem [shape: f32[1,16], index: 2, kind: input, shape index: {}]
  %s3 = inlined_call_operand.vmem [shape: bf16[128,16], index: 3, kind: output, shape index: {}]
  %s4 = sld [smem:[#allocation0]]
  $region22: #{d_forward.12} parent=0
    _
  %s6 = ssub.s32 1, %s4
  %s7 = scalar_select 0, %s6, %s4
  // Predicated region
  $region2: #{d_forward.12} parent=0 // pred_check
    _
  $region3: #{d_forward.12} parent=0 // pred_check_branch
    %9 = sbr.rel (0) target = $region5
  $region4: #{d_forward.12} parent=0 // pred_region
    _
  $region5: #{d_forward.12} parent=0 // pred_fallthru
    _
  // Predicated region
  $region6: #{d_forward.12} parent=0 // pred_check
    _
  $region7: #{d_forward.12} parent=0 // pred_check_branch
    %11 = sbr.rel (0) target = $region9
  $region8: #{d_forward.12} parent=0 // pred_region
    _
  $region9: #{d_forward.12} parent=0 // pred_fallthru
    _
  // Predicated region
  $region10: #{d_forward.12} parent=0 // pred_check
    _
  $region11: #{d_forward.12} parent=0 // pred_check_branch
    %13 = sbr.rel (0) target = $region13
  $region12: #{d_forward.12} parent=0 // pred_region
    _
  $region13: #{d_forward.12} parent=0 // pred_fallthru
    _
  %v14 = vld [vmem:[%s0] sm:$0xff]
  %v15 = vld [vmem:[%s0 + $0x8] sm:$0xff]
  %v16 = vld [vmem:[%s0 + $0x10] sm:$0xff]
  %v17 = vld [vmem:[%s0 + $0x18] sm:$0xff]
  %v18 = vld [vmem:[%s0 + $0x20] sm:$0xff]
  %v19 = vld [vmem:[%s0 + $0x28] sm:$0xff]
  %v20 = vld [vmem:[%s0 + $0x30] sm:$0xff]
  %v21 = vld [vmem:[%s0 + $0x38] sm:$0xff]
  %v22 = vld [vmem:[%s0 + $0x40] sm:$0xff]
  %v23 = vld [vmem:[%s0 + $0x48] sm:$0xff]
  %v24 = vld [vmem:[%s0 + $0x50] sm:$0xff]
  %v25 = vld [vmem:[%s0 + $0x58] sm:$0xff]
  %v26 = vld [vmem:[%s0 + $0x60] sm:$0xff]
  %v27 = vld [vmem:[%s0 + $0x68] sm:$0xff]
  %v28 = vld [vmem:[%s0 + $0x70] sm:$0xff]
  %v29 = vld [vmem:[%s0 + $0x78] sm:$0xff]
  %v30 = vld [vmem:[%s1] sm:$0x1]
  %v32 = vlaneseq
  %v33 = vshrl.u32 %v32, 7
  %v34 = vsub.s32 0, %v33
  %v35 = vrot.slane %v30, %v34
  %v37 = vmul.f32 %v14, %v35
  %v38 = vmul.f32 %v15, %v35
  %v39 = vmul.f32 %v16, %v35
  %v40 = vmul.f32 %v17, %v35
  %v41 = vmul.f32 %v18, %v35
  %v42 = vmul.f32 %v19, %v35
  %v43 = vmul.f32 %v20, %v35
  %v44 = vmul.f32 %v21, %v35
  %v45 = vmul.f32 %v22, %v35
  %v46 = vmul.f32 %v23, %v35
  %v47 = vmul.f32 %v24, %v35
  %v48 = vmul.f32 %v25, %v35
  %v49 = vmul.f32 %v26, %v35
  %v50 = vmul.f32 %v27, %v35
  %v51 = vmul.f32 %v28, %v35
  %v52 = vmul.f32 %v29, %v35
  %v53 = vld [vmem:[%s2] sm:$0x1]
  %v55 = vlaneseq
  %v56 = vshrl.u32 %v55, 7
  %v57 = vsub.s32 0, %v56
  %v58 = vrot.slane %v53, %v57
  %v60 = vadd.f32 %v37, %v58
  %v61 = vadd.f32 %v38, %v58
  %v62 = vadd.f32 %v39, %v58
  %v63 = vadd.f32 %v40, %v58
  %v64 = vadd.f32 %v41, %v58
  %v65 = vadd.f32 %v42, %v58
  %v66 = vadd.f32 %v43, %v58
  %v67 = vadd.f32 %v44, %v58
  %v68 = vadd.f32 %v45, %v58
  %v69 = vadd.f32 %v46, %v58
  %v70 = vadd.f32 %v47, %v58
  %v71 = vadd.f32 %v48, %v58
  %v72 = vadd.f32 %v49, %v58
  %v73 = vadd.f32 %v50, %v58
  %v74 = vadd.f32 %v51, %v58
  %v75 = vadd.f32 %v52, %v58
  %vm76 = vcmp.gt.f32.partialorder %v60, 0.0
  %vm77 = vcmp.gt.f32.partialorder %v61, 0.0
  %vm78 = vcmp.gt.f32.partialorder %v62, 0.0
  %vm79 = vcmp.gt.f32.partialorder %v63, 0.0
  %vm80 = vcmp.gt.f32.partialorder %v64, 0.0
  %vm81 = vcmp.gt.f32.partialorder %v65, 0.0
  %vm82 = vcmp.gt.f32.partialorder %v66, 0.0
  %vm83 = vcmp.gt.f32.partialorder %v67, 0.0
  %vm84 = vcmp.gt.f32.partialorder %v68, 0.0
  %vm85 = vcmp.gt.f32.partialorder %v69, 0.0
  %vm86 = vcmp.gt.f32.partialorder %v70, 0.0
  %vm87 = vcmp.gt.f32.partialorder %v71, 0.0
  %vm88 = vcmp.gt.f32.partialorder %v72, 0.0
  %vm89 = vcmp.gt.f32.partialorder %v73, 0.0
  %vm90 = vcmp.gt.f32.partialorder %v74, 0.0
  %vm91 = vcmp.gt.f32.partialorder %v75, 0.0
  %v92 = vmul.f32 %v60, 0.2
  %v93 = vmul.f32 %v61, 0.2
  %v94 = vmul.f32 %v62, 0.2
  %v95 = vmul.f32 %v63, 0.2
  %v96 = vmul.f32 %v64, 0.2
  %v97 = vmul.f32 %v65, 0.2
  %v98 = vmul.f32 %v66, 0.2
  %v99 = vmul.f32 %v67, 0.2
  %v100 = vmul.f32 %v68, 0.2
  %v101 = vmul.f32 %v69, 0.2
  %v102 = vmul.f32 %v70, 0.2
  %v103 = vmul.f32 %v71, 0.2
  %v104 = vmul.f32 %v72, 0.2
  %v105 = vmul.f32 %v73, 0.2
  %v106 = vmul.f32 %v74, 0.2
  %v107 = vmul.f32 %v75, 0.2
  %v108 = vsel %vm76, %v60, %v92
  %v109 = vsel %vm77, %v61, %v93
  %v110 = vsel %vm78, %v62, %v94
  %v111 = vsel %vm79, %v63, %v95
  %v112 = vsel %vm80, %v64, %v96
  %v113 = vsel %vm81, %v65, %v97
  %v114 = vsel %vm82, %v66, %v98
  %v115 = vsel %vm83, %v67, %v99
  %v116 = vsel %vm84, %v68, %v100
  %v117 = vsel %vm85, %v69, %v101
  %v118 = vsel %vm86, %v70, %v102
  %v119 = vsel %vm87, %v71, %v103
  %v120 = vsel %vm88, %v72, %v104
  %v121 = vsel %vm89, %v73, %v105
  %v122 = vsel %vm90, %v74, %v106
  %v123 = vsel %vm91, %v75, %v107
  %v124 = vpack.c.bf16 %v109, %v108
  %v125 = vpack.c.bf16 %v111, %v110
  %v126 = vpack.c.bf16 %v113, %v112
  %v127 = vpack.c.bf16 %v115, %v114
  %v128 = vpack.c.bf16 %v117, %v116
  %v129 = vpack.c.bf16 %v119, %v118
  %v130 = vpack.c.bf16 %v121, %v120
  %v131 = vpack.c.bf16 %v123, %v122
  %v140 = vunpack.c.l.b16 %v124
  %v141 = vunpack.c.h.b16 %v124
  %v142 = vunpack.c.l.b16 %v125
  %v143 = vunpack.c.h.b16 %v125
  %v144 = vunpack.c.l.b16 %v126
  %v145 = vunpack.c.h.b16 %v126
  %v146 = vunpack.c.l.b16 %v127
  %v147 = vunpack.c.h.b16 %v127
  %v148 = vunpack.c.l.b16 %v128
  %v149 = vunpack.c.h.b16 %v128
  %v150 = vunpack.c.l.b16 %v129
  %v151 = vunpack.c.h.b16 %v129
  %v152 = vunpack.c.l.b16 %v130
  %v153 = vunpack.c.h.b16 %v130
  %v154 = vunpack.c.l.b16 %v131
  %v155 = vunpack.c.h.b16 %v131
  %v156 = vpack.c.b16 %v140, %v140
  %v157 = vpack.c.b16 %v141, %v141
  %v158 = vpack.c.b16 %v142, %v142
  %v159 = vpack.c.b16 %v143, %v143
  %v160 = vpack.c.b16 %v144, %v144
  %v161 = vpack.c.b16 %v145, %v145
  %v162 = vpack.c.b16 %v146, %v146
  %v163 = vpack.c.b16 %v147, %v147
  %v164 = vpack.c.b16 %v148, %v148
  %v165 = vpack.c.b16 %v149, %v149
  %v166 = vpack.c.b16 %v150, %v150
  %v167 = vpack.c.b16 %v151, %v151
  %v168 = vpack.c.b16 %v152, %v152
  %v169 = vpack.c.b16 %v153, %v153
  %v170 = vpack.c.b16 %v154, %v154
  %v171 = vpack.c.b16 %v155, %v155
  %vm188 = vcmask 125952
  %189 = vst.msk [vmem:[%s3] sm:$0xf] %vm188, %v156
  %190 = vst.msk [vmem:[%s3 + $0x4] sm:$0xf] %vm188, %v157
  %191 = vst.msk [vmem:[%s3 + $0x8] sm:$0xf] %vm188, %v158
  %192 = vst.msk [vmem:[%s3 + $0xc] sm:$0xf] %vm188, %v159
  %193 = vst.msk [vmem:[%s3 + $0x10] sm:$0xf] %vm188, %v160
  %194 = vst.msk [vmem:[%s3 + $0x14] sm:$0xf] %vm188, %v161
  %195 = vst.msk [vmem:[%s3 + $0x18] sm:$0xf] %vm188, %v162
  %196 = vst.msk [vmem:[%s3 + $0x1c] sm:$0xf] %vm188, %v163
  %197 = vst.msk [vmem:[%s3 + $0x20] sm:$0xf] %vm188, %v164
  %198 = vst.msk [vmem:[%s3 + $0x24] sm:$0xf] %vm188, %v165
  %199 = vst.msk [vmem:[%s3 + $0x28] sm:$0xf] %vm188, %v166
  %200 = vst.msk [vmem:[%s3 + $0x2c] sm:$0xf] %vm188, %v167
  %201 = vst.msk [vmem:[%s3 + $0x30] sm:$0xf] %vm188, %v168
  %202 = vst.msk [vmem:[%s3 + $0x34] sm:$0xf] %vm188, %v169
  %203 = vst.msk [vmem:[%s3 + $0x38] sm:$0xf] %vm188, %v170
  %204 = vst.msk [vmem:[%s3 + $0x3c] sm:$0xf] %vm188, %v171
  // Predicated region
  $region14: #{d_forward.12} parent=0 // pred_check
    _
  $region15: #{d_forward.12} parent=0 // pred_check_branch
    %206 = sbr.rel (0) target = $region17
  $region16: #{d_forward.12} parent=0 // pred_region
    _
  $region17: #{d_forward.12} parent=0 // pred_fallthru
    _
  // Predicated region
  $region18: #{d_forward.12} parent=0 // pred_check
    _
  $region19: #{d_forward.12} parent=0 // pred_check_branch
    %208 = sbr.rel (0) target = $region21
  $region20: #{d_forward.12} parent=0 // pred_region
    _
  $region21: #{d_forward.12} parent=0 // pred_fallthru
    _

// kernel: d_forward.13
$region0: #{d_forward.13}
  #allocation0 [shape = 'u32[]', space=smem, size = 0x4, offset = 0x4, fixed_abs, tag = 'smem constant byte address 0x4 - core index']
  #allocation1 [shape = 'u32[144,128]{1,0:T(1,128)}', space=vmem, size = 0x12000, scoped, tag = 'internal scratch']
  %s0 = inlined_call_operand.vmem [shape: bf16[32,256], index: 0, kind: input, shape index: {}]
  %s1 = inlined_call_operand.vmem [shape: bf16[256,128], index: 1, kind: input, shape index: {}]
  %s2 = inlined_call_operand.vmem [shape: f32[32,128], index: 2, kind: output, shape index: {0}]
  %s3 = inlined_call_operand.vmem [shape: f32[8,128], index: 3, kind: output, shape index: {1}]
  %s4 = inlined_call_operand.vmem [shape: f32[8,128], index: 4, kind: output, shape index: {2}]
  %5 = xla_tuple %s2, %s3, %s4
  %s6 = sld [smem:[#allocation0]]
  $region34: #{d_forward.13} parent=0
    _
  %s8 = ssub.s32 1, %s6
  %s9 = scalar_select 0, %s8, %s6
  // Predicated region
  $region2: #{d_forward.13} parent=0 // pred_check
    _
  $region3: #{d_forward.13} parent=0 // pred_check_branch
    %11 = sbr.rel (0) target = $region5
  $region4: #{d_forward.13} parent=0 // pred_region
    _
  $region5: #{d_forward.13} parent=0 // pred_fallthru
    _
  // Predicated region
  $region6: #{d_forward.13} parent=0 // pred_check
    _
  $region7: #{d_forward.13} parent=0 // pred_check_branch
    %13 = sbr.rel (0) target = $region9
  $region8: #{d_forward.13} parent=0 // pred_region
    _
  $region9: #{d_forward.13} parent=0 // pred_fallthru
    _
  %v15 = vld [vmem:[%s0] sm:$0xff]
  %v16 = vld [vmem:[%s0 + $0x8] sm:$0xff]
  %v17 = vld [vmem:[%s0 + $0x10] sm:$0xff]
  %v18 = vld [vmem:[%s0 + $0x18] sm:$0xff]
  %v19 = vld [vmem:[%s1] sm:$0xf]
  %v20 = vld [vmem:[%s1 + $0x4] sm:$0xf]
  %v21 = vld [vmem:[%s1 + $0x8] sm:$0xf]
  %v22 = vld [vmem:[%s1 + $0xc] sm:$0xf]
  %v23 = vld [vmem:[%s1 + $0x10] sm:$0xf]
  %v24 = vld [vmem:[%s1 + $0x14] sm:$0xf]
  %v25 = vld [vmem:[%s1 + $0x18] sm:$0xf]
  %v26 = vld [vmem:[%s1 + $0x1c] sm:$0xf]
  %v27 = vld [vmem:[%s1 + $0x20] sm:$0xf]
  %v28 = vld [vmem:[%s1 + $0x24] sm:$0xf]
  %v29 = vld [vmem:[%s1 + $0x28] sm:$0xf]
  %v30 = vld [vmem:[%s1 + $0x2c] sm:$0xf]
  %v31 = vld [vmem:[%s1 + $0x30] sm:$0xf]
  %v32 = vld [vmem:[%s1 + $0x34] sm:$0xf]
  %v33 = vld [vmem:[%s1 + $0x38] sm:$0xf]
  %v34 = vld [vmem:[%s1 + $0x3c] sm:$0xf]
  %v35 = vld [vmem:[%s1 + $0x40] sm:$0xf]
  %v36 = vld [vmem:[%s1 + $0x44] sm:$0xf]
  %v37 = vld [vmem:[%s1 + $0x48] sm:$0xf]
  %v38 = vld [vmem:[%s1 + $0x4c] sm:$0xf]
  %v39 = vld [vmem:[%s1 + $0x50] sm:$0xf]
  %v40 = vld [vmem:[%s1 + $0x54] sm:$0xf]
  %v41 = vld [vmem:[%s1 + $0x58] sm:$0xf]
  %v42 = vld [vmem:[%s1 + $0x5c] sm:$0xf]
  %v43 = vld [vmem:[%s1 + $0x60] sm:$0xf]
  %v44 = vld [vmem:[%s1 + $0x64] sm:$0xf]
  %v45 = vld [vmem:[%s1 + $0x68] sm:$0xf]
  %v46 = vld [vmem:[%s1 + $0x6c] sm:$0xf]
  %v47 = vld [vmem:[%s1 + $0x70] sm:$0xf]
  %v48 = vld [vmem:[%s1 + $0x74] sm:$0xf]
  %v49 = vld [vmem:[%s1 + $0x78] sm:$0xf]
  %v50 = vld [vmem:[%s1 + $0x7c] sm:$0xf]
  %v55 = vunpack.c.l.b16 %v15
  %v56 = vunpack.c.h.b16 %v15
  %v57 = vunpack.c.l.b16 %v16
  %v58 = vunpack.c.h.b16 %v16
  %v59 = vunpack.c.l.b16 %v17
  %v60 = vunpack.c.h.b16 %v17
  %v61 = vunpack.c.l.b16 %v18
  %v62 = vunpack.c.h.b16 %v18
  %v63 = vpack.c.b16 %v57, %v55
  %v64 = vpack.c.b16 %v58, %v56
  %v65 = vpack.c.b16 %v61, %v59
  %v66 = vpack.c.b16 %v62, %v60
  %v103 = vunpack.c.l.b16 %v19
  %v104 = vunpack.c.l.b16 %v20
  %v105 = vunpack.c.l.b16 %v21
  %v106 = vunpack.c.l.b16 %v22
  %v107 = vunpack.c.l.b16 %v23
  %v108 = vunpack.c.l.b16 %v24
  %v109 = vunpack.c.l.b16 %v25
  %v110 = vunpack.c.l.b16 %v26
  %v111 = vunpack.c.l.b16 %v27
  %v112 = vunpack.c.l.b16 %v28
  %v113 = vunpack.c.l.b16 %v29
  %v114 = vunpack.c.l.b16 %v30
  %v115 = vunpack.c.l.b16 %v31
  %v116 = vunpack.c.l.b16 %v32
  %v117 = vunpack.c.l.b16 %v33
  %v118 = vunpack.c.l.b16 %v34
  %v119 = vunpack.c.l.b16 %v35
  %v120 = vunpack.c.l.b16 %v36
  %v121 = vunpack.c.l.b16 %v37
  %v122 = vunpack.c.l.b16 %v38
  %v123 = vunpack.c.l.b16 %v39
  %v124 = vunpack.c.l.b16 %v40
  %v125 = vunpack.c.l.b16 %v41
  %v126 = vunpack.c.l.b16 %v42
  %v127 = vunpack.c.l.b16 %v43
  %v128 = vunpack.c.l.b16 %v44
  %v129 = vunpack.c.l.b16 %v45
  %v130 = vunpack.c.l.b16 %v46
  %v131 = vunpack.c.l.b16 %v47
  %v132 = vunpack.c.l.b16 %v48
  %v133 = vunpack.c.l.b16 %v49
  %v134 = vunpack.c.l.b16 %v50
  %v135 = vpack.c.b16 %v104, %v103
  %v136 = vpack.c.b16 %v106, %v105
  %v137 = vpack.c.b16 %v108, %v107
  %v138 = vpack.c.b16 %v110, %v109
  %v139 = vpack.c.b16 %v112, %v111
  %v140 = vpack.c.b16 %v114, %v113
  %v141 = vpack.c.b16 %v116, %v115
  %v142 = vpack.c.b16 %v118, %v117
  %v143 = vpack.c.b16 %v120, %v119
  %v144 = vpack.c.b16 %v122, %v121
  %v145 = vpack.c.b16 %v124, %v123
  %v146 = vpack.c.b16 %v126, %v125
  %v147 = vpack.c.b16 %v128, %v127
  %v148 = vpack.c.b16 %v130, %v129
  %v149 = vpack.c.b16 %v132, %v131
  %v150 = vpack.c.b16 %v134, %v133
  %167 = vmatprep.subr.bf16.mxu0 0
  %168 = vmatpush1.bf16.msra.mxu0 %v135
  %169 = vmatprep.subr.bf16.mxu0 0
  %170 = vmatpush1.bf16.msra.mxu0 %v136
  %171 = vmatprep.subr.bf16.mxu0 0
  %172 = vmatpush1.bf16.msra.mxu0 %v137
  %173 = vmatprep.subr.bf16.mxu0 0
  %174 = vmatpush1.bf16.msra.mxu0 %v138
  %175 = vmatprep.subr.bf16.mxu0 0
  %176 = vmatpush1.bf16.msra.mxu0 %v139
  %177 = vmatprep.subr.bf16.mxu0 0
  %178 = vmatpush1.bf16.msra.mxu0 %v140
  %179 = vmatprep.subr.bf16.mxu0 0
  %180 = vmatpush1.bf16.msra.mxu0 %v141
  %181 = vmatprep.subr.bf16.mxu0 0
  %182 = vmatpush1.bf16.msra.mxu0 %v142
  %183 = vmatprep.subr.bf16.mxu0 0
  %184 = vmatpush1.bf16.msra.mxu0 %v143
  %185 = vmatprep.subr.bf16.mxu0 0
  %186 = vmatpush1.bf16.msra.mxu0 %v144
  %187 = vmatprep.subr.bf16.mxu0 0
  %188 = vmatpush1.bf16.msra.mxu0 %v145
  %189 = vmatprep.subr.bf16.mxu0 0
  %190 = vmatpush1.bf16.msra.mxu0 %v146
  %191 = vmatprep.subr.bf16.mxu0 0
  %192 = vmatpush1.bf16.msra.mxu0 %v147
  %193 = vmatprep.subr.bf16.mxu0 0
  %194 = vmatpush1.bf16.msra.mxu0 %v148
  %195 = vmatprep.subr.bf16.mxu0 0
  %196 = vmatpush1.bf16.msra.mxu0 %v149
  %197 = vmatprep.subr.bf16.mxu0 0
  %198 = vmatpush1.bf16.msra.mxu0 %v150
  %199 = vmatprep.mubr.bf16.mxu0 %v64
  %200 = vmatmul.mubr.bf16.gmra.mrb[0].mxu0 %v63
  %v201 = vpop.f32.mrb[0].mxu0
  %v202 = vadd.f32 0.0, %v201
  %v203 = vpop.f32.mrb[0].mxu0
  %v204 = vpop.f32.mrb[0].mxu0
  %v205 = vadd.f32 0.0, %v204
  %v206 = vpop.f32.mrb[0].mxu0
  %207 = vmatprep.mubr.bf16.mxu0 %v66
  %208 = vmatmul.mubr.bf16.gmra.mrb[0].mxu0 %v65
  %v209 = vpop.f32.mrb[0].mxu0
  %v210 = vadd.f32 0.0, %v209
  %v211 = vpop.f32.mrb[0].mxu0
  %v212 = vpop.f32.mrb[0].mxu0
  %v213 = vadd.f32 0.0, %v212
  %v214 = vpop.f32.mrb[0].mxu0
  %215 = vdwg.mxu0
  %216 = vst [vmem:[%s2] sm:$0xff] %v202
  %217 = vst [vmem:[%s2 + $0x8] sm:$0xff] %v205
  %218 = vst [vmem:[%s2 + $0x10] sm:$0xff] %v210
  %219 = vst [vmem:[%s2 + $0x18] sm:$0xff] %v213
  %v220 = vadd.f32 %v202, %v205
  %v221 = vadd.f32 %v220, %v210
  %v222 = vadd.f32 %v221, %v213
  %v223 = vrot.slane %v222, 4
  %v224 = vadd.f32 %v222, %v223
  %v225 = vrot.slane %v224, 2
  %v226 = vadd.f32 %v224, %v225
  %v227 = vrot.slane %v226, 1
  %v228 = vadd.f32 %v226, %v227
  %v229 = vmul.f32 %v202, %v202
  %v230 = vmul.f32 %v205, %v205
  %v231 = vmul.f32 %v210, %v210
  %v232 = vmul.f32 %v213, %v213
  %v233 = vadd.f32 %v229, %v230
  %v234 = vadd.f32 %v233, %v231
  %v235 = vadd.f32 %v234, %v232
  %v236 = vrot.slane %v235, 4
  %v237 = vadd.f32 %v235, %v236
  %v238 = vrot.slane %v237, 2
  %v239 = vadd.f32 %v237, %v238
  %v240 = vrot.slane %v239, 1
  %v241 = vadd.f32 %v239, %v240
  %242 = vst [vmem:[%s3] sm:$0xff] %v228
  %243 = vst [vmem:[%s4] sm:$0xff] %v241
  // Predicated region
  $region10: #{d_forward.13} parent=0 // pred_check
    _
  $region11: #{d_forward.13} parent=0 // pred_check_branch
    %245 = sbr.rel (0) target = $region13
  $region12: #{d_forward.13} parent=0 // pred_region
    _
  $region13: #{d_forward.13} parent=0 // pred_fallthru
    _
  // Predicated region
  $region14: #{d_forward.13} parent=0 // pred_check
    _
  $region15: #{d_forward.13} parent=0 // pred_check_branch
    %247 = sbr.rel (0) target = $region17
  $region16: #{d_forward.13} parent=0 // pred_region
    _
  $region17: #{d_forward.13} parent=0 // pred_fallthru
    _
  // Predicated region
  $region18: #{d_forward.13} parent=0 // pred_check
    _
  $region19: #{d_forward.13} parent=0 // pred_check_branch
    %249 = sbr.rel (0) target = $region21
  $region20: #{d_forward.13} parent=0 // pred_region
    _
  $region21: #{d_forward.13} parent=0 // pred_fallthru
    _
  // Predicated region
  $region22: #{d_forward.13} parent=0 // pred_check
    _
  $region23: #{d_forward.13} parent=0 // pred_check_branch
    %251 = sbr.rel (0) target = $region25
  $region24: #{d_forward.13} parent=0 // pred_region
    _
  $region25: #{d_forward.13} parent=0 // pred_fallthru
    _
  // Predicated region
  $region26: #{d_forward.13} parent=0 // pred_check
    _
  $region27: #{d_forward.13} parent=0 // pred_check_branch
    %253 = sbr.rel (0) target = $region29
  $region28: #{d_forward.13} parent=0 // pred_region
    _
  $region29: #{d_forward.13} parent=0 // pred_fallthru
    _
  // Predicated region
  $region30: #{d_forward.13} parent=0 // pred_check
    _
  $region31: #{d_forward.13} parent=0 // pred_check_branch
    %255 = sbr.rel (0) target = $region33
  $region32: #{d_forward.13} parent=0 // pred_region
    _
  $region33: #{d_forward.13} parent=0 // pred_fallthru
    _

// kernel: d_forward.14
$region0: #{d_forward.14}
  #allocation0 [shape = 'u32[]', space=smem, size = 0x4, offset = 0x4, fixed_abs, tag = 'smem constant byte address 0x4 - core index']
  #allocation1 [shape = 'u32[144,128]{1,0:T(1,128)}', space=vmem, size = 0x12000, scoped, tag = 'internal scratch']
  %s0 = inlined_call_operand.vmem [shape: f32[32,32], index: 0, kind: input, shape index: {}]
  %s1 = inlined_call_operand.vmem [shape: f32[1,32], index: 1, kind: input, shape index: {}]
  %s2 = inlined_call_operand.vmem [shape: f32[1,32], index: 2, kind: input, shape index: {}]
  %s3 = inlined_call_operand.vmem [shape: bf16[32,32], index: 3, kind: output, shape index: {}]
  %s4 = sld [smem:[#allocation0]]
  $region22: #{d_forward.14} parent=0
    _
  %s6 = ssub.s32 1, %s4
  %s7 = scalar_select 0, %s6, %s4
  // Predicated region
  $region2: #{d_forward.14} parent=0 // pred_check
    _
  $region3: #{d_forward.14} parent=0 // pred_check_branch
    %9 = sbr.rel (0) target = $region5
  $region4: #{d_forward.14} parent=0 // pred_region
    _
  $region5: #{d_forward.14} parent=0 // pred_fallthru
    _
  // Predicated region
  $region6: #{d_forward.14} parent=0 // pred_check
    _
  $region7: #{d_forward.14} parent=0 // pred_check_branch
    %11 = sbr.rel (0) target = $region9
  $region8: #{d_forward.14} parent=0 // pred_region
    _
  $region9: #{d_forward.14} parent=0 // pred_fallthru
    _
  // Predicated region
  $region10: #{d_forward.14} parent=0 // pred_check
    _
  $region11: #{d_forward.14} parent=0 // pred_check_branch
    %13 = sbr.rel (0) target = $region13
  $region12: #{d_forward.14} parent=0 // pred_region
    _
  $region13: #{d_forward.14} parent=0 // pred_fallthru
    _
  %v14 = vld [vmem:[%s0] sm:$0xff]
  %v15 = vld [vmem:[%s0 + $0x8] sm:$0xff]
  %v16 = vld [vmem:[%s0 + $0x10] sm:$0xff]
  %v17 = vld [vmem:[%s0 + $0x18] sm:$0xff]
  %v18 = vld [vmem:[%s1] sm:$0x1]
  %v20 = vlaneseq
  %v21 = vshrl.u32 %v20, 7
  %v22 = vsub.s32 0, %v21
  %v23 = vrot.slane %v18, %v22
  %v25 = vmul.f32 %v14, %v23
  %v26 = vmul.f32 %v15, %v23
  %v27 = vmul.f32 %v16, %v23
  %v28 = vmul.f32 %v17, %v23
  %v29 = vld [vmem:[%s2] sm:$0x1]
  %v31 = vlaneseq
  %v32 = vshrl.u32 %v31, 7
  %v33 = vsub.s32 0, %v32
  %v34 = vrot.slane %v29, %v33
  %v36 = vadd.f32 %v25, %v34
  %v37 = vadd.f32 %v26, %v34
  %v38 = vadd.f32 %v27, %v34
  %v39 = vadd.f32 %v28, %v34
  %vm40 = vcmp.gt.f32.partialorder %v36, 0.0
  %vm41 = vcmp.gt.f32.partialorder %v37, 0.0
  %vm42 = vcmp.gt.f32.partialorder %v38, 0.0
  %vm43 = vcmp.gt.f32.partialorder %v39, 0.0
  %v44 = vmul.f32 %v36, 0.2
  %v45 = vmul.f32 %v37, 0.2
  %v46 = vmul.f32 %v38, 0.2
  %v47 = vmul.f32 %v39, 0.2
  %v48 = vsel %vm40, %v36, %v44
  %v49 = vsel %vm41, %v37, %v45
  %v50 = vsel %vm42, %v38, %v46
  %v51 = vsel %vm43, %v39, %v47
  %v52 = vpack.c.bf16 %v49, %v48
  %v53 = vpack.c.bf16 %v51, %v50
  %v56 = vunpack.c.l.b16 %v52
  %v57 = vunpack.c.h.b16 %v52
  %v58 = vunpack.c.l.b16 %v53
  %v59 = vunpack.c.h.b16 %v53
  %v60 = vpack.c.b16 %v56, %v56
  %v61 = vpack.c.b16 %v57, %v57
  %v62 = vpack.c.b16 %v58, %v58
  %v63 = vpack.c.b16 %v59, %v59
  %vm68 = vcmask 257024
  %69 = vst.msk [vmem:[%s3] sm:$0xf] %vm68, %v60
  %70 = vst.msk [vmem:[%s3 + $0x4] sm:$0xf] %vm68, %v61
  %71 = vst.msk [vmem:[%s3 + $0x8] sm:$0xf] %vm68, %v62
  %72 = vst.msk [vmem:[%s3 + $0xc] sm:$0xf] %vm68, %v63
  // Predicated region
  $region14: #{d_forward.14} parent=0 // pred_check
    _
  $region15: #{d_forward.14} parent=0 // pred_check_branch
    %74 = sbr.rel (0) target = $region17
  $region16: #{d_forward.14} parent=0 // pred_region
    _
  $region17: #{d_forward.14} parent=0 // pred_fallthru
    _
  // Predicated region
  $region18: #{d_forward.14} parent=0 // pred_check
    _
  $region19: #{d_forward.14} parent=0 // pred_check_branch
    %76 = sbr.rel (0) target = $region21
  $region20: #{d_forward.14} parent=0 // pred_region
    _
  $region21: #{d_forward.14} parent=0 // pred_fallthru
    _

// kernel: d_forward.16
$region0: #{d_forward.16}
  #allocation0 [shape = 'u32[]', space=smem, size = 0x4, offset = 0x4, fixed_abs, tag = 'smem constant byte address 0x4 - core index']
  #allocation1 [shape = 'u32[144,128]{1,0:T(1,128)}', space=vmem, size = 0x12000, scoped, tag = 'internal scratch']
  %s0 = inlined_call_operand.vmem [shape: f32[32,64], index: 0, kind: input, shape index: {}]
  %s1 = inlined_call_operand.vmem [shape: f32[1,64], index: 1, kind: input, shape index: {}]
  %s2 = inlined_call_operand.vmem [shape: f32[1,64], index: 2, kind: input, shape index: {}]
  %s3 = inlined_call_operand.vmem [shape: bf16[32,64], index: 3, kind: output, shape index: {}]
  %s4 = sld [smem:[#allocation0]]
  $region22: #{d_forward.16} parent=0
    _
  %s6 = ssub.s32 1, %s4
  %s7 = scalar_select 0, %s6, %s4
  // Predicated region
  $region2: #{d_forward.16} parent=0 // pred_check
    _
  $region3: #{d_forward.16} parent=0 // pred_check_branch
    %9 = sbr.rel (0) target = $region5
  $region4: #{d_forward.16} parent=0 // pred_region
    _
  $region5: #{d_forward.16} parent=0 // pred_fallthru
    _
  // Predicated region
  $region6: #{d_forward.16} parent=0 // pred_check
    _
  $region7: #{d_forward.16} parent=0 // pred_check_branch
    %11 = sbr.rel (0) target = $region9
  $region8: #{d_forward.16} parent=0 // pred_region
    _
  $region9: #{d_forward.16} parent=0 // pred_fallthru
    _
  // Predicated region
  $region10: #{d_forward.16} parent=0 // pred_check
    _
  $region11: #{d_forward.16} parent=0 // pred_check_branch
    %13 = sbr.rel (0) target = $region13
  $region12: #{d_forward.16} parent=0 // pred_region
    _
  $region13: #{d_forward.16} parent=0 // pred_fallthru
    _
  %v14 = vld [vmem:[%s0] sm:$0xff]
  %v15 = vld [vmem:[%s0 + $0x8] sm:$0xff]
  %v16 = vld [vmem:[%s0 + $0x10] sm:$0xff]
  %v17 = vld [vmem:[%s0 + $0x18] sm:$0xff]
  %v18 = vld [vmem:[%s1] sm:$0x1]
  %v20 = vlaneseq
  %v21 = vshrl.u32 %v20, 7
  %v22 = vsub.s32 0, %v21
  %v23 = vrot.slane %v18, %v22
  %v25 = vmul.f32 %v14, %v23
  %v26 = vmul.f32 %v15, %v23
  %v27 = vmul.f32 %v16, %v23
  %v28 = vmul.f32 %v17, %v23
  %v29 = vld [vmem:[%s2] sm:$0x1]
  %v31 = vlaneseq
  %v32 = vshrl.u32 %v31, 7
  %v33 = vsub.s32 0, %v32
  %v34 = vrot.slane %v29, %v33
  %v36 = vadd.f32 %v25, %v34
  %v37 = vadd.f32 %v26, %v34
  %v38 = vadd.f32 %v27, %v34
  %v39 = vadd.f32 %v28, %v34
  %vm40 = vcmp.gt.f32.partialorder %v36, 0.0
  %vm41 = vcmp.gt.f32.partialorder %v37, 0.0
  %vm42 = vcmp.gt.f32.partialorder %v38, 0.0
  %vm43 = vcmp.gt.f32.partialorder %v39, 0.0
  %v44 = vmul.f32 %v36, 0.2
  %v45 = vmul.f32 %v37, 0.2
  %v46 = vmul.f32 %v38, 0.2
  %v47 = vmul.f32 %v39, 0.2
  %v48 = vsel %vm40, %v36, %v44
  %v49 = vsel %vm41, %v37, %v45
  %v50 = vsel %vm42, %v38, %v46
  %v51 = vsel %vm43, %v39, %v47
  %v52 = vpack.c.bf16 %v49, %v48
  %v53 = vpack.c.bf16 %v51, %v50
  %v56 = vunpack.c.l.b16 %v52
  %v57 = vunpack.c.h.b16 %v52
  %v58 = vunpack.c.l.b16 %v53
  %v59 = vunpack.c.h.b16 %v53
  %v60 = vpack.c.b16 %v56, %v56
  %v61 = vpack.c.b16 %v57, %v57
  %v62 = vpack.c.b16 %v58, %v58
  %v63 = vpack.c.b16 %v59, %v59
  %vm68 = vcmask 519168
  %69 = vst.msk [vmem:[%s3] sm:$0xf] %vm68, %v60
  %70 = vst.msk [vmem:[%s3 + $0x4] sm:$0xf] %vm68, %v61
  %71 = vst.msk [vmem:[%s3 + $0x8] sm:$0xf] %vm68, %v62
  %72 = vst.msk [vmem:[%s3 + $0xc] sm:$0xf] %vm68, %v63
  // Predicated region
  $region14: #{d_forward.16} parent=0 // pred_check
    _
  $region15: #{d_forward.16} parent=0 // pred_check_branch
    %74 = sbr.rel (0) target = $region17
  $region16: #{d_forward.16} parent=0 // pred_region
    _
  $region17: #{d_forward.16} parent=0 // pred_fallthru
    _
  // Predicated region
  $region18: #{d_forward.16} parent=0 // pred_check
    _
  $region19: #{d_forward.16} parent=0 // pred_check_branch
    %76 = sbr.rel (0) target = $region21
  $region20: #{d_forward.16} parent=0 // pred_region
    _
  $region21: #{d_forward.16} parent=0 // pred_fallthru
    _

// kernel: d_forward.15
$region0: #{d_forward.15}
  #allocation0 [shape = 'u32[]', space=smem, size = 0x4, offset = 0x4, fixed_abs, tag = 'smem constant byte address 0x4 - core index']
  #allocation1 [shape = 'u32[144,128]{1,0:T(1,128)}', space=vmem, size = 0x12000, scoped, tag = 'internal scratch']
  %s0 = inlined_call_operand.vmem [shape: bf16[32,512], index: 0, kind: input, shape index: {}]
  %s1 = inlined_call_operand.vmem [shape: bf16[512,128], index: 1, kind: input, shape index: {}]
  %s2 = inlined_call_operand.vmem [shape: f32[32,128], index: 2, kind: output, shape index: {0}]
  %s3 = inlined_call_operand.vmem [shape: f32[8,128], index: 3, kind: output, shape index: {1}]
  %s4 = inlined_call_operand.vmem [shape: f32[8,128], index: 4, kind: output, shape index: {2}]
  %5 = xla_tuple %s2, %s3, %s4
  %s6 = sld [smem:[#allocation0]]
  $region34: #{d_forward.15} parent=0
    _
  %s8 = ssub.s32 1, %s6
  %s9 = scalar_select 0, %s8, %s6
  // Predicated region
  $region2: #{d_forward.15} parent=0 // pred_check
    _
  $region3: #{d_forward.15} parent=0 // pred_check_branch
    %11 = sbr.rel (0) target = $region5
  $region4: #{d_forward.15} parent=0 // pred_region
    _
  $region5: #{d_forward.15} parent=0 // pred_fallthru
    _
  // Predicated region
  $region6: #{d_forward.15} parent=0 // pred_check
    _
  $region7: #{d_forward.15} parent=0 // pred_check_branch
    %13 = sbr.rel (0) target = $region9
  $region8: #{d_forward.15} parent=0 // pred_region
    _
  $region9: #{d_forward.15} parent=0 // pred_fallthru
    _
  %v15 = vld [vmem:[%s0] sm:$0xff]
  %v16 = vld [vmem:[%s0 + $0x8] sm:$0xff]
  %v17 = vld [vmem:[%s0 + $0x10] sm:$0xff]
  %v18 = vld [vmem:[%s0 + $0x18] sm:$0xff]
  %v19 = vld [vmem:[%s0 + $0x20] sm:$0xff]
  %v20 = vld [vmem:[%s0 + $0x28] sm:$0xff]
  %v21 = vld [vmem:[%s0 + $0x30] sm:$0xff]
  %v22 = vld [vmem:[%s0 + $0x38] sm:$0xff]
  %v23 = vld [vmem:[%s1] sm:$0xf]
  %v24 = vld [vmem:[%s1 + $0x4] sm:$0xf]
  %v25 = vld [vmem:[%s1 + $0x8] sm:$0xf]
  %v26 = vld [vmem:[%s1 + $0xc] sm:$0xf]
  %v27 = vld [vmem:[%s1 + $0x10] sm:$0xf]
  %v28 = vld [vmem:[%s1 + $0x14] sm:$0xf]
  %v29 = vld [vmem:[%s1 + $0x18] sm:$0xf]
  %v30 = vld [vmem:[%s1 + $0x1c] sm:$0xf]
  %v31 = vld [vmem:[%s1 + $0x20] sm:$0xf]
  %v32 = vld [vmem:[%s1 + $0x24] sm:$0xf]
  %v33 = vld [vmem:[%s1 + $0x28] sm:$0xf]
  %v34 = vld [vmem:[%s1 + $0x2c] sm:$0xf]
  %v35 = vld [vmem:[%s1 + $0x30] sm:$0xf]
  %v36 = vld [vmem:[%s1 + $0x34] sm:$0xf]
  %v37 = vld [vmem:[%s1 + $0x38] sm:$0xf]
  %v38 = vld [vmem:[%s1 + $0x3c] sm:$0xf]
  %v39 = vld [vmem:[%s1 + $0x40] sm:$0xf]
  %v40 = vld [vmem:[%s1 + $0x44] sm:$0xf]
  %v41 = vld [vmem:[%s1 + $0x48] sm:$0xf]
  %v42 = vld [vmem:[%s1 + $0x4c] sm:$0xf]
  %v43 = vld [vmem:[%s1 + $0x50] sm:$0xf]
  %v44 = vld [vmem:[%s1 + $0x54] sm:$0xf]
  %v45 = vld [vmem:[%s1 + $0x58] sm:$0xf]
  %v46 = vld [vmem:[%s1 + $0x5c] sm:$0xf]
  %v47 = vld [vmem:[%s1 + $0x60] sm:$0xf]
  %v48 = vld [vmem:[%s1 + $0x64] sm:$0xf]
  %v49 = vld [vmem:[%s1 + $0x68] sm:$0xf]
  %v50 = vld [vmem:[%s1 + $0x6c] sm:$0xf]
  %v51 = vld [vmem:[%s1 + $0x70] sm:$0xf]
  %v52 = vld [vmem:[%s1 + $0x74] sm:$0xf]
  %v53 = vld [vmem:[%s1 + $0x78] sm:$0xf]
  %v54 = vld [vmem:[%s1 + $0x7c] sm:$0xf]
  %v55 = vld [vmem:[%s1 + $0x80] sm:$0xf]
  %v56 = vld [vmem:[%s1 + $0x84] sm:$0xf]
  %v57 = vld [vmem:[%s1 + $0x88] sm:$0xf]
  %v58 = vld [vmem:[%s1 + $0x8c] sm:$0xf]
  %v59 = vld [vmem:[%s1 + $0x90] sm:$0xf]
  %v60 = vld [vmem:[%s1 + $0x94] sm:$0xf]
  %v61 = vld [vmem:[%s1 + $0x98] sm:$0xf]
  %v62 = vld [vmem:[%s1 + $0x9c] sm:$0xf]
  %v63 = vld [vmem:[%s1 + $0xa0] sm:$0xf]
  %v64 = vld [vmem:[%s1 + $0xa4] sm:$0xf]
  %v65 = vld [vmem:[%s1 + $0xa8] sm:$0xf]
  %v66 = vld [vmem:[%s1 + $0xac] sm:$0xf]
  %v67 = vld [vmem:[%s1 + $0xb0] sm:$0xf]
  %v68 = vld [vmem:[%s1 + $0xb4] sm:$0xf]
  %v69 = vld [vmem:[%s1 + $0xb8] sm:$0xf]
  %v70 = vld [vmem:[%s1 + $0xbc] sm:$0xf]
  %v71 = vld [vmem:[%s1 + $0xc0] sm:$0xf]
  %v72 = vld [vmem:[%s1 + $0xc4] sm:$0xf]
  %v73 = vld [vmem:[%s1 + $0xc8] sm:$0xf]
  %v74 = vld [vmem:[%s1 + $0xcc] sm:$0xf]
  %v75 = vld [vmem:[%s1 + $0xd0] sm:$0xf]
  %v76 = vld [vmem:[%s1 + $0xd4] sm:$0xf]
  %v77 = vld [vmem:[%s1 + $0xd8] sm:$0xf]
  %v78 = vld [vmem:[%s1 + $0xdc] sm:$0xf]
  %v79 = vld [vmem:[%s1 + $0xe0] sm:$0xf]
  %v80 = vld [vmem:[%s1 + $0xe4] sm:$0xf]
  %v81 = vld [vmem:[%s1 + $0xe8] sm:$0xf]
  %v82 = vld [vmem:[%s1 + $0xec] sm:$0xf]
  %v83 = vld [vmem:[%s1 + $0xf0] sm:$0xf]
  %v84 = vld [vmem:[%s1 + $0xf4] sm:$0xf]
  %v85 = vld [vmem:[%s1 + $0xf8] sm:$0xf]
  %v86 = vld [vmem:[%s1 + $0xfc] sm:$0xf]
  %v95 = vunpack.c.l.b16 %v15
  %v96 = vunpack.c.h.b16 %v15
  %v97 = vunpack.c.l.b16 %v16
  %v98 = vunpack.c.h.b16 %v16
  %v99 = vunpack.c.l.b16 %v17
  %v100 = vunpack.c.h.b16 %v17
  %v101 = vunpack.c.l.b16 %v18
  %v102 = vunpack.c.h.b16 %v18
  %v103 = vunpack.c.l.b16 %v19
  %v104 = vunpack.c.h.b16 %v19
  %v105 = vunpack.c.l.b16 %v20
  %v106 = vunpack.c.h.b16 %v20
  %v107 = vunpack.c.l.b16 %v21
  %v108 = vunpack.c.h.b16 %v21
  %v109 = vunpack.c.l.b16 %v22
  %v110 = vunpack.c.h.b16 %v22
  %v111 = vpack.c.b16 %v99, %v95
  %v112 = vpack.c.b16 %v100, %v96
  %v113 = vpack.c.b16 %v101, %v97
  %v114 = vpack.c.b16 %v102, %v98
  %v115 = vpack.c.b16 %v107, %v103
  %v116 = vpack.c.b16 %v108, %v104
  %v117 = vpack.c.b16 %v109, %v105
  %v118 = vpack.c.b16 %v110, %v106
  %v191 = vunpack.c.l.b16 %v23
  %v192 = vunpack.c.l.b16 %v24
  %v193 = vunpack.c.l.b16 %v25
  %v194 = vunpack.c.l.b16 %v26
  %v195 = vunpack.c.l.b16 %v27
  %v196 = vunpack.c.l.b16 %v28
  %v197 = vunpack.c.l.b16 %v29
  %v198 = vunpack.c.l.b16 %v30
  %v199 = vunpack.c.l.b16 %v31
  %v200 = vunpack.c.l.b16 %v32
  %v201 = vunpack.c.l.b16 %v33
  %v202 = vunpack.c.l.b16 %v34
  %v203 = vunpack.c.l.b16 %v35
  %v204 = vunpack.c.l.b16 %v36
  %v205 = vunpack.c.l.b16 %v37
  %v206 = vunpack.c.l.b16 %v38
  %v207 = vunpack.c.l.b16 %v39
  %v208 = vunpack.c.l.b16 %v40
  %v209 = vunpack.c.l.b16 %v41
  %v210 = vunpack.c.l.b16 %v42
  %v211 = vunpack.c.l.b16 %v43
  %v212 = vunpack.c.l.b16 %v44
  %v213 = vunpack.c.l.b16 %v45
  %v214 = vunpack.c.l.b16 %v46
  %v215 = vunpack.c.l.b16 %v47
  %v216 = vunpack.c.l.b16 %v48
  %v217 = vunpack.c.l.b16 %v49
  %v218 = vunpack.c.l.b16 %v50
  %v219 = vunpack.c.l.b16 %v51
  %v220 = vunpack.c.l.b16 %v52
  %v221 = vunpack.c.l.b16 %v53
  %v222 = vunpack.c.l.b16 %v54
  %v223 = vunpack.c.l.b16 %v55
  %v224 = vunpack.c.l.b16 %v56
  %v225 = vunpack.c.l.b16 %v57
  %v226 = vunpack.c.l.b16 %v58
  %v227 = vunpack.c.l.b16 %v59
  %v228 = vunpack.c.l.b16 %v60
  %v229 = vunpack.c.l.b16 %v61
  %v230 = vunpack.c.l.b16 %v62
  %v231 = vunpack.c.l.b16 %v63
  %v232 = vunpack.c.l.b16 %v64
  %v233 = vunpack.c.l.b16 %v65
  %v234 = vunpack.c.l.b16 %v66
  %v235 = vunpack.c.l.b16 %v67
  %v236 = vunpack.c.l.b16 %v68
  %v237 = vunpack.c.l.b16 %v69
  %v238 = vunpack.c.l.b16 %v70
  %v239 = vunpack.c.l.b16 %v71
  %v240 = vunpack.c.l.b16 %v72
  %v241 = vunpack.c.l.b16 %v73
  %v242 = vunpack.c.l.b16 %v74
  %v243 = vunpack.c.l.b16 %v75
  %v244 = vunpack.c.l.b16 %v76
  %v245 = vunpack.c.l.b16 %v77
  %v246 = vunpack.c.l.b16 %v78
  %v247 = vunpack.c.l.b16 %v79
  %v248 = vunpack.c.l.b16 %v80
  %v249 = vunpack.c.l.b16 %v81
  %v250 = vunpack.c.l.b16 %v82
  %v251 = vunpack.c.l.b16 %v83
  %v252 = vunpack.c.l.b16 %v84
  %v253 = vunpack.c.l.b16 %v85
  %v254 = vunpack.c.l.b16 %v86
  %v255 = vpack.c.b16 %v192, %v191
  %v256 = vpack.c.b16 %v194, %v193
  %v257 = vpack.c.b16 %v196, %v195
  %v258 = vpack.c.b16 %v198, %v197
  %v259 = vpack.c.b16 %v200, %v199
  %v260 = vpack.c.b16 %v202, %v201
  %v261 = vpack.c.b16 %v204, %v203
  %v262 = vpack.c.b16 %v206, %v205
  %v263 = vpack.c.b16 %v208, %v207
  %v264 = vpack.c.b16 %v210, %v209
  %v265 = vpack.c.b16 %v212, %v211
  %v266 = vpack.c.b16 %v214, %v213
  %v267 = vpack.c.b16 %v216, %v215
  %v268 = vpack.c.b16 %v218, %v217
  %v269 = vpack.c.b16 %v220, %v219
  %v270 = vpack.c.b16 %v222, %v221
  %v271 = vpack.c.b16 %v224, %v223
  %v272 = vpack.c.b16 %v226, %v225
  %v273 = vpack.c.b16 %v228, %v227
  %v274 = vpack.c.b16 %v230, %v229
  %v275 = vpack.c.b16 %v232, %v231
  %v276 = vpack.c.b16 %v234, %v233
  %v277 = vpack.c.b16 %v236, %v235
  %v278 = vpack.c.b16 %v238, %v237
  %v279 = vpack.c.b16 %v240, %v239
  %v280 = vpack.c.b16 %v242, %v241
  %v281 = vpack.c.b16 %v244, %v243
  %v282 = vpack.c.b16 %v246, %v245
  %v283 = vpack.c.b16 %v248, %v247
  %v284 = vpack.c.b16 %v250, %v249
  %v285 = vpack.c.b16 %v252, %v251
  %v286 = vpack.c.b16 %v254, %v253
  %319 = vmatprep.subr.bf16.mxu0 0
  %320 = vmatpush1.bf16.msra.mxu0 %v255
  %321 = vmatprep.subr.bf16.mxu0 0
  %322 = vmatpush1.bf16.msra.mxu0 %v256
  %323 = vmatprep.subr.bf16.mxu0 0
  %324 = vmatpush1.bf16.msra.mxu0 %v257
  %325 = vmatprep.subr.bf16.mxu0 0
  %326 = vmatpush1.bf16.msra.mxu0 %v258
  %327 = vmatprep.subr.bf16.mxu0 0
  %328 = vmatpush1.bf16.msra.mxu0 %v259
  %329 = vmatprep.subr.bf16.mxu0 0
  %330 = vmatpush1.bf16.msra.mxu0 %v260
  %331 = vmatprep.subr.bf16.mxu0 0
  %332 = vmatpush1.bf16.msra.mxu0 %v261
  %333 = vmatprep.subr.bf16.mxu0 0
  %334 = vmatpush1.bf16.msra.mxu0 %v262
  %335 = vmatprep.subr.bf16.mxu0 0
  %336 = vmatpush1.bf16.msra.mxu0 %v263
  %337 = vmatprep.subr.bf16.mxu0 0
  %338 = vmatpush1.bf16.msra.mxu0 %v264
  %339 = vmatprep.subr.bf16.mxu0 0
  %340 = vmatpush1.bf16.msra.mxu0 %v265
  %341 = vmatprep.subr.bf16.mxu0 0
  %342 = vmatpush1.bf16.msra.mxu0 %v266
  %343 = vmatprep.subr.bf16.mxu0 0
  %344 = vmatpush1.bf16.msra.mxu0 %v267
  %345 = vmatprep.subr.bf16.mxu0 0
  %346 = vmatpush1.bf16.msra.mxu0 %v268
  %347 = vmatprep.subr.bf16.mxu0 0
  %348 = vmatpush1.bf16.msra.mxu0 %v269
  %349 = vmatprep.subr.bf16.mxu0 0
  %350 = vmatpush1.bf16.msra.mxu0 %v270
  %351 = vmatprep.mubr.bf16.mxu0 %v112
  %352 = vmatmul.mubr.bf16.gmra.mrb[0].mxu0 %v111
  %v353 = vpop.f32.mrb[0].mxu0
  %v354 = vadd.f32 0.0, %v353
  %v355 = vpop.f32.mrb[0].mxu0
  %v356 = vpop.f32.mrb[0].mxu0
  %v357 = vadd.f32 0.0, %v356
  %v358 = vpop.f32.mrb[0].mxu0
  %359 = vmatprep.mubr.bf16.mxu0 %v116
  %360 = vmatmul.mubr.bf16.gmra.mrb[0].mxu0 %v115
  %v361 = vpop.f32.mrb[0].mxu0
  %v362 = vadd.f32 0.0, %v361
  %v363 = vpop.f32.mrb[0].mxu0
  %v364 = vpop.f32.mrb[0].mxu0
  %v365 = vadd.f32 0.0, %v364
  %v366 = vpop.f32.mrb[0].mxu0
  %367 = vdwg.mxu0
  %368 = vmatprep.subr.bf16.mxu0 0
  %369 = vmatpush1.bf16.msra.mxu0 %v271
  %370 = vmatprep.subr.bf16.mxu0 0
  %371 = vmatpush1.bf16.msra.mxu0 %v272
  %372 = vmatprep.subr.bf16.mxu0 0
  %373 = vmatpush1.bf16.msra.mxu0 %v273
  %374 = vmatprep.subr.bf16.mxu0 0
  %375 = vmatpush1.bf16.msra.mxu0 %v274
  %376 = vmatprep.subr.bf16.mxu0 0
  %377 = vmatpush1.bf16.msra.mxu0 %v275
  %378 = vmatprep.subr.bf16.mxu0 0
  %379 = vmatpush1.bf16.msra.mxu0 %v276
  %380 = vmatprep.subr.bf16.mxu0 0
  %381 = vmatpush1.bf16.msra.mxu0 %v277
  %382 = vmatprep.subr.bf16.mxu0 0
  %383 = vmatpush1.bf16.msra.mxu0 %v278
  %384 = vmatprep.subr.bf16.mxu0 0
  %385 = vmatpush1.bf16.msra.mxu0 %v279
  %386 = vmatprep.subr.bf16.mxu0 0
  %387 = vmatpush1.bf16.msra.mxu0 %v280
  %388 = vmatprep.subr.bf16.mxu0 0
  %389 = vmatpush1.bf16.msra.mxu0 %v281
  %390 = vmatprep.subr.bf16.mxu0 0
  %391 = vmatpush1.bf16.msra.mxu0 %v282
  %392 = vmatprep.subr.bf16.mxu0 0
  %393 = vmatpush1.bf16.msra.mxu0 %v283
  %394 = vmatprep.subr.bf16.mxu0 0
  %395 = vmatpush1.bf16.msra.mxu0 %v284
  %396 = vmatprep.subr.bf16.mxu0 0
  %397 = vmatpush1.bf16.msra.mxu0 %v285
  %398 = vmatprep.subr.bf16.mxu0 0
  %399 = vmatpush1.bf16.msra.mxu0 %v286
  %400 = vmatprep.mubr.bf16.mxu0 %v114
  %401 = vmatmul.mubr.bf16.gmra.mrb[0].mxu0 %v113
  %v402 = vpop.f32.mrb[0].mxu0
  %v403 = vadd.f32 %v354, %v402
  %v404 = vpop.f32.mrb[0].mxu0
  %v405 = vpop.f32.mrb[0].mxu0
  %v406 = vadd.f32 %v357, %v405
  %v407 = vpop.f32.mrb[0].mxu0
  %408 = vmatprep.mubr.bf16.mxu0 %v118
  %409 = vmatmul.mubr.bf16.gmra.mrb[0].mxu0 %v117
  %v410 = vpop.f32.mrb[0].mxu0
  %v411 = vadd.f32 %v362, %v410
  %v412 = vpop.f32.mrb[0].mxu0
  %v413 = vpop.f32.mrb[0].mxu0
  %v414 = vadd.f32 %v365, %v413
  %v415 = vpop.f32.mrb[0].mxu0
  %416 = vdwg.mxu0
  %417 = vst [vmem:[%s2] sm:$0xff] %v403
  %418 = vst [vmem:[%s2 + $0x8] sm:$0xff] %v406
  %419 = vst [vmem:[%s2 + $0x10] sm:$0xff] %v411
  %420 = vst [vmem:[%s2 + $0x18] sm:$0xff] %v414
  %v421 = vadd.f32 %v403, %v406
  %v422 = vadd.f32 %v421, %v411
  %v423 = vadd.f32 %v422, %v414
  %v424 = vrot.slane %v423, 4
  %v425 = vadd.f32 %v423, %v424
  %v426 = vrot.slane %v425, 2
  %v427 = vadd.f32 %v425, %v426
  %v428 = vrot.slane %v427, 1
  %v429 = vadd.f32 %v427, %v428
  %v430 = vmul.f32 %v403, %v403
  %v431 = vmul.f32 %v406, %v406
  %v432 = vmul.f32 %v411, %v411
  %v433 = vmul.f32 %v414, %v414
  %v434 = vadd.f32 %v430, %v431
  %v435 = vadd.f32 %v434, %v432
  %v436 = vadd.f32 %v435, %v433
  %v437 = vrot.slane %v436, 4
  %v438 = vadd.f32 %v436, %v437
  %v439 = vrot.slane %v438, 2
  %v440 = vadd.f32 %v438, %v439
  %v441 = vrot.slane %v440, 1
  %v442 = vadd.f32 %v440, %v441
  %443 = vst [vmem:[%s3] sm:$0xff] %v429
  %444 = vst [vmem:[%s4] sm:$0xff] %v442
  // Predicated region
  $region10: #{d_forward.15} parent=0 // pred_check
    _
  $region11: #{d_forward.15} parent=0 // pred_check_branch
    %446 = sbr.rel (0) target = $region13
  $region12: #{d_forward.15} parent=0 // pred_region
    _
  $region13: #{d_forward.15} parent=0 // pred_fallthru
    _
  // Predicated region
  $region14: #{d_forward.15} parent=0 // pred_check
    _
  $region15: #{d_forward.15} parent=0 // pred_check_branch
    %448 = sbr.rel (0) target = $region17
  $region16: #{d_forward.15} parent=0 // pred_region
    _
  $region17: #{d_forward.15} parent=0 // pred_fallthru
    _
  // Predicated region
  $region18: #{d_forward.15} parent=0 // pred_check
    _
  $region19: #{d_forward.15} parent=0 // pred_check_branch
    %450 = sbr.rel (0) target = $region21
  $region20: #{d_forward.15} parent=0 // pred_region
    _
  $region21: #{d_forward.15} parent=0 // pred_fallthru
    _
  // Predicated region
  $region22: #{d_forward.15} parent=0 // pred_check
    _
  $region23: #{d_forward.15} parent=0 // pred_check_branch
    %452 = sbr.rel (0) target = $region25
  $region24: #{d_forward.15} parent=0 // pred_region
    _
  $region25: #{d_forward.15} parent=0 // pred_fallthru
    _
  // Predicated region
  $region26: #{d_forward.15} parent=0 // pred_check
    _
  $region27: #{d_forward.15} parent=0 // pred_check_branch
    %454 = sbr.rel (0) target = $region29
  $region28: #{d_forward.15} parent=0 // pred_region
    _
  $region29: #{d_forward.15} parent=0 // pred_fallthru
    _
  // Predicated region
  $region30: #{d_forward.15} parent=0 // pred_check
    _
  $region31: #{d_forward.15} parent=0 // pred_check_branch
    %456 = sbr.rel (0) target = $region33
  $region32: #{d_forward.15} parent=0 // pred_region
    _
  $region33: #{d_forward.15} parent=0 // pred_fallthru
    _

// kernel: d_forward.17
$region0: #{d_forward.17}
  #allocation0 [shape = 'u32[]', space=smem, size = 0x4, offset = 0x4, fixed_abs, tag = 'smem constant byte address 0x4 - core index']
  #allocation1 [shape = 'u32[144,128]{1,0:T(1,128)}', space=vmem, size = 0x12000, scoped, tag = 'internal scratch']
  %s0 = inlined_call_operand.vmem [shape: bf16[16,1024], index: 0, kind: input, shape index: {}]
  %s1 = inlined_call_operand.vmem [shape: bf16[1024,128], index: 1, kind: input, shape index: {}]
  %s2 = inlined_call_operand.vmem [shape: f32[16,128], index: 2, kind: output, shape index: {}]
  %s3 = sld [smem:[#allocation0]]
  $region18: #{d_forward.17} parent=0
    _
  %s5 = ssub.s32 1, %s3
  %s6 = scalar_select 0, %s5, %s3
  // Predicated region
  $region2: #{d_forward.17} parent=0 // pred_check
    _
  $region3: #{d_forward.17} parent=0 // pred_check_branch
    %8 = sbr.rel (0) target = $region5
  $region4: #{d_forward.17} parent=0 // pred_region
    _
  $region5: #{d_forward.17} parent=0 // pred_fallthru
    _
  // Predicated region
  $region6: #{d_forward.17} parent=0 // pred_check
    _
  $region7: #{d_forward.17} parent=0 // pred_check_branch
    %10 = sbr.rel (0) target = $region9
  $region8: #{d_forward.17} parent=0 // pred_region
    _
  $region9: #{d_forward.17} parent=0 // pred_fallthru
    _
  %v12 = vld [vmem:[%s0] sm:$0xff]
  %v13 = vld [vmem:[%s0 + $0x8] sm:$0xff]
  %v14 = vld [vmem:[%s0 + $0x10] sm:$0xff]
  %v15 = vld [vmem:[%s0 + $0x18] sm:$0xff]
  %v16 = vld [vmem:[%s0 + $0x20] sm:$0xff]
  %v17 = vld [vmem:[%s0 + $0x28] sm:$0xff]
  %v18 = vld [vmem:[%s0 + $0x30] sm:$0xff]
  %v19 = vld [vmem:[%s0 + $0x38] sm:$0xff]
  %v20 = vld [vmem:[%s1] sm:$0xf]
  %v21 = vld [vmem:[%s1 + $0x4] sm:$0xf]
  %v22 = vld [vmem:[%s1 + $0x8] sm:$0xf]
  %v23 = vld [vmem:[%s1 + $0xc] sm:$0xf]
  %v24 = vld [vmem:[%s1 + $0x10] sm:$0xf]
  %v25 = vld [vmem:[%s1 + $0x14] sm:$0xf]
  %v26 = vld [vmem:[%s1 + $0x18] sm:$0xf]
  %v27 = vld [vmem:[%s1 + $0x1c] sm:$0xf]
  %v28 = vld [vmem:[%s1 + $0x20] sm:$0xf]
  %v29 = vld [vmem:[%s1 + $0x24] sm:$0xf]
  %v30 = vld [vmem:[%s1 + $0x28] sm:$0xf]
  %v31 = vld [vmem:[%s1 + $0x2c] sm:$0xf]
  %v32 = vld [vmem:[%s1 + $0x30] sm:$0xf]
  %v33 = vld [vmem:[%s1 + $0x34] sm:$0xf]
  %v34 = vld [vmem:[%s1 + $0x38] sm:$0xf]
  %v35 = vld [vmem:[%s1 + $0x3c] sm:$0xf]
  %v36 = vld [vmem:[%s1 + $0x40] sm:$0xf]
  %v37 = vld [vmem:[%s1 + $0x44] sm:$0xf]
  %v38 = vld [vmem:[%s1 + $0x48] sm:$0xf]
  %v39 = vld [vmem:[%s1 + $0x4c] sm:$0xf]
  %v40 = vld [vmem:[%s1 + $0x50] sm:$0xf]
  %v41 = vld [vmem:[%s1 + $0x54] sm:$0xf]
  %v42 = vld [vmem:[%s1 + $0x58] sm:$0xf]
  %v43 = vld [vmem:[%s1 + $0x5c] sm:$0xf]
  %v44 = vld [vmem:[%s1 + $0x60] sm:$0xf]
  %v45 = vld [vmem:[%s1 + $0x64] sm:$0xf]
  %v46 = vld [vmem:[%s1 + $0x68] sm:$0xf]
  %v47 = vld [vmem:[%s1 + $0x6c] sm:$0xf]
  %v48 = vld [vmem:[%s1 + $0x70] sm:$0xf]
  %v49 = vld [vmem:[%s1 + $0x74] sm:$0xf]
  %v50 = vld [vmem:[%s1 + $0x78] sm:$0xf]
  %v51 = vld [vmem:[%s1 + $0x7c] sm:$0xf]
  %v52 = vld [vmem:[%s1 + $0x80] sm:$0xf]
  %v53 = vld [vmem:[%s1 + $0x84] sm:$0xf]
  %v54 = vld [vmem:[%s1 + $0x88] sm:$0xf]
  %v55 = vld [vmem:[%s1 + $0x8c] sm:$0xf]
  %v56 = vld [vmem:[%s1 + $0x90] sm:$0xf]
  %v57 = vld [vmem:[%s1 + $0x94] sm:$0xf]
  %v58 = vld [vmem:[%s1 + $0x98] sm:$0xf]
  %v59 = vld [vmem:[%s1 + $0x9c] sm:$0xf]
  %v60 = vld [vmem:[%s1 + $0xa0] sm:$0xf]
  %v61 = vld [vmem:[%s1 + $0xa4] sm:$0xf]
  %v62 = vld [vmem:[%s1 + $0xa8] sm:$0xf]
  %v63 = vld [vmem:[%s1 + $0xac] sm:$0xf]
  %v64 = vld [vmem:[%s1 + $0xb0] sm:$0xf]
  %v65 = vld [vmem:[%s1 + $0xb4] sm:$0xf]
  %v66 = vld [vmem:[%s1 + $0xb8] sm:$0xf]
  %v67 = vld [vmem:[%s1 + $0xbc] sm:$0xf]
  %v68 = vld [vmem:[%s1 + $0xc0] sm:$0xf]
  %v69 = vld [vmem:[%s1 + $0xc4] sm:$0xf]
  %v70 = vld [vmem:[%s1 + $0xc8] sm:$0xf]
  %v71 = vld [vmem:[%s1 + $0xcc] sm:$0xf]
  %v72 = vld [vmem:[%s1 + $0xd0] sm:$0xf]
  %v73 = vld [vmem:[%s1 + $0xd4] sm:$0xf]
  %v74 = vld [vmem:[%s1 + $0xd8] sm:$0xf]
  %v75 = vld [vmem:[%s1 + $0xdc] sm:$0xf]
  %v76 = vld [vmem:[%s1 + $0xe0] sm:$0xf]
  %v77 = vld [vmem:[%s1 + $0xe4] sm:$0xf]
  %v78 = vld [vmem:[%s1 + $0xe8] sm:$0xf]
  %v79 = vld [vmem:[%s1 + $0xec] sm:$0xf]
  %v80 = vld [vmem:[%s1 + $0xf0] sm:$0xf]
  %v81 = vld [vmem:[%s1 + $0xf4] sm:$0xf]
  %v82 = vld [vmem:[%s1 + $0xf8] sm:$0xf]
  %v83 = vld [vmem:[%s1 + $0xfc] sm:$0xf]
  %v84 = vld [vmem:[%s1 + $0x100] sm:$0xf]
  %v85 = vld [vmem:[%s1 + $0x104] sm:$0xf]
  %v86 = vld [vmem:[%s1 + $0x108] sm:$0xf]
  %v87 = vld [vmem:[%s1 + $0x10c] sm:$0xf]
  %v88 = vld [vmem:[%s1 + $0x110] sm:$0xf]
  %v89 = vld [vmem:[%s1 + $0x114] sm:$0xf]
  %v90 = vld [vmem:[%s1 + $0x118] sm:$0xf]
  %v91 = vld [vmem:[%s1 + $0x11c] sm:$0xf]
  %v92 = vld [vmem:[%s1 + $0x120] sm:$0xf]
  %v93 = vld [vmem:[%s1 + $0x124] sm:$0xf]
  %v94 = vld [vmem:[%s1 + $0x128] sm:$0xf]
  %v95 = vld [vmem:[%s1 + $0x12c] sm:$0xf]
  %v96 = vld [vmem:[%s1 + $0x130] sm:$0xf]
  %v97 = vld [vmem:[%s1 + $0x134] sm:$0xf]
  %v98 = vld [vmem:[%s1 + $0x138] sm:$0xf]
  %v99 = vld [vmem:[%s1 + $0x13c] sm:$0xf]
  %v100 = vld [vmem:[%s1 + $0x140] sm:$0xf]
  %v101 = vld [vmem:[%s1 + $0x144] sm:$0xf]
  %v102 = vld [vmem:[%s1 + $0x148] sm:$0xf]
  %v103 = vld [vmem:[%s1 + $0x14c] sm:$0xf]
  %v104 = vld [vmem:[%s1 + $0x150] sm:$0xf]
  %v105 = vld [vmem:[%s1 + $0x154] sm:$0xf]
  %v106 = vld [vmem:[%s1 + $0x158] sm:$0xf]
  %v107 = vld [vmem:[%s1 + $0x15c] sm:$0xf]
  %v108 = vld [vmem:[%s1 + $0x160] sm:$0xf]
  %v109 = vld [vmem:[%s1 + $0x164] sm:$0xf]
  %v110 = vld [vmem:[%s1 + $0x168] sm:$0xf]
  %v111 = vld [vmem:[%s1 + $0x16c] sm:$0xf]
  %v112 = vld [vmem:[%s1 + $0x170] sm:$0xf]
  %v113 = vld [vmem:[%s1 + $0x174] sm:$0xf]
  %v114 = vld [vmem:[%s1 + $0x178] sm:$0xf]
  %v115 = vld [vmem:[%s1 + $0x17c] sm:$0xf]
  %v116 = vld [vmem:[%s1 + $0x180] sm:$0xf]
  %v117 = vld [vmem:[%s1 + $0x184] sm:$0xf]
  %v118 = vld [vmem:[%s1 + $0x188] sm:$0xf]
  %v119 = vld [vmem:[%s1 + $0x18c] sm:$0xf]
  %v120 = vld [vmem:[%s1 + $0x190] sm:$0xf]
  %v121 = vld [vmem:[%s1 + $0x194] sm:$0xf]
  %v122 = vld [vmem:[%s1 + $0x198] sm:$0xf]
  %v123 = vld [vmem:[%s1 + $0x19c] sm:$0xf]
  %v124 = vld [vmem:[%s1 + $0x1a0] sm:$0xf]
  %v125 = vld [vmem:[%s1 + $0x1a4] sm:$0xf]
  %v126 = vld [vmem:[%s1 + $0x1a8] sm:$0xf]
  %v127 = vld [vmem:[%s1 + $0x1ac] sm:$0xf]
  %v128 = vld [vmem:[%s1 + $0x1b0] sm:$0xf]
  %v129 = vld [vmem:[%s1 + $0x1b4] sm:$0xf]
  %v130 = vld [vmem:[%s1 + $0x1b8] sm:$0xf]
  %v131 = vld [vmem:[%s1 + $0x1bc] sm:$0xf]
  %v132 = vld [vmem:[%s1 + $0x1c0] sm:$0xf]
  %v133 = vld [vmem:[%s1 + $0x1c4] sm:$0xf]
  %v134 = vld [vmem:[%s1 + $0x1c8] sm:$0xf]
  %v135 = vld [vmem:[%s1 + $0x1cc] sm:$0xf]
  %v136 = vld [vmem:[%s1 + $0x1d0] sm:$0xf]
  %v137 = vld [vmem:[%s1 + $0x1d4] sm:$0xf]
  %v138 = vld [vmem:[%s1 + $0x1d8] sm:$0xf]
  %v139 = vld [vmem:[%s1 + $0x1dc] sm:$0xf]
  %v140 = vld [vmem:[%s1 + $0x1e0] sm:$0xf]
  %v141 = vld [vmem:[%s1 + $0x1e4] sm:$0xf]
  %v142 = vld [vmem:[%s1 + $0x1e8] sm:$0xf]
  %v143 = vld [vmem:[%s1 + $0x1ec] sm:$0xf]
  %v144 = vld [vmem:[%s1 + $0x1f0] sm:$0xf]
  %v145 = vld [vmem:[%s1 + $0x1f4] sm:$0xf]
  %v146 = vld [vmem:[%s1 + $0x1f8] sm:$0xf]
  %v147 = vld [vmem:[%s1 + $0x1fc] sm:$0xf]
  %v156 = vunpack.c.l.b16 %v12
  %v157 = vunpack.c.h.b16 %v12
  %v158 = vunpack.c.l.b16 %v13
  %v159 = vunpack.c.h.b16 %v13
  %v160 = vunpack.c.l.b16 %v14
  %v161 = vunpack.c.h.b16 %v14
  %v162 = vunpack.c.l.b16 %v15
  %v163 = vunpack.c.h.b16 %v15
  %v164 = vunpack.c.l.b16 %v16
  %v165 = vunpack.c.h.b16 %v16
  %v166 = vunpack.c.l.b16 %v17
  %v167 = vunpack.c.h.b16 %v17
  %v168 = vunpack.c.l.b16 %v18
  %v169 = vunpack.c.h.b16 %v18
  %v170 = vunpack.c.l.b16 %v19
  %v171 = vunpack.c.h.b16 %v19
  %v172 = vpack.c.b16 %v164, %v156
  %v173 = vpack.c.b16 %v165, %v157
  %v174 = vpack.c.b16 %v166, %v158
  %v175 = vpack.c.b16 %v167, %v159
  %v176 = vpack.c.b16 %v168, %v160
  %v177 = vpack.c.b16 %v169, %v161
  %v178 = vpack.c.b16 %v170, %v162
  %v179 = vpack.c.b16 %v171, %v163
  %v316 = vunpack.c.l.b16 %v20
  %v317 = vunpack.c.l.b16 %v21
  %v318 = vunpack.c.l.b16 %v22
  %v319 = vunpack.c.l.b16 %v23
  %v320 = vunpack.c.l.b16 %v24
  %v321 = vunpack.c.l.b16 %v25
  %v322 = vunpack.c.l.b16 %v26
  %v323 = vunpack.c.l.b16 %v27
  %v324 = vunpack.c.l.b16 %v28
  %v325 = vunpack.c.l.b16 %v29
  %v326 = vunpack.c.l.b16 %v30
  %v327 = vunpack.c.l.b16 %v31
  %v328 = vunpack.c.l.b16 %v32
  %v329 = vunpack.c.l.b16 %v33
  %v330 = vunpack.c.l.b16 %v34
  %v331 = vunpack.c.l.b16 %v35
  %v332 = vunpack.c.l.b16 %v36
  %v333 = vunpack.c.l.b16 %v37
  %v334 = vunpack.c.l.b16 %v38
  %v335 = vunpack.c.l.b16 %v39
  %v336 = vunpack.c.l.b16 %v40
  %v337 = vunpack.c.l.b16 %v41
  %v338 = vunpack.c.l.b16 %v42
  %v339 = vunpack.c.l.b16 %v43
  %v340 = vunpack.c.l.b16 %v44
  %v341 = vunpack.c.l.b16 %v45
  %v342 = vunpack.c.l.b16 %v46
  %v343 = vunpack.c.l.b16 %v47
  %v344 = vunpack.c.l.b16 %v48
  %v345 = vunpack.c.l.b16 %v49
  %v346 = vunpack.c.l.b16 %v50
  %v347 = vunpack.c.l.b16 %v51
  %v348 = vunpack.c.l.b16 %v52
  %v349 = vunpack.c.l.b16 %v53
  %v350 = vunpack.c.l.b16 %v54
  %v351 = vunpack.c.l.b16 %v55
  %v352 = vunpack.c.l.b16 %v56
  %v353 = vunpack.c.l.b16 %v57
  %v354 = vunpack.c.l.b16 %v58
  %v355 = vunpack.c.l.b16 %v59
  %v356 = vunpack.c.l.b16 %v60
  %v357 = vunpack.c.l.b16 %v61
  %v358 = vunpack.c.l.b16 %v62
  %v359 = vunpack.c.l.b16 %v63
  %v360 = vunpack.c.l.b16 %v64
  %v361 = vunpack.c.l.b16 %v65
  %v362 = vunpack.c.l.b16 %v66
  %v363 = vunpack.c.l.b16 %v67
  %v364 = vunpack.c.l.b16 %v68
  %v365 = vunpack.c.l.b16 %v69
  %v366 = vunpack.c.l.b16 %v70
  %v367 = vunpack.c.l.b16 %v71
  %v368 = vunpack.c.l.b16 %v72
  %v369 = vunpack.c.l.b16 %v73
  %v370 = vunpack.c.l.b16 %v74
  %v371 = vunpack.c.l.b16 %v75
  %v372 = vunpack.c.l.b16 %v76
  %v373 = vunpack.c.l.b16 %v77
  %v374 = vunpack.c.l.b16 %v78
  %v375 = vunpack.c.l.b16 %v79
  %v376 = vunpack.c.l.b16 %v80
  %v377 = vunpack.c.l.b16 %v81
  %v378 = vunpack.c.l.b16 %v82
  %v379 = vunpack.c.l.b16 %v83
  %v380 = vunpack.c.l.b16 %v84
  %v381 = vunpack.c.l.b16 %v85
  %v382 = vunpack.c.l.b16 %v86
  %v383 = vunpack.c.l.b16 %v87
  %v384 = vunpack.c.l.b16 %v88
  %v385 = vunpack.c.l.b16 %v89
  %v386 = vunpack.c.l.b16 %v90
  %v387 = vunpack.c.l.b16 %v91
  %v388 = vunpack.c.l.b16 %v92
  %v389 = vunpack.c.l.b16 %v93
  %v390 = vunpack.c.l.b16 %v94
  %v391 = vunpack.c.l.b16 %v95
  %v392 = vunpack.c.l.b16 %v96
  %v393 = vunpack.c.l.b16 %v97
  %v394 = vunpack.c.l.b16 %v98
  %v395 = vunpack.c.l.b16 %v99
  %v396 = vunpack.c.l.b16 %v100
  %v397 = vunpack.c.l.b16 %v101
  %v398 = vunpack.c.l.b16 %v102
  %v399 = vunpack.c.l.b16 %v103
  %v400 = vunpack.c.l.b16 %v104
  %v401 = vunpack.c.l.b16 %v105
  %v402 = vunpack.c.l.b16 %v106
  %v403 = vunpack.c.l.b16 %v107
  %v404 = vunpack.c.l.b16 %v108
  %v405 = vunpack.c.l.b16 %v109
  %v406 = vunpack.c.l.b16 %v110
  %v407 = vunpack.c.l.b16 %v111
  %v408 = vunpack.c.l.b16 %v112
  %v409 = vunpack.c.l.b16 %v113
  %v410 = vunpack.c.l.b16 %v114
  %v411 = vunpack.c.l.b16 %v115
  %v412 = vunpack.c.l.b16 %v116
  %v413 = vunpack.c.l.b16 %v117
  %v414 = vunpack.c.l.b16 %v118
  %v415 = vunpack.c.l.b16 %v119
  %v416 = vunpack.c.l.b16 %v120
  %v417 = vunpack.c.l.b16 %v121
  %v418 = vunpack.c.l.b16 %v122
  %v419 = vunpack.c.l.b16 %v123
  %v420 = vunpack.c.l.b16 %v124
  %v421 = vunpack.c.l.b16 %v125
  %v422 = vunpack.c.l.b16 %v126
  %v423 = vunpack.c.l.b16 %v127
  %v424 = vunpack.c.l.b16 %v128
  %v425 = vunpack.c.l.b16 %v129
  %v426 = vunpack.c.l.b16 %v130
  %v427 = vunpack.c.l.b16 %v131
  %v428 = vunpack.c.l.b16 %v132
  %v429 = vunpack.c.l.b16 %v133
  %v430 = vunpack.c.l.b16 %v134
  %v431 = vunpack.c.l.b16 %v135
  %v432 = vunpack.c.l.b16 %v136
  %v433 = vunpack.c.l.b16 %v137
  %v434 = vunpack.c.l.b16 %v138
  %v435 = vunpack.c.l.b16 %v139
  %v436 = vunpack.c.l.b16 %v140
  %v437 = vunpack.c.l.b16 %v141
  %v438 = vunpack.c.l.b16 %v142
  %v439 = vunpack.c.l.b16 %v143
  %v440 = vunpack.c.l.b16 %v144
  %v441 = vunpack.c.l.b16 %v145
  %v442 = vunpack.c.l.b16 %v146
  %v443 = vunpack.c.l.b16 %v147
  %v444 = vpack.c.b16 %v317, %v316
  %v445 = vpack.c.b16 %v319, %v318
  %v446 = vpack.c.b16 %v321, %v320
  %v447 = vpack.c.b16 %v323, %v322
  %v448 = vpack.c.b16 %v325, %v324
  %v449 = vpack.c.b16 %v327, %v326
  %v450 = vpack.c.b16 %v329, %v328
  %v451 = vpack.c.b16 %v331, %v330
  %v452 = vpack.c.b16 %v333, %v332
  %v453 = vpack.c.b16 %v335, %v334
  %v454 = vpack.c.b16 %v337, %v336
  %v455 = vpack.c.b16 %v339, %v338
  %v456 = vpack.c.b16 %v341, %v340
  %v457 = vpack.c.b16 %v343, %v342
  %v458 = vpack.c.b16 %v345, %v344
  %v459 = vpack.c.b16 %v347, %v346
  %v460 = vpack.c.b16 %v349, %v348
  %v461 = vpack.c.b16 %v351, %v350
  %v462 = vpack.c.b16 %v353, %v352
  %v463 = vpack.c.b16 %v355, %v354
  %v464 = vpack.c.b16 %v357, %v356
  %v465 = vpack.c.b16 %v359, %v358
  %v466 = vpack.c.b16 %v361, %v360
  %v467 = vpack.c.b16 %v363, %v362
  %v468 = vpack.c.b16 %v365, %v364
  %v469 = vpack.c.b16 %v367, %v366
  %v470 = vpack.c.b16 %v369, %v368
  %v471 = vpack.c.b16 %v371, %v370
  %v472 = vpack.c.b16 %v373, %v372
  %v473 = vpack.c.b16 %v375, %v374
  %v474 = vpack.c.b16 %v377, %v376
  %v475 = vpack.c.b16 %v379, %v378
  %v476 = vpack.c.b16 %v381, %v380
  %v477 = vpack.c.b16 %v383, %v382
  %v478 = vpack.c.b16 %v385, %v384
  %v479 = vpack.c.b16 %v387, %v386
  %v480 = vpack.c.b16 %v389, %v388
  %v481 = vpack.c.b16 %v391, %v390
  %v482 = vpack.c.b16 %v393, %v392
  %v483 = vpack.c.b16 %v395, %v394
  %v484 = vpack.c.b16 %v397, %v396
  %v485 = vpack.c.b16 %v399, %v398
  %v486 = vpack.c.b16 %v401, %v400
  %v487 = vpack.c.b16 %v403, %v402
  %v488 = vpack.c.b16 %v405, %v404
  %v489 = vpack.c.b16 %v407, %v406
  %v490 = vpack.c.b16 %v409, %v408
  %v491 = vpack.c.b16 %v411, %v410
  %v492 = vpack.c.b16 %v413, %v412
  %v493 = vpack.c.b16 %v415, %v414
  %v494 = vpack.c.b16 %v417, %v416
  %v495 = vpack.c.b16 %v419, %v418
  %v496 = vpack.c.b16 %v421, %v420
  %v497 = vpack.c.b16 %v423, %v422
  %v498 = vpack.c.b16 %v425, %v424
  %v499 = vpack.c.b16 %v427, %v426
  %v500 = vpack.c.b16 %v429, %v428
  %v501 = vpack.c.b16 %v431, %v430
  %v502 = vpack.c.b16 %v433, %v432
  %v503 = vpack.c.b16 %v435, %v434
  %v504 = vpack.c.b16 %v437, %v436
  %v505 = vpack.c.b16 %v439, %v438
  %v506 = vpack.c.b16 %v441, %v440
  %v507 = vpack.c.b16 %v443, %v442
  %572 = vmatprep.subr.bf16.mxu0 0
  %573 = vmatpush1.bf16.msra.mxu0 %v444
  %574 = vmatprep.subr.bf16.mxu0 0
  %575 = vmatpush1.bf16.msra.mxu0 %v445
  %576 = vmatprep.subr.bf16.mxu0 0
  %577 = vmatpush1.bf16.msra.mxu0 %v446
  %578 = vmatprep.subr.bf16.mxu0 0
  %579 = vmatpush1.bf16.msra.mxu0 %v447
  %580 = vmatprep.subr.bf16.mxu0 0
  %581 = vmatpush1.bf16.msra.mxu0 %v448
  %582 = vmatprep.subr.bf16.mxu0 0
  %583 = vmatpush1.bf16.msra.mxu0 %v449
  %584 = vmatprep.subr.bf16.mxu0 0
  %585 = vmatpush1.bf16.msra.mxu0 %v450
  %586 = vmatprep.subr.bf16.mxu0 0
  %587 = vmatpush1.bf16.msra.mxu0 %v451
  %588 = vmatprep.subr.bf16.mxu0 0
  %589 = vmatpush1.bf16.msra.mxu0 %v452
  %590 = vmatprep.subr.bf16.mxu0 0
  %591 = vmatpush1.bf16.msra.mxu0 %v453
  %592 = vmatprep.subr.bf16.mxu0 0
  %593 = vmatpush1.bf16.msra.mxu0 %v454
  %594 = vmatprep.subr.bf16.mxu0 0
  %595 = vmatpush1.bf16.msra.mxu0 %v455
  %596 = vmatprep.subr.bf16.mxu0 0
  %597 = vmatpush1.bf16.msra.mxu0 %v456
  %598 = vmatprep.subr.bf16.mxu0 0
  %599 = vmatpush1.bf16.msra.mxu0 %v457
  %600 = vmatprep.subr.bf16.mxu0 0
  %601 = vmatpush1.bf16.msra.mxu0 %v458
  %602 = vmatprep.subr.bf16.mxu0 0
  %603 = vmatpush1.bf16.msra.mxu0 %v459
  %604 = vmatprep.mubr.bf16.mxu0 %v173
  %605 = vmatmul.mubr.bf16.gmra.mrb[0].mxu0 %v172
  %v606 = vpop.f32.mrb[0].mxu0
  %v607 = vadd.f32 0.0, %v606
  %v608 = vpop.f32.mrb[0].mxu0
  %v609 = vpop.f32.mrb[0].mxu0
  %v610 = vadd.f32 0.0, %v609
  %v611 = vpop.f32.mrb[0].mxu0
  %612 = vdwg.mxu0
  %613 = vmatprep.subr.bf16.mxu0 0
  %614 = vmatpush1.bf16.msra.mxu0 %v460
  %615 = vmatprep.subr.bf16.mxu0 0
  %616 = vmatpush1.bf16.msra.mxu0 %v461
  %617 = vmatprep.subr.bf16.mxu0 0
  %618 = vmatpush1.bf16.msra.mxu0 %v462
  %619 = vmatprep.subr.bf16.mxu0 0
  %620 = vmatpush1.bf16.msra.mxu0 %v463
  %621 = vmatprep.subr.bf16.mxu0 0
  %622 = vmatpush1.bf16.msra.mxu0 %v464
  %623 = vmatprep.subr.bf16.mxu0 0
  %624 = vmatpush1.bf16.msra.mxu0 %v465
  %625 = vmatprep.subr.bf16.mxu0 0
  %626 = vmatpush1.bf16.msra.mxu0 %v466
  %627 = vmatprep.subr.bf16.mxu0 0
  %628 = vmatpush1.bf16.msra.mxu0 %v467
  %629 = vmatprep.subr.bf16.mxu0 0
  %630 = vmatpush1.bf16.msra.mxu0 %v468
  %631 = vmatprep.subr.bf16.mxu0 0
  %632 = vmatpush1.bf16.msra.mxu0 %v469
  %633 = vmatprep.subr.bf16.mxu0 0
  %634 = vmatpush1.bf16.msra.mxu0 %v470
  %635 = vmatprep.subr.bf16.mxu0 0
  %636 = vmatpush1.bf16.msra.mxu0 %v471
  %637 = vmatprep.subr.bf16.mxu0 0
  %638 = vmatpush1.bf16.msra.mxu0 %v472
  %639 = vmatprep.subr.bf16.mxu0 0
  %640 = vmatpush1.bf16.msra.mxu0 %v473
  %641 = vmatprep.subr.bf16.mxu0 0
  %642 = vmatpush1.bf16.msra.mxu0 %v474
  %643 = vmatprep.subr.bf16.mxu0 0
  %644 = vmatpush1.bf16.msra.mxu0 %v475
  %645 = vmatprep.mubr.bf16.mxu0 %v175
  %646 = vmatmul.mubr.bf16.gmra.mrb[0].mxu0 %v174
  %v647 = vpop.f32.mrb[0].mxu0
  %v648 = vadd.f32 %v607, %v647
  %v649 = vpop.f32.mrb[0].mxu0
  %v650 = vpop.f32.mrb[0].mxu0
  %v651 = vadd.f32 %v610, %v650
  %v652 = vpop.f32.mrb[0].mxu0
  %653 = vdwg.mxu0
  %654 = vmatprep.subr.bf16.mxu0 0
  %655 = vmatpush1.bf16.msra.mxu0 %v476
  %656 = vmatprep.subr.bf16.mxu0 0
  %657 = vmatpush1.bf16.msra.mxu0 %v477
  %658 = vmatprep.subr.bf16.mxu0 0
  %659 = vmatpush1.bf16.msra.mxu0 %v478
  %660 = vmatprep.subr.bf16.mxu0 0
  %661 = vmatpush1.bf16.msra.mxu0 %v479
  %662 = vmatprep.subr.bf16.mxu0 0
  %663 = vmatpush1.bf16.msra.mxu0 %v480
  %664 = vmatprep.subr.bf16.mxu0 0
  %665 = vmatpush1.bf16.msra.mxu0 %v481
  %666 = vmatprep.subr.bf16.mxu0 0
  %667 = vmatpush1.bf16.msra.mxu0 %v482
  %668 = vmatprep.subr.bf16.mxu0 0
  %669 = vmatpush1.bf16.msra.mxu0 %v483
  %670 = vmatprep.subr.bf16.mxu0 0
  %671 = vmatpush1.bf16.msra.mxu0 %v484
  %672 = vmatprep.subr.bf16.mxu0 0
  %673 = vmatpush1.bf16.msra.mxu0 %v485
  %674 = vmatprep.subr.bf16.mxu0 0
  %675 = vmatpush1.bf16.msra.mxu0 %v486
  %676 = vmatprep.subr.bf16.mxu0 0
  %677 = vmatpush1.bf16.msra.mxu0 %v487
  %678 = vmatprep.subr.bf16.mxu0 0
  %679 = vmatpush1.bf16.msra.mxu0 %v488
  %680 = vmatprep.subr.bf16.mxu0 0
  %681 = vmatpush1.bf16.msra.mxu0 %v489
  %682 = vmatprep.subr.bf16.mxu0 0
  %683 = vmatpush1.bf16.msra.mxu0 %v490
  %684 = vmatprep.subr.bf16.mxu0 0
  %685 = vmatpush1.bf16.msra.mxu0 %v491
  %686 = vmatprep.mubr.bf16.mxu0 %v177
  %687 = vmatmul.mubr.bf16.gmra.mrb[0].mxu0 %v176
  %v688 = vpop.f32.mrb[0].mxu0
  %v689 = vadd.f32 %v648, %v688
  %v690 = vpop.f32.mrb[0].mxu0
  %v691 = vpop.f32.mrb[0].mxu0
  %v692 = vadd.f32 %v651, %v691
  %v693 = vpop.f32.mrb[0].mxu0
  %694 = vdwg.mxu0
  %695 = vmatprep.subr.bf16.mxu0 0
  %696 = vmatpush1.bf16.msra.mxu0 %v492
  %697 = vmatprep.subr.bf16.mxu0 0
  %698 = vmatpush1.bf16.msra.mxu0 %v493
  %699 = vmatprep.subr.bf16.mxu0 0
  %700 = vmatpush1.bf16.msra.mxu0 %v494
  %701 = vmatprep.subr.bf16.mxu0 0
  %702 = vmatpush1.bf16.msra.mxu0 %v495
  %703 = vmatprep.subr.bf16.mxu0 0
  %704 = vmatpush1.bf16.msra.mxu0 %v496
  %705 = vmatprep.subr.bf16.mxu0 0
  %706 = vmatpush1.bf16.msra.mxu0 %v497
  %707 = vmatprep.subr.bf16.mxu0 0
  %708 = vmatpush1.bf16.msra.mxu0 %v498
  %709 = vmatprep.subr.bf16.mxu0 0
  %710 = vmatpush1.bf16.msra.mxu0 %v499
  %711 = vmatprep.subr.bf16.mxu0 0
  %712 = vmatpush1.bf16.msra.mxu0 %v500
  %713 = vmatprep.subr.bf16.mxu0 0
  %714 = vmatpush1.bf16.msra.mxu0 %v501
  %715 = vmatprep.subr.bf16.mxu0 0
  %716 = vmatpush1.bf16.msra.mxu0 %v502
  %717 = vmatprep.subr.bf16.mxu0 0
  %718 = vmatpush1.bf16.msra.mxu0 %v503
  %719 = vmatprep.subr.bf16.mxu0 0
  %720 = vmatpush1.bf16.msra.mxu0 %v504
  %721 = vmatprep.subr.bf16.mxu0 0
  %722 = vmatpush1.bf16.msra.mxu0 %v505
  %723 = vmatprep.subr.bf16.mxu0 0
  %724 = vmatpush1.bf16.msra.mxu0 %v506
  %725 = vmatprep.subr.bf16.mxu0 0
  %726 = vmatpush1.bf16.msra.mxu0 %v507
  %727 = vmatprep.mubr.bf16.mxu0 %v179
  %728 = vmatmul.mubr.bf16.gmra.mrb[0].mxu0 %v178
  %v729 = vpop.f32.mrb[0].mxu0
  %v730 = vadd.f32 %v689, %v729
  %v731 = vpop.f32.mrb[0].mxu0
  %v732 = vpop.f32.mrb[0].mxu0
  %v733 = vadd.f32 %v692, %v732
  %v734 = vpop.f32.mrb[0].mxu0
  %735 = vdwg.mxu0
  %v736 = vsub.f32 0.0, %v730
  %v737 = vsub.f32 0.0, %v733
  %v738 = vmul.f32 %v736, 1.442695
  %v739 = vpow.pop %v738
  %v740 = vmul.f32 %v737, 1.442695
  %v741 = vpow.pop %v740
  %v742 = vadd.f32 %v739, 1.0
  %v743 = vadd.f32 %v741, 1.0
  %v744 = vrcp.pop %v742
  %v745 = vmul.f32 1.0, %v744
  %v746 = vrcp.pop %v743
  %v747 = vmul.f32 1.0, %v746
  %748 = vst [vmem:[%s2] sm:$0xff] %v745
  %749 = vst [vmem:[%s2 + $0x8] sm:$0xff] %v747
  // Predicated region
  $region10: #{d_forward.17} parent=0 // pred_check
    _
  $region11: #{d_forward.17} parent=0 // pred_check_branch
    %751 = sbr.rel (0) target = $region13
  $region12: #{d_forward.17} parent=0 // pred_region
    _
  $region13: #{d_forward.17} parent=0 // pred_fallthru
    _
  // Predicated region
  $region14: #{d_forward.17} parent=0 // pred_check
    _
  $region15: #{d_forward.17} parent=0 // pred_check_branch
    %753 = sbr.rel (0) target = $region17
  $region16: #{d_forward.17} parent=0 // pred_region
    _
  $region17: #{d_forward.17} parent=0 // pred_fallthru
    _

</llo_original>
